<compile_context>
chip_gen: v5e
topology: v5e:2x2
jax: 0.10.0
libtpu: 0.0.40
codegen_flags: <defaults>
</compile_context>

<pallas_src>
import functools

import jax
import jax.numpy as jnp
from jax.experimental import pallas as pl
from jax.experimental.pallas import tpu as pltpu

F32 = jnp.float32
BF16 = jnp.bfloat16


def _fc_block(v, w_ref, b_ref):
    """FC_Block: K stacked Linear + ReLU layers. w:(K,in,M) bf16, b:(K,1,M) f32."""
    for k in range(w_ref.shape[0]):
        v = jnp.maximum(
            jnp.dot(v.astype(BF16), w_ref[k], preferred_element_type=F32) + b_ref[k],
            0.0)
    return v


def generator_kernel(x_ref, z_ref,
                     enc_wih_ref, enc_whh_ref, enc_b_ref,
                     fc1_w_ref, fc1_b_ref,
                     fc2a_w_ref, fc2b_w_ref, fc2_b0_ref,
                     fc2r_w_ref, fc2r_b_ref,
                     dec_wih_ref, dec_whh_ref, dec_b_ref,
                     fc_w_ref, fc_b_ref,
                     out_ref,
                     *, seq_len, b_tile, h_enc, h_dec):
    x2d = x_ref[0]                       # (S*Bt, F) f32, row = t*Bt + local_b
    Z = z_ref[...]                       # (Bt, 128) f32

    # ---- encoder: single-layer LSTM, fused gates [i|f|g|o] along lanes -----------
    # Hoisted input projection: one matmul for all time steps + one fused bias add,
    # computed off the recurrent critical path.
    enc_whh = enc_whh_ref[...]                                        # (H, 4H) bf16
    xp = jnp.dot(x2d.astype(BF16), enc_wih_ref[...],
                 preferred_element_type=F32) + enc_b_ref[...]         # (S*Bt, 4H)

    h = jnp.zeros((b_tile, h_enc), F32)
    c = jnp.zeros((b_tile, h_enc), F32)
    # Static unroll (S is small).  For S >> 16 switch to lax.fori_loop(..., unroll=True)
    # carrying (h, c) to bound live ranges / code size.
    for t in range(seq_len):
        g = xp[t * b_tile:(t + 1) * b_tile, :] + jnp.dot(
            h.astype(BF16), enc_whh, preferred_element_type=F32)      # (Bt, 4H)
        i_g = jax.nn.sigmoid(g[:, 0:h_enc])
        f_g = jax.nn.sigmoid(g[:, h_enc:2 * h_enc])
        g_g = jnp.tanh(g[:, 2 * h_enc:3 * h_enc])
        o_g = jax.nn.sigmoid(g[:, 3 * h_enc:4 * h_enc])
        c = f_g * c + i_g * g_g
        h = o_g * jnp.tanh(c)
    x_enc = h                                                         # (Bt, 128)

    # ---- fcblock1 applied (shared weights) to encoded X and to Z ------------------
    x1 = _fc_block(x_enc, fc1_w_ref, fc1_b_ref)                       # (Bt, 128)
    z1 = _fc_block(Z, fc1_w_ref, fc1_b_ref)                           # (Bt, 128)

    # ---- concat(dim=1) + fcblock2, with the concat folded into a split matmul -----
    v = jnp.maximum(
        jnp.dot(x1.astype(BF16), fc2a_w_ref[...], preferred_element_type=F32)
        + jnp.dot(z1.astype(BF16), fc2b_w_ref[...], preferred_element_type=F32)
        + fc2_b0_ref[...], 0.0)                                       # (Bt, 256)
    x2 = _fc_block(v, fc2r_w_ref, fc2r_b_ref)                         # (Bt, 256)

    # ---- decoder LSTM: same input x2 for all 4 steps -> hoist input projection ----
    dec_whh = dec_whh_ref[...]                                        # (Hd, 4Hd) bf16
    xin = jnp.dot(x2.astype(BF16), dec_wih_ref[...],
                  preferred_element_type=F32) + dec_b_ref[...]        # (Bt, 4Hd)
    fc_w = fc_w_ref[...]                                              # (Hd, 2) f32
    fc_b = fc_b_ref[...]                                              # (1, 2)  f32

    hd = jnp.zeros((b_tile, h_dec), F32)
    cd = jnp.zeros((b_tile, h_dec), F32)
    for t in range(4):                                                # decoder length 4
        g = xin + jnp.dot(hd.astype(BF16), dec_whh,
                          preferred_element_type=F32)                 # (Bt, 4Hd)
        i_g = jax.nn.sigmoid(g[:, 0:h_dec])
        f_g = jax.nn.sigmoid(g[:, h_dec:2 * h_dec])
        g_g = jnp.tanh(g[:, 2 * h_dec:3 * h_dec])
        o_g = jax.nn.sigmoid(g[:, 3 * h_dec:4 * h_dec])
        cd = f_g * cd + i_g * g_g
        hd = o_g * jnp.tanh(cd)
        # fused final Linear(32, 2) + sigmoid per time step
        out_ref[t] = jax.nn.sigmoid(
            jnp.dot(hd, fc_w, preferred_element_type=F32) + fc_b)     # (Bt, 2)


def _pack_lstm(wih, whh, b):
    """(4,in,H),(4,H,H),(4,1,H) -> fused (in,4H) bf16, (H,4H) bf16, (1,4H) f32."""
    in_dim, H = wih.shape[1], wih.shape[2]
    wih_f = jnp.transpose(wih, (1, 0, 2)).reshape(in_dim, 4 * H).astype(BF16)
    whh_f = jnp.transpose(whh, (1, 0, 2)).reshape(H, 4 * H).astype(BF16)
    b_f = jnp.transpose(b, (1, 0, 2)).reshape(1, 4 * H).astype(F32)
    return wih_f, whh_f, b_f


def generator_forward(X, Z, params):
    """X: (B, S, F) float32, Z: (B, 128) float32  ->  forecast (B, 4, 2) float32."""
    B, S, F = X.shape
    h_enc = params["enc_whh"].shape[-1]       # 128
    h_dec = params["dec_whh"].shape[-1]       # 32
    zdim = Z.shape[-1]                        # 128

    # ---- batch tiling: 1-D parallel grid (shards across TensorCores on v7x) -------
    b_tile = B if B <= 128 else 128
    assert B % b_tile == 0, "batch must be a multiple of the 128-row tile when B > 128"
    nbt = B // b_tile

    # Layout plumbing (wrapper-side, cheap): per-tile, time-major flattened X so the
    # encoder input projection is a single well-shaped matmul in-kernel.
    x_k = (X.astype(F32)
           .reshape(nbt, b_tile, S, F)
           .transpose(0, 2, 1, 3)
           .reshape(nbt, S * b_tile, F))

    # Fused / bf16-cast weights (PyTorch gate order i, f, g, o; b_ih + b_hh pre-summed).
    enc_wih, enc_whh, enc_b = _pack_lstm(params["enc_wih"], params["enc_whh"],
                                         params["enc_b"])
    dec_wih, dec_whh, dec_b = _pack_lstm(params["dec_wih"], params["dec_whh"],
                                         params["dec_b"])
    fc1_w = params["fc1_w"].astype(BF16)
    fc1_b = params["fc1_b"].astype(F32)
    m1 = fc1_w.shape[-1]                      # 128
    fc2_w, fc2_b = params["fc2_w"], params["fc2_b"]
    fc2a_w = fc2_w[0, :m1, :].astype(BF16)    # layer-0 block acting on fcblock1(X)
    fc2b_w = fc2_w[0, m1:, :].astype(BF16)    # layer-0 block acting on fcblock1(Z)
    fc2_b0 = fc2_b[0].astype(F32)             # (1, 256)
    fc2r_w = fc2_w[1:].astype(BF16)           # remaining K-1 layers
    fc2r_b = fc2_b[1:].astype(F32)
    fc_w = params["fc_w"].astype(F32)
    fc_b = params["fc_b"].astype(F32)

    args = (x_k, Z.astype(F32),
            enc_wih, enc_whh, enc_b,
            fc1_w, fc1_b,
            fc2a_w, fc2b_w, fc2_b0, fc2r_w, fc2r_b,
            dec_wih, dec_whh, dec_b,
            fc_w, fc_b)

    def full_spec(a):
        nd = a.ndim
        return pl.BlockSpec(a.shape, lambda b, _nd=nd: (0,) * _nd)

    in_specs = [
        pl.BlockSpec((1, S * b_tile, F), lambda b: (b, 0, 0)),   # X (batch-tiled)
        pl.BlockSpec((b_tile, zdim), lambda b: (b, 0)),          # Z (batch-tiled)
    ] + [full_spec(a) for a in args[2:]]                         # weights: resident

    out_spec = pl.BlockSpec((4, b_tile, 2), lambda b: (0, b, 0))

    kernel = functools.partial(generator_kernel, seq_len=S, b_tile=b_tile,
                               h_enc=h_enc, h_dec=h_dec)

    out_sb2 = pl.pallas_call(
        kernel,
        out_shape=jax.ShapeDtypeStruct((4, B, 2), F32),
        grid=(nbt,),
        in_specs=in_specs,
        out_specs=out_spec,
        compiler_params=pltpu.CompilerParams(
            dimension_semantics=("parallel",),
            vmem_limit_bytes=16 << 20),       # actual footprint is a few MiB
    )(*args)

    return jnp.transpose(out_sb2, (1, 0, 2))  # (B, 4, 2) == X.transpose(0,1) semantics


def make_params(key, feat_dim=16, h_enc=128, k_fc=3, m1=128, m2=256, h_dec=32):
    def nrm(k, shape, scale=0.1):
        return (scale * jax.random.normal(k, shape)).astype(F32)

    ks = jax.random.split(key, 12)
    return {
        # encoder LSTM: input feat_dim -> hidden 128   (gate order i, f, g, o)
        "enc_wih": nrm(ks[0], (4, feat_dim, h_enc)),
        "enc_whh": nrm(ks[1], (4, h_enc, h_enc)),
        "enc_b":   nrm(ks[2], (4, 1, h_enc)),
        # FC_Block(input_dim=128, K=3, M=128)
        "fc1_w":   nrm(ks[3], (k_fc, m1, m1)),
        "fc1_b":   nrm(ks[4], (k_fc, 1, m1)),
        # FC_Block(input_dim=256, K=3, M=256)
        "fc2_w":   nrm(ks[5], (k_fc, m2, m2)),
        "fc2_b":   nrm(ks[6], (k_fc, 1, m2)),
        # decoder LSTM: input 256 -> hidden 32
        "dec_wih": nrm(ks[7], (4, m2, h_dec)),
        "dec_whh": nrm(ks[8], (4, h_dec, h_dec)),
        "dec_b":   nrm(ks[9], (4, 1, h_dec)),
        # fc = nn.Linear(32, 2)   (NOTE: torch weight is (out,in); kernel expects (in,out))
        "fc_w":    nrm(ks[10], (h_dec, 2)),
        "fc_b":    nrm(ks[11], (1, 2)),
    }


if __name__ == "__main__":
    key = jax.random.PRNGKey(0)
    k_x, k_z, k_p = jax.random.split(key, 3)

    batch, seq_len, feat_dim = 2, 8, 16
    X = jax.random.normal(k_x, (batch, seq_len, feat_dim), dtype=jnp.float32)
    Z = jax.random.normal(k_z, (batch, 128), dtype=jnp.float32)
    params = make_params(k_p, feat_dim=feat_dim)

    fwd = jax.jit(generator_forward)
    forecast = fwd(X, Z, params)
    jax.block_until_ready(forecast)

    assert forecast.shape == (batch, 4, 2), forecast.shape
    assert bool(jnp.all(jnp.isfinite(forecast)))
    print("KERNEL_OK")
</pallas_src>

<mosaic_0001>
module attributes {stable_mosaic.version = 11 : i64} {
  func.func @generator_kernel(%arg0: i32, %arg1: memref<1x16x16xf32, #tpu.memory_space<vmem>>, %arg2: memref<2x128xf32, #tpu.memory_space<vmem>>, %arg3: memref<16x512xbf16, #tpu.memory_space<vmem>>, %arg4: memref<128x512xbf16, #tpu.memory_space<vmem>>, %arg5: memref<1x512xf32, #tpu.memory_space<vmem>>, %arg6: memref<3x128x128xbf16, #tpu.memory_space<vmem>>, %arg7: memref<3x1x128xf32, #tpu.memory_space<vmem>>, %arg8: memref<128x256xbf16, #tpu.memory_space<vmem>>, %arg9: memref<128x256xbf16, #tpu.memory_space<vmem>>, %arg10: memref<1x256xf32, #tpu.memory_space<vmem>>, %arg11: memref<2x256x256xbf16, #tpu.memory_space<vmem>>, %arg12: memref<2x1x256xf32, #tpu.memory_space<vmem>>, %arg13: memref<256x128xbf16, #tpu.memory_space<vmem>>, %arg14: memref<32x128xbf16, #tpu.memory_space<vmem>>, %arg15: memref<1x128xf32, #tpu.memory_space<vmem>>, %arg16: memref<32x2xf32, #tpu.memory_space<vmem>>, %arg17: memref<1x2xf32, #tpu.memory_space<vmem>>, %arg18: memref<4x2x2xf32, #tpu.memory_space<vmem>>) attributes {dimension_semantics = [#tpu.dimension_semantics<parallel>], iteration_bounds = array<i64: 1>, scalar_prefetch = 0 : i64, scratch_operands = 0 : i64, tpu.core_type = #tpu.core_type<tc>, window_params = [{transform_indices = @transform_0, window_bounds = array<i64: 1, 16, 16>}, {transform_indices = @transform_1, window_bounds = array<i64: 2, 128>}, {pipeline_mode = #tpu.pipeline_mode<synchronous>, transform_indices = @transform_2, window_bounds = array<i64: 16, 512>}, {pipeline_mode = #tpu.pipeline_mode<synchronous>, transform_indices = @transform_3, window_bounds = array<i64: 128, 512>}, {pipeline_mode = #tpu.pipeline_mode<synchronous>, transform_indices = @transform_4, window_bounds = array<i64: 1, 512>}, {pipeline_mode = #tpu.pipeline_mode<synchronous>, transform_indices = @transform_5, window_bounds = array<i64: 3, 128, 128>}, {pipeline_mode = #tpu.pipeline_mode<synchronous>, transform_indices = @transform_6, window_bounds = array<i64: 3, 1, 128>}, {pipeline_mode = #tpu.pipeline_mode<synchronous>, transform_indices = @transform_7, window_bounds = array<i64: 128, 256>}, {pipeline_mode = #tpu.pipeline_mode<synchronous>, transform_indices = @transform_8, window_bounds = array<i64: 128, 256>}, {pipeline_mode = #tpu.pipeline_mode<synchronous>, transform_indices = @transform_9, window_bounds = array<i64: 1, 256>}, {pipeline_mode = #tpu.pipeline_mode<synchronous>, transform_indices = @transform_10, window_bounds = array<i64: 2, 256, 256>}, {pipeline_mode = #tpu.pipeline_mode<synchronous>, transform_indices = @transform_11, window_bounds = array<i64: 2, 1, 256>}, {pipeline_mode = #tpu.pipeline_mode<synchronous>, transform_indices = @transform_12, window_bounds = array<i64: 256, 128>}, {pipeline_mode = #tpu.pipeline_mode<synchronous>, transform_indices = @transform_13, window_bounds = array<i64: 32, 128>}, {pipeline_mode = #tpu.pipeline_mode<synchronous>, transform_indices = @transform_14, window_bounds = array<i64: 1, 128>}, {pipeline_mode = #tpu.pipeline_mode<synchronous>, transform_indices = @transform_15, window_bounds = array<i64: 32, 2>}, {pipeline_mode = #tpu.pipeline_mode<synchronous>, transform_indices = @transform_16, window_bounds = array<i64: 1, 2>}, {transform_indices = @transform_17, window_bounds = array<i64: 4, 2, 2>}]} {
    %c0 = arith.constant 0 : index
    %c0_0 = arith.constant 0 : index
    %c0_1 = arith.constant 0 : index
    %0 = vector.load %arg1[%c0, %c0_0, %c0_1] : memref<1x16x16xf32, #tpu.memory_space<vmem>>, vector<1x16x16xf32>
    %1 = vector.shape_cast %0 : vector<1x16x16xf32> to vector<16x16xf32>
    %c0_2 = arith.constant 0 : index
    %c0_3 = arith.constant 0 : index
    %2 = vector.load %arg2[%c0_2, %c0_3] : memref<2x128xf32, #tpu.memory_space<vmem>>, vector<2x128xf32>
    %c0_4 = arith.constant 0 : index
    %c0_5 = arith.constant 0 : index
    %3 = vector.load %arg4[%c0_4, %c0_5] : memref<128x512xbf16, #tpu.memory_space<vmem>>, vector<128x512xbf16>
    %4 = arith.truncf %1 : vector<16x16xf32> to vector<16x16xbf16>
    %c0_6 = arith.constant 0 : index
    %c0_7 = arith.constant 0 : index
    %5 = vector.load %arg3[%c0_6, %c0_7] : memref<16x512xbf16, #tpu.memory_space<vmem>>, vector<16x512xbf16>
    %cst = arith.constant dense<0.000000e+00> : vector<16x512xf32>
    %6 = tpu.matmul %4, %5, %cst {dimension_numbers = #tpu.dot_dimension_numbers<[1], [0], [0], [1], [0, 0, 1, 1], [], []>} : vector<16x16xbf16>, vector<16x512xbf16>, vector<16x512xf32> -> vector<16x512xf32>
    %c0_8 = arith.constant 0 : index
    %c0_9 = arith.constant 0 : index
    %7 = vector.load %arg5[%c0_8, %c0_9] : memref<1x512xf32, #tpu.memory_space<vmem>>, vector<1x512xf32>
    %8 = vector.broadcast %7 : vector<1x512xf32> to vector<16x512xf32>
    %9 = arith.addf %6, %8 : vector<16x512xf32>
    %cst_10 = arith.constant 0.000000e+00 : f32
    %10 = vector.broadcast %cst_10 : f32 to vector<2x128xf32>
    %cst_11 = arith.constant 0.000000e+00 : f32
    %11 = vector.broadcast %cst_11 : f32 to vector<2x128xf32>
    %12 = vector.extract_strided_slice %9 {offsets = [0, 0], sizes = [2, 512], strides = [1, 1]} : vector<16x512xf32> to vector<2x512xf32>
    %13 = arith.truncf %10 : vector<2x128xf32> to vector<2x128xbf16>
    %cst_12 = arith.constant dense<0.000000e+00> : vector<2x512xf32>
    %14 = tpu.matmul %13, %3, %cst_12 {dimension_numbers = #tpu.dot_dimension_numbers<[1], [0], [0], [1], [0, 0, 1, 1], [], []>} : vector<2x128xbf16>, vector<128x512xbf16>, vector<2x512xf32> -> vector<2x512xf32>
    %15 = arith.addf %12, %14 : vector<2x512xf32>
    %16 = vector.extract_strided_slice %15 {offsets = [0, 0], sizes = [2, 128], strides = [1, 1]} : vector<2x512xf32> to vector<2x128xf32>
    %17 = arith.negf %16 : vector<2x128xf32>
    %18 = math.exp %17 : vector<2x128xf32>
    %cst_13 = arith.constant 1.000000e+00 : f32
    %19 = vector.broadcast %cst_13 : f32 to vector<2x128xf32>
    %20 = arith.addf %19, %18 : vector<2x128xf32>
    %21 = arith.divf %19, %20 : vector<2x128xf32>
    %22 = vector.extract_strided_slice %15 {offsets = [0, 128], sizes = [2, 128], strides = [1, 1]} : vector<2x512xf32> to vector<2x128xf32>
    %23 = arith.negf %22 : vector<2x128xf32>
    %24 = math.exp %23 : vector<2x128xf32>
    %cst_14 = arith.constant 1.000000e+00 : f32
    %25 = vector.broadcast %cst_14 : f32 to vector<2x128xf32>
    %26 = arith.addf %25, %24 : vector<2x128xf32>
    %27 = arith.divf %25, %26 : vector<2x128xf32>
    %28 = vector.extract_strided_slice %15 {offsets = [0, 256], sizes = [2, 128], strides = [1, 1]} : vector<2x512xf32> to vector<2x128xf32>
    %29 = math.tanh %28 : vector<2x128xf32>
    %30 = vector.extract_strided_slice %15 {offsets = [0, 384], sizes = [2, 128], strides = [1, 1]} : vector<2x512xf32> to vector<2x128xf32>
    %31 = arith.negf %30 : vector<2x128xf32>
    %32 = math.exp %31 : vector<2x128xf32>
    %cst_15 = arith.constant 1.000000e+00 : f32
    %33 = vector.broadcast %cst_15 : f32 to vector<2x128xf32>
    %34 = arith.addf %33, %32 : vector<2x128xf32>
    %35 = arith.divf %33, %34 : vector<2x128xf32>
    %36 = arith.mulf %27, %11 : vector<2x128xf32>
    %37 = arith.mulf %21, %29 : vector<2x128xf32>
    %38 = arith.addf %36, %37 : vector<2x128xf32>
    %39 = math.tanh %38 : vector<2x128xf32>
    %40 = arith.mulf %35, %39 : vector<2x128xf32>
    %41 = vector.extract_strided_slice %9 {offsets = [2, 0], sizes = [2, 512], strides = [1, 1]} : vector<16x512xf32> to vector<2x512xf32>
    %42 = arith.truncf %40 : vector<2x128xf32> to vector<2x128xbf16>
    %cst_16 = arith.constant dense<0.000000e+00> : vector<2x512xf32>
    %43 = tpu.matmul %42, %3, %cst_16 {dimension_numbers = #tpu.dot_dimension_numbers<[1], [0], [0], [1], [0, 0, 1, 1], [], []>} : vector<2x128xbf16>, vector<128x512xbf16>, vector<2x512xf32> -> vector<2x512xf32>
    %44 = arith.addf %41, %43 : vector<2x512xf32>
    %45 = vector.extract_strided_slice %44 {offsets = [0, 0], sizes = [2, 128], strides = [1, 1]} : vector<2x512xf32> to vector<2x128xf32>
    %46 = arith.negf %45 : vector<2x128xf32>
    %47 = math.exp %46 : vector<2x128xf32>
    %cst_17 = arith.constant 1.000000e+00 : f32
    %48 = vector.broadcast %cst_17 : f32 to vector<2x128xf32>
    %49 = arith.addf %48, %47 : vector<2x128xf32>
    %50 = arith.divf %48, %49 : vector<2x128xf32>
    %51 = vector.extract_strided_slice %44 {offsets = [0, 128], sizes = [2, 128], strides = [1, 1]} : vector<2x512xf32> to vector<2x128xf32>
    %52 = arith.negf %51 : vector<2x128xf32>
    %53 = math.exp %52 : vector<2x128xf32>
    %cst_18 = arith.constant 1.000000e+00 : f32
    %54 = vector.broadcast %cst_18 : f32 to vector<2x128xf32>
    %55 = arith.addf %54, %53 : vector<2x128xf32>
    %56 = arith.divf %54, %55 : vector<2x128xf32>
    %57 = vector.extract_strided_slice %44 {offsets = [0, 256], sizes = [2, 128], strides = [1, 1]} : vector<2x512xf32> to vector<2x128xf32>
    %58 = math.tanh %57 : vector<2x128xf32>
    %59 = vector.extract_strided_slice %44 {offsets = [0, 384], sizes = [2, 128], strides = [1, 1]} : vector<2x512xf32> to vector<2x128xf32>
    %60 = arith.negf %59 : vector<2x128xf32>
    %61 = math.exp %60 : vector<2x128xf32>
    %cst_19 = arith.constant 1.000000e+00 : f32
    %62 = vector.broadcast %cst_19 : f32 to vector<2x128xf32>
    %63 = arith.addf %62, %61 : vector<2x128xf32>
    %64 = arith.divf %62, %63 : vector<2x128xf32>
    %65 = arith.mulf %56, %38 : vector<2x128xf32>
    %66 = arith.mulf %50, %58 : vector<2x128xf32>
    %67 = arith.addf %65, %66 : vector<2x128xf32>
    %68 = math.tanh %67 : vector<2x128xf32>
    %69 = arith.mulf %64, %68 : vector<2x128xf32>
    %70 = vector.extract_strided_slice %9 {offsets = [4, 0], sizes = [2, 512], strides = [1, 1]} : vector<16x512xf32> to vector<2x512xf32>
    %71 = arith.truncf %69 : vector<2x128xf32> to vector<2x128xbf16>
    %cst_20 = arith.constant dense<0.000000e+00> : vector<2x512xf32>
    %72 = tpu.matmul %71, %3, %cst_20 {dimension_numbers = #tpu.dot_dimension_numbers<[1], [0], [0], [1], [0, 0, 1, 1], [], []>} : vector<2x128xbf16>, vector<128x512xbf16>, vector<2x512xf32> -> vector<2x512xf32>
    %73 = arith.addf %70, %72 : vector<2x512xf32>
    %74 = vector.extract_strided_slice %73 {offsets = [0, 0], sizes = [2, 128], strides = [1, 1]} : vector<2x512xf32> to vector<2x128xf32>
    %75 = arith.negf %74 : vector<2x128xf32>
    %76 = math.exp %75 : vector<2x128xf32>
    %cst_21 = arith.constant 1.000000e+00 : f32
    %77 = vector.broadcast %cst_21 : f32 to vector<2x128xf32>
    %78 = arith.addf %77, %76 : vector<2x128xf32>
    %79 = arith.divf %77, %78 : vector<2x128xf32>
    %80 = vector.extract_strided_slice %73 {offsets = [0, 128], sizes = [2, 128], strides = [1, 1]} : vector<2x512xf32> to vector<2x128xf32>
    %81 = arith.negf %80 : vector<2x128xf32>
    %82 = math.exp %81 : vector<2x128xf32>
    %cst_22 = arith.constant 1.000000e+00 : f32
    %83 = vector.broadcast %cst_22 : f32 to vector<2x128xf32>
    %84 = arith.addf %83, %82 : vector<2x128xf32>
    %85 = arith.divf %83, %84 : vector<2x128xf32>
    %86 = vector.extract_strided_slice %73 {offsets = [0, 256], sizes = [2, 128], strides = [1, 1]} : vector<2x512xf32> to vector<2x128xf32>
    %87 = math.tanh %86 : vector<2x128xf32>
    %88 = vector.extract_strided_slice %73 {offsets = [0, 384], sizes = [2, 128], strides = [1, 1]} : vector<2x512xf32> to vector<2x128xf32>
    %89 = arith.negf %88 : vector<2x128xf32>
    %90 = math.exp %89 : vector<2x128xf32>
    %cst_23 = arith.constant 1.000000e+00 : f32
    %91 = vector.broadcast %cst_23 : f32 to vector<2x128xf32>
    %92 = arith.addf %91, %90 : vector<2x128xf32>
    %93 = arith.divf %91, %92 : vector<2x128xf32>
    %94 = arith.mulf %85, %67 : vector<2x128xf32>
    %95 = arith.mulf %79, %87 : vector<2x128xf32>
    %96 = arith.addf %94, %95 : vector<2x128xf32>
    %97 = math.tanh %96 : vector<2x128xf32>
    %98 = arith.mulf %93, %97 : vector<2x128xf32>
    %99 = vector.extract_strided_slice %9 {offsets = [6, 0], sizes = [2, 512], strides = [1, 1]} : vector<16x512xf32> to vector<2x512xf32>
    %100 = arith.truncf %98 : vector<2x128xf32> to vector<2x128xbf16>
    %cst_24 = arith.constant dense<0.000000e+00> : vector<2x512xf32>
    %101 = tpu.matmul %100, %3, %cst_24 {dimension_numbers = #tpu.dot_dimension_numbers<[1], [0], [0], [1], [0, 0, 1, 1], [], []>} : vector<2x128xbf16>, vector<128x512xbf16>, vector<2x512xf32> -> vector<2x512xf32>
    %102 = arith.addf %99, %101 : vector<2x512xf32>
    %103 = vector.extract_strided_slice %102 {offsets = [0, 0], sizes = [2, 128], strides = [1, 1]} : vector<2x512xf32> to vector<2x128xf32>
    %104 = arith.negf %103 : vector<2x128xf32>
    %105 = math.exp %104 : vector<2x128xf32>
    %cst_25 = arith.constant 1.000000e+00 : f32
    %106 = vector.broadcast %cst_25 : f32 to vector<2x128xf32>
    %107 = arith.addf %106, %105 : vector<2x128xf32>
    %108 = arith.divf %106, %107 : vector<2x128xf32>
    %109 = vector.extract_strided_slice %102 {offsets = [0, 128], sizes = [2, 128], strides = [1, 1]} : vector<2x512xf32> to vector<2x128xf32>
    %110 = arith.negf %109 : vector<2x128xf32>
    %111 = math.exp %110 : vector<2x128xf32>
    %cst_26 = arith.constant 1.000000e+00 : f32
    %112 = vector.broadcast %cst_26 : f32 to vector<2x128xf32>
    %113 = arith.addf %112, %111 : vector<2x128xf32>
    %114 = arith.divf %112, %113 : vector<2x128xf32>
    %115 = vector.extract_strided_slice %102 {offsets = [0, 256], sizes = [2, 128], strides = [1, 1]} : vector<2x512xf32> to vector<2x128xf32>
    %116 = math.tanh %115 : vector<2x128xf32>
    %117 = vector.extract_strided_slice %102 {offsets = [0, 384], sizes = [2, 128], strides = [1, 1]} : vector<2x512xf32> to vector<2x128xf32>
    %118 = arith.negf %117 : vector<2x128xf32>
    %119 = math.exp %118 : vector<2x128xf32>
    %cst_27 = arith.constant 1.000000e+00 : f32
    %120 = vector.broadcast %cst_27 : f32 to vector<2x128xf32>
    %121 = arith.addf %120, %119 : vector<2x128xf32>
    %122 = arith.divf %120, %121 : vector<2x128xf32>
    %123 = arith.mulf %114, %96 : vector<2x128xf32>
    %124 = arith.mulf %108, %116 : vector<2x128xf32>
    %125 = arith.addf %123, %124 : vector<2x128xf32>
    %126 = math.tanh %125 : vector<2x128xf32>
    %127 = arith.mulf %122, %126 : vector<2x128xf32>
    %128 = vector.extract_strided_slice %9 {offsets = [8, 0], sizes = [2, 512], strides = [1, 1]} : vector<16x512xf32> to vector<2x512xf32>
    %129 = arith.truncf %127 : vector<2x128xf32> to vector<2x128xbf16>
    %cst_28 = arith.constant dense<0.000000e+00> : vector<2x512xf32>
    %130 = tpu.matmul %129, %3, %cst_28 {dimension_numbers = #tpu.dot_dimension_numbers<[1], [0], [0], [1], [0, 0, 1, 1], [], []>} : vector<2x128xbf16>, vector<128x512xbf16>, vector<2x512xf32> -> vector<2x512xf32>
    %131 = arith.addf %128, %130 : vector<2x512xf32>
    %132 = vector.extract_strided_slice %131 {offsets = [0, 0], sizes = [2, 128], strides = [1, 1]} : vector<2x512xf32> to vector<2x128xf32>
    %133 = arith.negf %132 : vector<2x128xf32>
    %134 = math.exp %133 : vector<2x128xf32>
    %cst_29 = arith.constant 1.000000e+00 : f32
    %135 = vector.broadcast %cst_29 : f32 to vector<2x128xf32>
    %136 = arith.addf %135, %134 : vector<2x128xf32>
    %137 = arith.divf %135, %136 : vector<2x128xf32>
    %138 = vector.extract_strided_slice %131 {offsets = [0, 128], sizes = [2, 128], strides = [1, 1]} : vector<2x512xf32> to vector<2x128xf32>
    %139 = arith.negf %138 : vector<2x128xf32>
    %140 = math.exp %139 : vector<2x128xf32>
    %cst_30 = arith.constant 1.000000e+00 : f32
    %141 = vector.broadcast %cst_30 : f32 to vector<2x128xf32>
    %142 = arith.addf %141, %140 : vector<2x128xf32>
    %143 = arith.divf %141, %142 : vector<2x128xf32>
    %144 = vector.extract_strided_slice %131 {offsets = [0, 256], sizes = [2, 128], strides = [1, 1]} : vector<2x512xf32> to vector<2x128xf32>
    %145 = math.tanh %144 : vector<2x128xf32>
    %146 = vector.extract_strided_slice %131 {offsets = [0, 384], sizes = [2, 128], strides = [1, 1]} : vector<2x512xf32> to vector<2x128xf32>
    %147 = arith.negf %146 : vector<2x128xf32>
    %148 = math.exp %147 : vector<2x128xf32>
    %cst_31 = arith.constant 1.000000e+00 : f32
    %149 = vector.broadcast %cst_31 : f32 to vector<2x128xf32>
    %150 = arith.addf %149, %148 : vector<2x128xf32>
    %151 = arith.divf %149, %150 : vector<2x128xf32>
    %152 = arith.mulf %143, %125 : vector<2x128xf32>
    %153 = arith.mulf %137, %145 : vector<2x128xf32>
    %154 = arith.addf %152, %153 : vector<2x128xf32>
    %155 = math.tanh %154 : vector<2x128xf32>
    %156 = arith.mulf %151, %155 : vector<2x128xf32>
    %157 = vector.extract_strided_slice %9 {offsets = [10, 0], sizes = [2, 512], strides = [1, 1]} : vector<16x512xf32> to vector<2x512xf32>
    %158 = arith.truncf %156 : vector<2x128xf32> to vector<2x128xbf16>
    %cst_32 = arith.constant dense<0.000000e+00> : vector<2x512xf32>
    %159 = tpu.matmul %158, %3, %cst_32 {dimension_numbers = #tpu.dot_dimension_numbers<[1], [0], [0], [1], [0, 0, 1, 1], [], []>} : vector<2x128xbf16>, vector<128x512xbf16>, vector<2x512xf32> -> vector<2x512xf32>
    %160 = arith.addf %157, %159 : vector<2x512xf32>
    %161 = vector.extract_strided_slice %160 {offsets = [0, 0], sizes = [2, 128], strides = [1, 1]} : vector<2x512xf32> to vector<2x128xf32>
    %162 = arith.negf %161 : vector<2x128xf32>
    %163 = math.exp %162 : vector<2x128xf32>
    %cst_33 = arith.constant 1.000000e+00 : f32
    %164 = vector.broadcast %cst_33 : f32 to vector<2x128xf32>
    %165 = arith.addf %164, %163 : vector<2x128xf32>
    %166 = arith.divf %164, %165 : vector<2x128xf32>
    %167 = vector.extract_strided_slice %160 {offsets = [0, 128], sizes = [2, 128], strides = [1, 1]} : vector<2x512xf32> to vector<2x128xf32>
    %168 = arith.negf %167 : vector<2x128xf32>
    %169 = math.exp %168 : vector<2x128xf32>
    %cst_34 = arith.constant 1.000000e+00 : f32
    %170 = vector.broadcast %cst_34 : f32 to vector<2x128xf32>
    %171 = arith.addf %170, %169 : vector<2x128xf32>
    %172 = arith.divf %170, %171 : vector<2x128xf32>
    %173 = vector.extract_strided_slice %160 {offsets = [0, 256], sizes = [2, 128], strides = [1, 1]} : vector<2x512xf32> to vector<2x128xf32>
    %174 = math.tanh %173 : vector<2x128xf32>
    %175 = vector.extract_strided_slice %160 {offsets = [0, 384], sizes = [2, 128], strides = [1, 1]} : vector<2x512xf32> to vector<2x128xf32>
    %176 = arith.negf %175 : vector<2x128xf32>
    %177 = math.exp %176 : vector<2x128xf32>
    %cst_35 = arith.constant 1.000000e+00 : f32
    %178 = vector.broadcast %cst_35 : f32 to vector<2x128xf32>
    %179 = arith.addf %178, %177 : vector<2x128xf32>
    %180 = arith.divf %178, %179 : vector<2x128xf32>
    %181 = arith.mulf %172, %154 : vector<2x128xf32>
    %182 = arith.mulf %166, %174 : vector<2x128xf32>
    %183 = arith.addf %181, %182 : vector<2x128xf32>
    %184 = math.tanh %183 : vector<2x128xf32>
    %185 = arith.mulf %180, %184 : vector<2x128xf32>
    %186 = vector.extract_strided_slice %9 {offsets = [12, 0], sizes = [2, 512], strides = [1, 1]} : vector<16x512xf32> to vector<2x512xf32>
    %187 = arith.truncf %185 : vector<2x128xf32> to vector<2x128xbf16>
    %cst_36 = arith.constant dense<0.000000e+00> : vector<2x512xf32>
    %188 = tpu.matmul %187, %3, %cst_36 {dimension_numbers = #tpu.dot_dimension_numbers<[1], [0], [0], [1], [0, 0, 1, 1], [], []>} : vector<2x128xbf16>, vector<128x512xbf16>, vector<2x512xf32> -> vector<2x512xf32>
    %189 = arith.addf %186, %188 : vector<2x512xf32>
    %190 = vector.extract_strided_slice %189 {offsets = [0, 0], sizes = [2, 128], strides = [1, 1]} : vector<2x512xf32> to vector<2x128xf32>
    %191 = arith.negf %190 : vector<2x128xf32>
    %192 = math.exp %191 : vector<2x128xf32>
    %cst_37 = arith.constant 1.000000e+00 : f32
    %193 = vector.broadcast %cst_37 : f32 to vector<2x128xf32>
    %194 = arith.addf %193, %192 : vector<2x128xf32>
    %195 = arith.divf %193, %194 : vector<2x128xf32>
    %196 = vector.extract_strided_slice %189 {offsets = [0, 128], sizes = [2, 128], strides = [1, 1]} : vector<2x512xf32> to vector<2x128xf32>
    %197 = arith.negf %196 : vector<2x128xf32>
    %198 = math.exp %197 : vector<2x128xf32>
    %cst_38 = arith.constant 1.000000e+00 : f32
    %199 = vector.broadcast %cst_38 : f32 to vector<2x128xf32>
    %200 = arith.addf %199, %198 : vector<2x128xf32>
    %201 = arith.divf %199, %200 : vector<2x128xf32>
    %202 = vector.extract_strided_slice %189 {offsets = [0, 256], sizes = [2, 128], strides = [1, 1]} : vector<2x512xf32> to vector<2x128xf32>
    %203 = math.tanh %202 : vector<2x128xf32>
    %204 = vector.extract_strided_slice %189 {offsets = [0, 384], sizes = [2, 128], strides = [1, 1]} : vector<2x512xf32> to vector<2x128xf32>
    %205 = arith.negf %204 : vector<2x128xf32>
    %206 = math.exp %205 : vector<2x128xf32>
    %cst_39 = arith.constant 1.000000e+00 : f32
    %207 = vector.broadcast %cst_39 : f32 to vector<2x128xf32>
    %208 = arith.addf %207, %206 : vector<2x128xf32>
    %209 = arith.divf %207, %208 : vector<2x128xf32>
    %210 = arith.mulf %201, %183 : vector<2x128xf32>
    %211 = arith.mulf %195, %203 : vector<2x128xf32>
    %212 = arith.addf %210, %211 : vector<2x128xf32>
    %213 = math.tanh %212 : vector<2x128xf32>
    %214 = arith.mulf %209, %213 : vector<2x128xf32>
    %215 = vector.extract_strided_slice %9 {offsets = [14, 0], sizes = [2, 512], strides = [1, 1]} : vector<16x512xf32> to vector<2x512xf32>
    %216 = arith.truncf %214 : vector<2x128xf32> to vector<2x128xbf16>
    %cst_40 = arith.constant dense<0.000000e+00> : vector<2x512xf32>
    %217 = tpu.matmul %216, %3, %cst_40 {dimension_numbers = #tpu.dot_dimension_numbers<[1], [0], [0], [1], [0, 0, 1, 1], [], []>} : vector<2x128xbf16>, vector<128x512xbf16>, vector<2x512xf32> -> vector<2x512xf32>
    %218 = arith.addf %215, %217 : vector<2x512xf32>
    %219 = vector.extract_strided_slice %218 {offsets = [0, 0], sizes = [2, 128], strides = [1, 1]} : vector<2x512xf32> to vector<2x128xf32>
    %220 = arith.negf %219 : vector<2x128xf32>
    %221 = math.exp %220 : vector<2x128xf32>
    %cst_41 = arith.constant 1.000000e+00 : f32
    %222 = vector.broadcast %cst_41 : f32 to vector<2x128xf32>
    %223 = arith.addf %222, %221 : vector<2x128xf32>
    %224 = arith.divf %222, %223 : vector<2x128xf32>
    %225 = vector.extract_strided_slice %218 {offsets = [0, 128], sizes = [2, 128], strides = [1, 1]} : vector<2x512xf32> to vector<2x128xf32>
    %226 = arith.negf %225 : vector<2x128xf32>
    %227 = math.exp %226 : vector<2x128xf32>
    %cst_42 = arith.constant 1.000000e+00 : f32
    %228 = vector.broadcast %cst_42 : f32 to vector<2x128xf32>
    %229 = arith.addf %228, %227 : vector<2x128xf32>
    %230 = arith.divf %228, %229 : vector<2x128xf32>
    %231 = vector.extract_strided_slice %218 {offsets = [0, 256], sizes = [2, 128], strides = [1, 1]} : vector<2x512xf32> to vector<2x128xf32>
    %232 = math.tanh %231 : vector<2x128xf32>
    %233 = vector.extract_strided_slice %218 {offsets = [0, 384], sizes = [2, 128], strides = [1, 1]} : vector<2x512xf32> to vector<2x128xf32>
    %234 = arith.negf %233 : vector<2x128xf32>
    %235 = math.exp %234 : vector<2x128xf32>
    %cst_43 = arith.constant 1.000000e+00 : f32
    %236 = vector.broadcast %cst_43 : f32 to vector<2x128xf32>
    %237 = arith.addf %236, %235 : vector<2x128xf32>
    %238 = arith.divf %236, %237 : vector<2x128xf32>
    %239 = arith.mulf %230, %212 : vector<2x128xf32>
    %240 = arith.mulf %224, %232 : vector<2x128xf32>
    %241 = arith.addf %239, %240 : vector<2x128xf32>
    %242 = math.tanh %241 : vector<2x128xf32>
    %243 = arith.mulf %238, %242 : vector<2x128xf32>
    %244 = arith.truncf %243 : vector<2x128xf32> to vector<2x128xbf16>
    %c0_44 = arith.constant 0 : index
    %c0_45 = arith.constant 0 : index
    %c0_46 = arith.constant 0 : index
    %245 = vector.load %arg6[%c0_44, %c0_45, %c0_46] : memref<3x128x128xbf16, #tpu.memory_space<vmem>>, vector<1x128x128xbf16>
    %246 = vector.shape_cast %245 : vector<1x128x128xbf16> to vector<128x128xbf16>
    %cst_47 = arith.constant dense<0.000000e+00> : vector<2x128xf32>
    %247 = tpu.matmul %244, %246, %cst_47 {dimension_numbers = #tpu.dot_dimension_numbers<[1], [0], [0], [1], [0, 0, 1, 1], [], []>} : vector<2x128xbf16>, vector<128x128xbf16>, vector<2x128xf32> -> vector<2x128xf32>
    %c0_48 = arith.constant 0 : index
    %c0_49 = arith.constant 0 : index
    %c0_50 = arith.constant 0 : index
    %248 = vector.load %arg7[%c0_48, %c0_49, %c0_50] : memref<3x1x128xf32, #tpu.memory_space<vmem>>, vector<1x1x128xf32>
    %249 = vector.shape_cast %248 : vector<1x1x128xf32> to vector<1x128xf32>
    %250 = vector.broadcast %249 : vector<1x128xf32> to vector<2x128xf32>
    %251 = arith.addf %247, %250 : vector<2x128xf32>
    %cst_51 = arith.constant 0.000000e+00 : f32
    %252 = vector.broadcast %cst_51 : f32 to vector<2x128xf32>
    %253 = arith.maximumf %251, %252 : vector<2x128xf32>
    %254 = arith.truncf %253 : vector<2x128xf32> to vector<2x128xbf16>
    %c1 = arith.constant 1 : index
    %c0_52 = arith.constant 0 : index
    %c0_53 = arith.constant 0 : index
    %255 = vector.load %arg6[%c1, %c0_52, %c0_53] : memref<3x128x128xbf16, #tpu.memory_space<vmem>>, vector<1x128x128xbf16>
    %256 = vector.shape_cast %255 : vector<1x128x128xbf16> to vector<128x128xbf16>
    %cst_54 = arith.constant dense<0.000000e+00> : vector<2x128xf32>
    %257 = tpu.matmul %254, %256, %cst_54 {dimension_numbers = #tpu.dot_dimension_numbers<[1], [0], [0], [1], [0, 0, 1, 1], [], []>} : vector<2x128xbf16>, vector<128x128xbf16>, vector<2x128xf32> -> vector<2x128xf32>
    %c1_55 = arith.constant 1 : index
    %c0_56 = arith.constant 0 : index
    %c0_57 = arith.constant 0 : index
    %258 = vector.load %arg7[%c1_55, %c0_56, %c0_57] : memref<3x1x128xf32, #tpu.memory_space<vmem>>, vector<1x1x128xf32>
    %259 = vector.shape_cast %258 : vector<1x1x128xf32> to vector<1x128xf32>
    %260 = vector.broadcast %259 : vector<1x128xf32> to vector<2x128xf32>
    %261 = arith.addf %257, %260 : vector<2x128xf32>
    %cst_58 = arith.constant 0.000000e+00 : f32
    %262 = vector.broadcast %cst_58 : f32 to vector<2x128xf32>
    %263 = arith.maximumf %261, %262 : vector<2x128xf32>
    %264 = arith.truncf %263 : vector<2x128xf32> to vector<2x128xbf16>
    %c2 = arith.constant 2 : index
    %c0_59 = arith.constant 0 : index
    %c0_60 = arith.constant 0 : index
    %265 = vector.load %arg6[%c2, %c0_59, %c0_60] : memref<3x128x128xbf16, #tpu.memory_space<vmem>>, vector<1x128x128xbf16>
    %266 = vector.shape_cast %265 : vector<1x128x128xbf16> to vector<128x128xbf16>
    %cst_61 = arith.constant dense<0.000000e+00> : vector<2x128xf32>
    %267 = tpu.matmul %264, %266, %cst_61 {dimension_numbers = #tpu.dot_dimension_numbers<[1], [0], [0], [1], [0, 0, 1, 1], [], []>} : vector<2x128xbf16>, vector<128x128xbf16>, vector<2x128xf32> -> vector<2x128xf32>
    %c2_62 = arith.constant 2 : index
    %c0_63 = arith.constant 0 : index
    %c0_64 = arith.constant 0 : index
    %268 = vector.load %arg7[%c2_62, %c0_63, %c0_64] : memref<3x1x128xf32, #tpu.memory_space<vmem>>, vector<1x1x128xf32>
    %269 = vector.shape_cast %268 : vector<1x1x128xf32> to vector<1x128xf32>
    %270 = vector.broadcast %269 : vector<1x128xf32> to vector<2x128xf32>
    %271 = arith.addf %267, %270 : vector<2x128xf32>
    %cst_65 = arith.constant 0.000000e+00 : f32
    %272 = vector.broadcast %cst_65 : f32 to vector<2x128xf32>
    %273 = arith.maximumf %271, %272 : vector<2x128xf32>
    %274 = arith.truncf %2 : vector<2x128xf32> to vector<2x128xbf16>
    %c0_66 = arith.constant 0 : index
    %c0_67 = arith.constant 0 : index
    %c0_68 = arith.constant 0 : index
    %275 = vector.load %arg6[%c0_66, %c0_67, %c0_68] : memref<3x128x128xbf16, #tpu.memory_space<vmem>>, vector<1x128x128xbf16>
    %276 = vector.shape_cast %275 : vector<1x128x128xbf16> to vector<128x128xbf16>
    %cst_69 = arith.constant dense<0.000000e+00> : vector<2x128xf32>
    %277 = tpu.matmul %274, %276, %cst_69 {dimension_numbers = #tpu.dot_dimension_numbers<[1], [0], [0], [1], [0, 0, 1, 1], [], []>} : vector<2x128xbf16>, vector<128x128xbf16>, vector<2x128xf32> -> vector<2x128xf32>
    %c0_70 = arith.constant 0 : index
    %c0_71 = arith.constant 0 : index
    %c0_72 = arith.constant 0 : index
    %278 = vector.load %arg7[%c0_70, %c0_71, %c0_72] : memref<3x1x128xf32, #tpu.memory_space<vmem>>, vector<1x1x128xf32>
    %279 = vector.shape_cast %278 : vector<1x1x128xf32> to vector<1x128xf32>
    %280 = vector.broadcast %279 : vector<1x128xf32> to vector<2x128xf32>
    %281 = arith.addf %277, %280 : vector<2x128xf32>
    %cst_73 = arith.constant 0.000000e+00 : f32
    %282 = vector.broadcast %cst_73 : f32 to vector<2x128xf32>
    %283 = arith.maximumf %281, %282 : vector<2x128xf32>
    %284 = arith.truncf %283 : vector<2x128xf32> to vector<2x128xbf16>
    %c1_74 = arith.constant 1 : index
    %c0_75 = arith.constant 0 : index
    %c0_76 = arith.constant 0 : index
    %285 = vector.load %arg6[%c1_74, %c0_75, %c0_76] : memref<3x128x128xbf16, #tpu.memory_space<vmem>>, vector<1x128x128xbf16>
    %286 = vector.shape_cast %285 : vector<1x128x128xbf16> to vector<128x128xbf16>
    %cst_77 = arith.constant dense<0.000000e+00> : vector<2x128xf32>
    %287 = tpu.matmul %284, %286, %cst_77 {dimension_numbers = #tpu.dot_dimension_numbers<[1], [0], [0], [1], [0, 0, 1, 1], [], []>} : vector<2x128xbf16>, vector<128x128xbf16>, vector<2x128xf32> -> vector<2x128xf32>
    %c1_78 = arith.constant 1 : index
    %c0_79 = arith.constant 0 : index
    %c0_80 = arith.constant 0 : index
    %288 = vector.load %arg7[%c1_78, %c0_79, %c0_80] : memref<3x1x128xf32, #tpu.memory_space<vmem>>, vector<1x1x128xf32>
    %289 = vector.shape_cast %288 : vector<1x1x128xf32> to vector<1x128xf32>
    %290 = vector.broadcast %289 : vector<1x128xf32> to vector<2x128xf32>
    %291 = arith.addf %287, %290 : vector<2x128xf32>
    %cst_81 = arith.constant 0.000000e+00 : f32
    %292 = vector.broadcast %cst_81 : f32 to vector<2x128xf32>
    %293 = arith.maximumf %291, %292 : vector<2x128xf32>
    %294 = arith.truncf %293 : vector<2x128xf32> to vector<2x128xbf16>
    %c2_82 = arith.constant 2 : index
    %c0_83 = arith.constant 0 : index
    %c0_84 = arith.constant 0 : index
    %295 = vector.load %arg6[%c2_82, %c0_83, %c0_84] : memref<3x128x128xbf16, #tpu.memory_space<vmem>>, vector<1x128x128xbf16>
    %296 = vector.shape_cast %295 : vector<1x128x128xbf16> to vector<128x128xbf16>
    %cst_85 = arith.constant dense<0.000000e+00> : vector<2x128xf32>
    %297 = tpu.matmul %294, %296, %cst_85 {dimension_numbers = #tpu.dot_dimension_numbers<[1], [0], [0], [1], [0, 0, 1, 1], [], []>} : vector<2x128xbf16>, vector<128x128xbf16>, vector<2x128xf32> -> vector<2x128xf32>
    %c2_86 = arith.constant 2 : index
    %c0_87 = arith.constant 0 : index
    %c0_88 = arith.constant 0 : index
    %298 = vector.load %arg7[%c2_86, %c0_87, %c0_88] : memref<3x1x128xf32, #tpu.memory_space<vmem>>, vector<1x1x128xf32>
    %299 = vector.shape_cast %298 : vector<1x1x128xf32> to vector<1x128xf32>
    %300 = vector.broadcast %299 : vector<1x128xf32> to vector<2x128xf32>
    %301 = arith.addf %297, %300 : vector<2x128xf32>
    %cst_89 = arith.constant 0.000000e+00 : f32
    %302 = vector.broadcast %cst_89 : f32 to vector<2x128xf32>
    %303 = arith.maximumf %301, %302 : vector<2x128xf32>
    %304 = arith.truncf %273 : vector<2x128xf32> to vector<2x128xbf16>
    %c0_90 = arith.constant 0 : index
    %c0_91 = arith.constant 0 : index
    %305 = vector.load %arg8[%c0_90, %c0_91] : memref<128x256xbf16, #tpu.memory_space<vmem>>, vector<128x256xbf16>
    %cst_92 = arith.constant dense<0.000000e+00> : vector<2x256xf32>
    %306 = tpu.matmul %304, %305, %cst_92 {dimension_numbers = #tpu.dot_dimension_numbers<[1], [0], [0], [1], [0, 0, 1, 1], [], []>} : vector<2x128xbf16>, vector<128x256xbf16>, vector<2x256xf32> -> vector<2x256xf32>
    %307 = arith.truncf %303 : vector<2x128xf32> to vector<2x128xbf16>
    %c0_93 = arith.constant 0 : index
    %c0_94 = arith.constant 0 : index
    %308 = vector.load %arg9[%c0_93, %c0_94] : memref<128x256xbf16, #tpu.memory_space<vmem>>, vector<128x256xbf16>
    %cst_95 = arith.constant dense<0.000000e+00> : vector<2x256xf32>
    %309 = tpu.matmul %307, %308, %cst_95 {dimension_numbers = #tpu.dot_dimension_numbers<[1], [0], [0], [1], [0, 0, 1, 1], [], []>} : vector<2x128xbf16>, vector<128x256xbf16>, vector<2x256xf32> -> vector<2x256xf32>
    %310 = arith.addf %306, %309 : vector<2x256xf32>
    %c0_96 = arith.constant 0 : index
    %c0_97 = arith.constant 0 : index
    %311 = vector.load %arg10[%c0_96, %c0_97] : memref<1x256xf32, #tpu.memory_space<vmem>>, vector<1x256xf32>
    %312 = vector.broadcast %311 : vector<1x256xf32> to vector<2x256xf32>
    %313 = arith.addf %310, %312 : vector<2x256xf32>
    %cst_98 = arith.constant 0.000000e+00 : f32
    %314 = vector.broadcast %cst_98 : f32 to vector<2x256xf32>
    %315 = arith.maximumf %313, %314 : vector<2x256xf32>
    %316 = arith.truncf %315 : vector<2x256xf32> to vector<2x256xbf16>
    %c0_99 = arith.constant 0 : index
    %c0_100 = arith.constant 0 : index
    %c0_101 = arith.constant 0 : index
    %317 = vector.load %arg11[%c0_99, %c0_100, %c0_101] : memref<2x256x256xbf16, #tpu.memory_space<vmem>>, vector<1x256x256xbf16>
    %318 = vector.shape_cast %317 : vector<1x256x256xbf16> to vector<256x256xbf16>
    %cst_102 = arith.constant dense<0.000000e+00> : vector<2x256xf32>
    %319 = tpu.matmul %316, %318, %cst_102 {dimension_numbers = #tpu.dot_dimension_numbers<[1], [0], [0], [1], [0, 0, 1, 1], [], []>} : vector<2x256xbf16>, vector<256x256xbf16>, vector<2x256xf32> -> vector<2x256xf32>
    %c0_103 = arith.constant 0 : index
    %c0_104 = arith.constant 0 : index
    %c0_105 = arith.constant 0 : index
    %320 = vector.load %arg12[%c0_103, %c0_104, %c0_105] : memref<2x1x256xf32, #tpu.memory_space<vmem>>, vector<1x1x256xf32>
    %321 = vector.shape_cast %320 : vector<1x1x256xf32> to vector<1x256xf32>
    %322 = vector.broadcast %321 : vector<1x256xf32> to vector<2x256xf32>
    %323 = arith.addf %319, %322 : vector<2x256xf32>
    %cst_106 = arith.constant 0.000000e+00 : f32
    %324 = vector.broadcast %cst_106 : f32 to vector<2x256xf32>
    %325 = arith.maximumf %323, %324 : vector<2x256xf32>
    %326 = arith.truncf %325 : vector<2x256xf32> to vector<2x256xbf16>
    %c1_107 = arith.constant 1 : index
    %c0_108 = arith.constant 0 : index
    %c0_109 = arith.constant 0 : index
    %327 = vector.load %arg11[%c1_107, %c0_108, %c0_109] : memref<2x256x256xbf16, #tpu.memory_space<vmem>>, vector<1x256x256xbf16>
    %328 = vector.shape_cast %327 : vector<1x256x256xbf16> to vector<256x256xbf16>
    %cst_110 = arith.constant dense<0.000000e+00> : vector<2x256xf32>
    %329 = tpu.matmul %326, %328, %cst_110 {dimension_numbers = #tpu.dot_dimension_numbers<[1], [0], [0], [1], [0, 0, 1, 1], [], []>} : vector<2x256xbf16>, vector<256x256xbf16>, vector<2x256xf32> -> vector<2x256xf32>
    %c1_111 = arith.constant 1 : index
    %c0_112 = arith.constant 0 : index
    %c0_113 = arith.constant 0 : index
    %330 = vector.load %arg12[%c1_111, %c0_112, %c0_113] : memref<2x1x256xf32, #tpu.memory_space<vmem>>, vector<1x1x256xf32>
    %331 = vector.shape_cast %330 : vector<1x1x256xf32> to vector<1x256xf32>
    %332 = vector.broadcast %331 : vector<1x256xf32> to vector<2x256xf32>
    %333 = arith.addf %329, %332 : vector<2x256xf32>
    %cst_114 = arith.constant 0.000000e+00 : f32
    %334 = vector.broadcast %cst_114 : f32 to vector<2x256xf32>
    %335 = arith.maximumf %333, %334 : vector<2x256xf32>
    %c0_115 = arith.constant 0 : index
    %c0_116 = arith.constant 0 : index
    %336 = vector.load %arg14[%c0_115, %c0_116] : memref<32x128xbf16, #tpu.memory_space<vmem>>, vector<32x128xbf16>
    %337 = arith.truncf %335 : vector<2x256xf32> to vector<2x256xbf16>
    %c0_117 = arith.constant 0 : index
    %c0_118 = arith.constant 0 : index
    %338 = vector.load %arg13[%c0_117, %c0_118] : memref<256x128xbf16, #tpu.memory_space<vmem>>, vector<256x128xbf16>
    %cst_119 = arith.constant dense<0.000000e+00> : vector<2x128xf32>
    %339 = tpu.matmul %337, %338, %cst_119 {dimension_numbers = #tpu.dot_dimension_numbers<[1], [0], [0], [1], [0, 0, 1, 1], [], []>} : vector<2x256xbf16>, vector<256x128xbf16>, vector<2x128xf32> -> vector<2x128xf32>
    %c0_120 = arith.constant 0 : index
    %c0_121 = arith.constant 0 : index
    %340 = vector.load %arg15[%c0_120, %c0_121] : memref<1x128xf32, #tpu.memory_space<vmem>>, vector<1x128xf32>
    %341 = vector.broadcast %340 : vector<1x128xf32> to vector<2x128xf32>
    %342 = arith.addf %339, %341 : vector<2x128xf32>
    %c0_122 = arith.constant 0 : index
    %c0_123 = arith.constant 0 : index
    %343 = vector.load %arg16[%c0_122, %c0_123] : memref<32x2xf32, #tpu.memory_space<vmem>>, vector<32x2xf32>
    %c0_124 = arith.constant 0 : index
    %c0_125 = arith.constant 0 : index
    %344 = vector.load %arg17[%c0_124, %c0_125] : memref<1x2xf32, #tpu.memory_space<vmem>>, vector<1x2xf32>
    %cst_126 = arith.constant 0.000000e+00 : f32
    %345 = vector.broadcast %cst_126 : f32 to vector<2x32xf32>
    %cst_127 = arith.constant 0.000000e+00 : f32
    %346 = vector.broadcast %cst_127 : f32 to vector<2x32xf32>
    %347 = arith.truncf %345 : vector<2x32xf32> to vector<2x32xbf16>
    %cst_128 = arith.constant dense<0.000000e+00> : vector<2x128xf32>
    %348 = tpu.matmul %347, %336, %cst_128 {dimension_numbers = #tpu.dot_dimension_numbers<[1], [0], [0], [1], [0, 0, 1, 1], [], []>} : vector<2x32xbf16>, vector<32x128xbf16>, vector<2x128xf32> -> vector<2x128xf32>
    %349 = arith.addf %342, %348 : vector<2x128xf32>
    %350 = vector.extract_strided_slice %349 {offsets = [0, 0], sizes = [2, 32], strides = [1, 1]} : vector<2x128xf32> to vector<2x32xf32>
    %351 = arith.negf %350 : vector<2x32xf32>
    %352 = math.exp %351 : vector<2x32xf32>
    %cst_129 = arith.constant 1.000000e+00 : f32
    %353 = vector.broadcast %cst_129 : f32 to vector<2x32xf32>
    %354 = arith.addf %353, %352 : vector<2x32xf32>
    %355 = arith.divf %353, %354 : vector<2x32xf32>
    %356 = vector.extract_strided_slice %349 {offsets = [0, 32], sizes = [2, 32], strides = [1, 1]} : vector<2x128xf32> to vector<2x32xf32>
    %357 = arith.negf %356 : vector<2x32xf32>
    %358 = math.exp %357 : vector<2x32xf32>
    %cst_130 = arith.constant 1.000000e+00 : f32
    %359 = vector.broadcast %cst_130 : f32 to vector<2x32xf32>
    %360 = arith.addf %359, %358 : vector<2x32xf32>
    %361 = arith.divf %359, %360 : vector<2x32xf32>
    %362 = vector.extract_strided_slice %349 {offsets = [0, 64], sizes = [2, 32], strides = [1, 1]} : vector<2x128xf32> to vector<2x32xf32>
    %363 = math.tanh %362 : vector<2x32xf32>
    %364 = vector.extract_strided_slice %349 {offsets = [0, 96], sizes = [2, 32], strides = [1, 1]} : vector<2x128xf32> to vector<2x32xf32>
    %365 = arith.negf %364 : vector<2x32xf32>
    %366 = math.exp %365 : vector<2x32xf32>
    %cst_131 = arith.constant 1.000000e+00 : f32
    %367 = vector.broadcast %cst_131 : f32 to vector<2x32xf32>
    %368 = arith.addf %367, %366 : vector<2x32xf32>
    %369 = arith.divf %367, %368 : vector<2x32xf32>
    %370 = arith.mulf %361, %346 : vector<2x32xf32>
    %371 = arith.mulf %355, %363 : vector<2x32xf32>
    %372 = arith.addf %370, %371 : vector<2x32xf32>
    %373 = math.tanh %372 : vector<2x32xf32>
    %374 = arith.mulf %369, %373 : vector<2x32xf32>
    %cst_132 = arith.constant dense<0.000000e+00> : vector<2x2xf32>
    %375 = tpu.matmul %374, %343, %cst_132 {dimension_numbers = #tpu.dot_dimension_numbers<[1], [0], [0], [1], [0, 0, 1, 1], [], []>} : vector<2x32xf32>, vector<32x2xf32>, vector<2x2xf32> -> vector<2x2xf32>
    %376 = vector.broadcast %344 : vector<1x2xf32> to vector<2x2xf32>
    %377 = arith.addf %375, %376 : vector<2x2xf32>
    %378 = arith.negf %377 : vector<2x2xf32>
    %379 = math.exp %378 : vector<2x2xf32>
    %cst_133 = arith.constant 1.000000e+00 : f32
    %380 = vector.broadcast %cst_133 : f32 to vector<2x2xf32>
    %381 = arith.addf %380, %379 : vector<2x2xf32>
    %382 = arith.divf %380, %381 : vector<2x2xf32>
    %c0_134 = arith.constant 0 : index
    %c0_135 = arith.constant 0 : index
    %c0_136 = arith.constant 0 : index
    %383 = vector.load %arg18[%c0_134, %c0_135, %c0_136] : memref<4x2x2xf32, #tpu.memory_space<vmem>>, vector<1x2x2xf32>
    %384 = vector.shape_cast %383 : vector<1x2x2xf32> to vector<2x2xf32>
    %385 = vector.shape_cast %382 : vector<2x2xf32> to vector<1x2x2xf32>
    tpu.vector_store %arg18[%c0_134, %c0_135, %c0_136], %385 {strides = array<i32>} : memref<4x2x2xf32, #tpu.memory_space<vmem>>, vector<1x2x2xf32>,
    %386 = arith.truncf %374 : vector<2x32xf32> to vector<2x32xbf16>
    %cst_137 = arith.constant dense<0.000000e+00> : vector<2x128xf32>
    %387 = tpu.matmul %386, %336, %cst_137 {dimension_numbers = #tpu.dot_dimension_numbers<[1], [0], [0], [1], [0, 0, 1, 1], [], []>} : vector<2x32xbf16>, vector<32x128xbf16>, vector<2x128xf32> -> vector<2x128xf32>
    %388 = arith.addf %342, %387 : vector<2x128xf32>
    %389 = vector.extract_strided_slice %388 {offsets = [0, 0], sizes = [2, 32], strides = [1, 1]} : vector<2x128xf32> to vector<2x32xf32>
    %390 = arith.negf %389 : vector<2x32xf32>
    %391 = math.exp %390 : vector<2x32xf32>
    %cst_138 = arith.constant 1.000000e+00 : f32
    %392 = vector.broadcast %cst_138 : f32 to vector<2x32xf32>
    %393 = arith.addf %392, %391 : vector<2x32xf32>
    %394 = arith.divf %392, %393 : vector<2x32xf32>
    %395 = vector.extract_strided_slice %388 {offsets = [0, 32], sizes = [2, 32], strides = [1, 1]} : vector<2x128xf32> to vector<2x32xf32>
    %396 = arith.negf %395 : vector<2x32xf32>
    %397 = math.exp %396 : vector<2x32xf32>
    %cst_139 = arith.constant 1.000000e+00 : f32
    %398 = vector.broadcast %cst_139 : f32 to vector<2x32xf32>
    %399 = arith.addf %398, %397 : vector<2x32xf32>
    %400 = arith.divf %398, %399 : vector<2x32xf32>
    %401 = vector.extract_strided_slice %388 {offsets = [0, 64], sizes = [2, 32], strides = [1, 1]} : vector<2x128xf32> to vector<2x32xf32>
    %402 = math.tanh %401 : vector<2x32xf32>
    %403 = vector.extract_strided_slice %388 {offsets = [0, 96], sizes = [2, 32], strides = [1, 1]} : vector<2x128xf32> to vector<2x32xf32>
    %404 = arith.negf %403 : vector<2x32xf32>
    %405 = math.exp %404 : vector<2x32xf32>
    %cst_140 = arith.constant 1.000000e+00 : f32
    %406 = vector.broadcast %cst_140 : f32 to vector<2x32xf32>
    %407 = arith.addf %406, %405 : vector<2x32xf32>
    %408 = arith.divf %406, %407 : vector<2x32xf32>
    %409 = arith.mulf %400, %372 : vector<2x32xf32>
    %410 = arith.mulf %394, %402 : vector<2x32xf32>
    %411 = arith.addf %409, %410 : vector<2x32xf32>
    %412 = math.tanh %411 : vector<2x32xf32>
    %413 = arith.mulf %408, %412 : vector<2x32xf32>
    %cst_141 = arith.constant dense<0.000000e+00> : vector<2x2xf32>
    %414 = tpu.matmul %413, %343, %cst_141 {dimension_numbers = #tpu.dot_dimension_numbers<[1], [0], [0], [1], [0, 0, 1, 1], [], []>} : vector<2x32xf32>, vector<32x2xf32>, vector<2x2xf32> -> vector<2x2xf32>
    %415 = vector.broadcast %344 : vector<1x2xf32> to vector<2x2xf32>
    %416 = arith.addf %414, %415 : vector<2x2xf32>
    %417 = arith.negf %416 : vector<2x2xf32>
    %418 = math.exp %417 : vector<2x2xf32>
    %cst_142 = arith.constant 1.000000e+00 : f32
    %419 = vector.broadcast %cst_142 : f32 to vector<2x2xf32>
    %420 = arith.addf %419, %418 : vector<2x2xf32>
    %421 = arith.divf %419, %420 : vector<2x2xf32>
    %c1_143 = arith.constant 1 : index
    %c0_144 = arith.constant 0 : index
    %c0_145 = arith.constant 0 : index
    %422 = vector.load %arg18[%c1_143, %c0_144, %c0_145] : memref<4x2x2xf32, #tpu.memory_space<vmem>>, vector<1x2x2xf32>
    %423 = vector.shape_cast %422 : vector<1x2x2xf32> to vector<2x2xf32>
    %424 = vector.shape_cast %421 : vector<2x2xf32> to vector<1x2x2xf32>
    tpu.vector_store %arg18[%c1_143, %c0_144, %c0_145], %424 {strides = array<i32>} : memref<4x2x2xf32, #tpu.memory_space<vmem>>, vector<1x2x2xf32>,
    %425 = arith.truncf %413 : vector<2x32xf32> to vector<2x32xbf16>
    %cst_146 = arith.constant dense<0.000000e+00> : vector<2x128xf32>
    %426 = tpu.matmul %425, %336, %cst_146 {dimension_numbers = #tpu.dot_dimension_numbers<[1], [0], [0], [1], [0, 0, 1, 1], [], []>} : vector<2x32xbf16>, vector<32x128xbf16>, vector<2x128xf32> -> vector<2x128xf32>
    %427 = arith.addf %342, %426 : vector<2x128xf32>
    %428 = vector.extract_strided_slice %427 {offsets = [0, 0], sizes = [2, 32], strides = [1, 1]} : vector<2x128xf32> to vector<2x32xf32>
    %429 = arith.negf %428 : vector<2x32xf32>
    %430 = math.exp %429 : vector<2x32xf32>
    %cst_147 = arith.constant 1.000000e+00 : f32
    %431 = vector.broadcast %cst_147 : f32 to vector<2x32xf32>
    %432 = arith.addf %431, %430 : vector<2x32xf32>
    %433 = arith.divf %431, %432 : vector<2x32xf32>
    %434 = vector.extract_strided_slice %427 {offsets = [0, 32], sizes = [2, 32], strides = [1, 1]} : vector<2x128xf32> to vector<2x32xf32>
    %435 = arith.negf %434 : vector<2x32xf32>
    %436 = math.exp %435 : vector<2x32xf32>
    %cst_148 = arith.constant 1.000000e+00 : f32
    %437 = vector.broadcast %cst_148 : f32 to vector<2x32xf32>
    %438 = arith.addf %437, %436 : vector<2x32xf32>
    %439 = arith.divf %437, %438 : vector<2x32xf32>
    %440 = vector.extract_strided_slice %427 {offsets = [0, 64], sizes = [2, 32], strides = [1, 1]} : vector<2x128xf32> to vector<2x32xf32>
    %441 = math.tanh %440 : vector<2x32xf32>
    %442 = vector.extract_strided_slice %427 {offsets = [0, 96], sizes = [2, 32], strides = [1, 1]} : vector<2x128xf32> to vector<2x32xf32>
    %443 = arith.negf %442 : vector<2x32xf32>
    %444 = math.exp %443 : vector<2x32xf32>
    %cst_149 = arith.constant 1.000000e+00 : f32
    %445 = vector.broadcast %cst_149 : f32 to vector<2x32xf32>
    %446 = arith.addf %445, %444 : vector<2x32xf32>
    %447 = arith.divf %445, %446 : vector<2x32xf32>
    %448 = arith.mulf %439, %411 : vector<2x32xf32>
    %449 = arith.mulf %433, %441 : vector<2x32xf32>
    %450 = arith.addf %448, %449 : vector<2x32xf32>
    %451 = math.tanh %450 : vector<2x32xf32>
    %452 = arith.mulf %447, %451 : vector<2x32xf32>
    %cst_150 = arith.constant dense<0.000000e+00> : vector<2x2xf32>
    %453 = tpu.matmul %452, %343, %cst_150 {dimension_numbers = #tpu.dot_dimension_numbers<[1], [0], [0], [1], [0, 0, 1, 1], [], []>} : vector<2x32xf32>, vector<32x2xf32>, vector<2x2xf32> -> vector<2x2xf32>
    %454 = vector.broadcast %344 : vector<1x2xf32> to vector<2x2xf32>
    %455 = arith.addf %453, %454 : vector<2x2xf32>
    %456 = arith.negf %455 : vector<2x2xf32>
    %457 = math.exp %456 : vector<2x2xf32>
    %cst_151 = arith.constant 1.000000e+00 : f32
    %458 = vector.broadcast %cst_151 : f32 to vector<2x2xf32>
    %459 = arith.addf %458, %457 : vector<2x2xf32>
    %460 = arith.divf %458, %459 : vector<2x2xf32>
    %c2_152 = arith.constant 2 : index
    %c0_153 = arith.constant 0 : index
    %c0_154 = arith.constant 0 : index
    %461 = vector.load %arg18[%c2_152, %c0_153, %c0_154] : memref<4x2x2xf32, #tpu.memory_space<vmem>>, vector<1x2x2xf32>
    %462 = vector.shape_cast %461 : vector<1x2x2xf32> to vector<2x2xf32>
    %463 = vector.shape_cast %460 : vector<2x2xf32> to vector<1x2x2xf32>
    tpu.vector_store %arg18[%c2_152, %c0_153, %c0_154], %463 {strides = array<i32>} : memref<4x2x2xf32, #tpu.memory_space<vmem>>, vector<1x2x2xf32>,
    %464 = arith.truncf %452 : vector<2x32xf32> to vector<2x32xbf16>
    %cst_155 = arith.constant dense<0.000000e+00> : vector<2x128xf32>
    %465 = tpu.matmul %464, %336, %cst_155 {dimension_numbers = #tpu.dot_dimension_numbers<[1], [0], [0], [1], [0, 0, 1, 1], [], []>} : vector<2x32xbf16>, vector<32x128xbf16>, vector<2x128xf32> -> vector<2x128xf32>
    %466 = arith.addf %342, %465 : vector<2x128xf32>
    %467 = vector.extract_strided_slice %466 {offsets = [0, 0], sizes = [2, 32], strides = [1, 1]} : vector<2x128xf32> to vector<2x32xf32>
    %468 = arith.negf %467 : vector<2x32xf32>
    %469 = math.exp %468 : vector<2x32xf32>
    %cst_156 = arith.constant 1.000000e+00 : f32
    %470 = vector.broadcast %cst_156 : f32 to vector<2x32xf32>
    %471 = arith.addf %470, %469 : vector<2x32xf32>
    %472 = arith.divf %470, %471 : vector<2x32xf32>
    %473 = vector.extract_strided_slice %466 {offsets = [0, 32], sizes = [2, 32], strides = [1, 1]} : vector<2x128xf32> to vector<2x32xf32>
    %474 = arith.negf %473 : vector<2x32xf32>
    %475 = math.exp %474 : vector<2x32xf32>
    %cst_157 = arith.constant 1.000000e+00 : f32
    %476 = vector.broadcast %cst_157 : f32 to vector<2x32xf32>
    %477 = arith.addf %476, %475 : vector<2x32xf32>
    %478 = arith.divf %476, %477 : vector<2x32xf32>
    %479 = vector.extract_strided_slice %466 {offsets = [0, 64], sizes = [2, 32], strides = [1, 1]} : vector<2x128xf32> to vector<2x32xf32>
    %480 = math.tanh %479 : vector<2x32xf32>
    %481 = vector.extract_strided_slice %466 {offsets = [0, 96], sizes = [2, 32], strides = [1, 1]} : vector<2x128xf32> to vector<2x32xf32>
    %482 = arith.negf %481 : vector<2x32xf32>
    %483 = math.exp %482 : vector<2x32xf32>
    %cst_158 = arith.constant 1.000000e+00 : f32
    %484 = vector.broadcast %cst_158 : f32 to vector<2x32xf32>
    %485 = arith.addf %484, %483 : vector<2x32xf32>
    %486 = arith.divf %484, %485 : vector<2x32xf32>
    %487 = arith.mulf %478, %450 : vector<2x32xf32>
    %488 = arith.mulf %472, %480 : vector<2x32xf32>
    %489 = arith.addf %487, %488 : vector<2x32xf32>
    %490 = math.tanh %489 : vector<2x32xf32>
    %491 = arith.mulf %486, %490 : vector<2x32xf32>
    %cst_159 = arith.constant dense<0.000000e+00> : vector<2x2xf32>
    %492 = tpu.matmul %491, %343, %cst_159 {dimension_numbers = #tpu.dot_dimension_numbers<[1], [0], [0], [1], [0, 0, 1, 1], [], []>} : vector<2x32xf32>, vector<32x2xf32>, vector<2x2xf32> -> vector<2x2xf32>
    %493 = vector.broadcast %344 : vector<1x2xf32> to vector<2x2xf32>
    %494 = arith.addf %492, %493 : vector<2x2xf32>
    %495 = arith.negf %494 : vector<2x2xf32>
    %496 = math.exp %495 : vector<2x2xf32>
    %cst_160 = arith.constant 1.000000e+00 : f32
    %497 = vector.broadcast %cst_160 : f32 to vector<2x2xf32>
    %498 = arith.addf %497, %496 : vector<2x2xf32>
    %499 = arith.divf %497, %498 : vector<2x2xf32>
    %c3 = arith.constant 3 : index
    %c0_161 = arith.constant 0 : index
    %c0_162 = arith.constant 0 : index
    %500 = vector.load %arg18[%c3, %c0_161, %c0_162] : memref<4x2x2xf32, #tpu.memory_space<vmem>>, vector<1x2x2xf32>
    %501 = vector.shape_cast %500 : vector<1x2x2xf32> to vector<2x2xf32>
    %502 = vector.shape_cast %499 : vector<2x2xf32> to vector<1x2x2xf32>
    tpu.vector_store %arg18[%c3, %c0_161, %c0_162], %502 {strides = array<i32>} : memref<4x2x2xf32, #tpu.memory_space<vmem>>, vector<1x2x2xf32>,
    return
  }
  func.func @transform_0(%arg0: i32) -> (i32, i32, i32) {
    %c0_i32 = arith.constant 0 : i32
    %c0_i32_0 = arith.constant 0 : i32
    %c0_i32_1 = arith.constant 0 : i32
    return %arg0, %c0_i32, %c0_i32_0 : i32, i32, i32
  }
  func.func @transform_1(%arg0: i32) -> (i32, i32) {
    %c0_i32 = arith.constant 0 : i32
    %c0_i32_0 = arith.constant 0 : i32
    return %arg0, %c0_i32 : i32, i32
  }
  func.func @transform_2(%arg0: i32) -> (i32, i32) {
    %c0_i32 = arith.constant 0 : i32
    %c0_i32_0 = arith.constant 0 : i32
    %c0_i32_1 = arith.constant 0 : i32
    return %c0_i32, %c0_i32_0 : i32, i32
  }
  func.func @transform_3(%arg0: i32) -> (i32, i32) {
    %c0_i32 = arith.constant 0 : i32
    %c0_i32_0 = arith.constant 0 : i32
    %c0_i32_1 = arith.constant 0 : i32
    return %c0_i32, %c0_i32_0 : i32, i32
  }
  func.func @transform_4(%arg0: i32) -> (i32, i32) {
    %c0_i32 = arith.constant 0 : i32
    %c0_i32_0 = arith.constant 0 : i32
    %c0_i32_1 = arith.constant 0 : i32
    return %c0_i32, %c0_i32_0 : i32, i32
  }
  func.func @transform_5(%arg0: i32) -> (i32, i32, i32) {
    %c0_i32 = arith.constant 0 : i32
    %c0_i32_0 = arith.constant 0 : i32
    %c0_i32_1 = arith.constant 0 : i32
    %c0_i32_2 = arith.constant 0 : i32
    return %c0_i32, %c0_i32_0, %c0_i32_1 : i32, i32, i32
  }
  func.func @transform_6(%arg0: i32) -> (i32, i32, i32) {
    %c0_i32 = arith.constant 0 : i32
    %c0_i32_0 = arith.constant 0 : i32
    %c0_i32_1 = arith.constant 0 : i32
    %c0_i32_2 = arith.constant 0 : i32
    return %c0_i32, %c0_i32_0, %c0_i32_1 : i32, i32, i32
  }
  func.func @transform_7(%arg0: i32) -> (i32, i32) {
    %c0_i32 = arith.constant 0 : i32
    %c0_i32_0 = arith.constant 0 : i32
    %c0_i32_1 = arith.constant 0 : i32
    return %c0_i32, %c0_i32_0 : i32, i32
  }
  func.func @transform_8(%arg0: i32) -> (i32, i32) {
    %c0_i32 = arith.constant 0 : i32
    %c0_i32_0 = arith.constant 0 : i32
    %c0_i32_1 = arith.constant 0 : i32
    return %c0_i32, %c0_i32_0 : i32, i32
  }
  func.func @transform_9(%arg0: i32) -> (i32, i32) {
    %c0_i32 = arith.constant 0 : i32
    %c0_i32_0 = arith.constant 0 : i32
    %c0_i32_1 = arith.constant 0 : i32
    return %c0_i32, %c0_i32_0 : i32, i32
  }
  func.func @transform_10(%arg0: i32) -> (i32, i32, i32) {
    %c0_i32 = arith.constant 0 : i32
    %c0_i32_0 = arith.constant 0 : i32
    %c0_i32_1 = arith.constant 0 : i32
    %c0_i32_2 = arith.constant 0 : i32
    return %c0_i32, %c0_i32_0, %c0_i32_1 : i32, i32, i32
  }
  func.func @transform_11(%arg0: i32) -> (i32, i32, i32) {
    %c0_i32 = arith.constant 0 : i32
    %c0_i32_0 = arith.constant 0 : i32
    %c0_i32_1 = arith.constant 0 : i32
    %c0_i32_2 = arith.constant 0 : i32
    return %c0_i32, %c0_i32_0, %c0_i32_1 : i32, i32, i32
  }
  func.func @transform_12(%arg0: i32) -> (i32, i32) {
    %c0_i32 = arith.constant 0 : i32
    %c0_i32_0 = arith.constant 0 : i32
    %c0_i32_1 = arith.constant 0 : i32
    return %c0_i32, %c0_i32_0 : i32, i32
  }
  func.func @transform_13(%arg0: i32) -> (i32, i32) {
    %c0_i32 = arith.constant 0 : i32
    %c0_i32_0 = arith.constant 0 : i32
    %c0_i32_1 = arith.constant 0 : i32
    return %c0_i32, %c0_i32_0 : i32, i32
  }
  func.func @transform_14(%arg0: i32) -> (i32, i32) {
    %c0_i32 = arith.constant 0 : i32
    %c0_i32_0 = arith.constant 0 : i32
    %c0_i32_1 = arith.constant 0 : i32
    return %c0_i32, %c0_i32_0 : i32, i32
  }
  func.func @transform_15(%arg0: i32) -> (i32, i32) {
    %c0_i32 = arith.constant 0 : i32
    %c0_i32_0 = arith.constant 0 : i32
    %c0_i32_1 = arith.constant 0 : i32
    return %c0_i32, %c0_i32_0 : i32, i32
  }
  func.func @transform_16(%arg0: i32) -> (i32, i32) {
    %c0_i32 = arith.constant 0 : i32
    %c0_i32_0 = arith.constant 0 : i32
    %c0_i32_1 = arith.constant 0 : i32
    return %c0_i32, %c0_i32_0 : i32, i32
  }
  func.func @transform_17(%arg0: i32) -> (i32, i32, i32) {
    %c0_i32 = arith.constant 0 : i32
    %c0_i32_0 = arith.constant 0 : i32
    %c0_i32_1 = arith.constant 0 : i32
    return %c0_i32, %arg0, %c0_i32_0 : i32, i32, i32
  }
}

</mosaic_0001>

<llo_original>
// kernel: generator_forward.1
$region0: #{generator_forward.1}
  #allocation0 [shape = 'u32[]', space=smem, size = 0x4, offset = 0x4, fixed_abs, tag = 'smem constant byte address 0x4 - core index']
  #allocation1 [shape = 'u32[72,128]{1,0:T(1,128)}', space=vmem, size = 0x9000, scoped, tag = 'internal scratch']
  %s0 = inlined_call_operand.vmem [shape: f32[1,16,16], index: 0, kind: input, shape index: {}]
  %s1 = inlined_call_operand.vmem [shape: f32[2,128], index: 1, kind: input, shape index: {}]
  %s2 = inlined_call_operand.vmem [shape: bf16[16,512], index: 2, kind: input, shape index: {}]
  %s3 = inlined_call_operand.vmem [shape: bf16[128,512], index: 3, kind: input, shape index: {}]
  %s4 = inlined_call_operand.vmem [shape: f32[1,512], index: 4, kind: input, shape index: {}]
  %s5 = inlined_call_operand.vmem [shape: bf16[3,128,128], index: 5, kind: input, shape index: {}]
  %s6 = inlined_call_operand.vmem [shape: f32[3,1,128], index: 6, kind: input, shape index: {}]
  %s7 = inlined_call_operand.vmem [shape: bf16[128,256], index: 7, kind: input, shape index: {}]
  %s8 = inlined_call_operand.vmem [shape: bf16[128,256], index: 8, kind: input, shape index: {}]
  %s9 = inlined_call_operand.vmem [shape: f32[1,256], index: 9, kind: input, shape index: {}]
  %s10 = inlined_call_operand.vmem [shape: bf16[2,256,256], index: 10, kind: input, shape index: {}]
  %s11 = inlined_call_operand.vmem [shape: f32[2,1,256], index: 11, kind: input, shape index: {}]
  %s12 = inlined_call_operand.vmem [shape: bf16[256,128], index: 12, kind: input, shape index: {}]
  %s13 = inlined_call_operand.vmem [shape: bf16[32,128], index: 13, kind: input, shape index: {}]
  %s14 = inlined_call_operand.vmem [shape: f32[1,128], index: 14, kind: input, shape index: {}]
  %s15 = inlined_call_operand.vmem [shape: f32[32,2], index: 15, kind: input, shape index: {}]
  %s16 = inlined_call_operand.vmem [shape: f32[1,2], index: 16, kind: input, shape index: {}]
  %s17 = inlined_call_operand.vmem [shape: f32[4,2,2], index: 17, kind: output, shape index: {}]
  %s18 = sld [smem:[#allocation0]]
  $region78: #{generator_forward.1} parent=0
    _
  %s20 = ssub.s32 1, %s18
  %s21 = scalar_select 0, %s20, %s18
  // Predicated region
  $region2: #{generator_forward.1} parent=0 // pred_check
    _
  $region3: #{generator_forward.1} parent=0 // pred_check_branch
    %23 = sbr.rel (0) target = $region5
  $region4: #{generator_forward.1} parent=0 // pred_region
    _
  $region5: #{generator_forward.1} parent=0 // pred_fallthru
    _
  // Predicated region
  $region6: #{generator_forward.1} parent=0 // pred_check
    _
  $region7: #{generator_forward.1} parent=0 // pred_check_branch
    %25 = sbr.rel (0) target = $region9
  $region8: #{generator_forward.1} parent=0 // pred_region
    _
  $region9: #{generator_forward.1} parent=0 // pred_fallthru
    _
  // Predicated region
  $region10: #{generator_forward.1} parent=0 // pred_check
    _
  $region11: #{generator_forward.1} parent=0 // pred_check_branch
    %27 = sbr.rel (0) target = $region13
  $region12: #{generator_forward.1} parent=0 // pred_region
    _
  $region13: #{generator_forward.1} parent=0 // pred_fallthru
    _
  // Predicated region
  $region14: #{generator_forward.1} parent=0 // pred_check
    _
  $region15: #{generator_forward.1} parent=0 // pred_check_branch
    %29 = sbr.rel (0) target = $region17
  $region16: #{generator_forward.1} parent=0 // pred_region
    _
  $region17: #{generator_forward.1} parent=0 // pred_fallthru
    _
  // Predicated region
  $region18: #{generator_forward.1} parent=0 // pred_check
    _
  $region19: #{generator_forward.1} parent=0 // pred_check_branch
    %31 = sbr.rel (0) target = $region21
  $region20: #{generator_forward.1} parent=0 // pred_region
    _
  $region21: #{generator_forward.1} parent=0 // pred_fallthru
    _
  // Predicated region
  $region22: #{generator_forward.1} parent=0 // pred_check
    _
  $region23: #{generator_forward.1} parent=0 // pred_check_branch
    %33 = sbr.rel (0) target = $region25
  $region24: #{generator_forward.1} parent=0 // pred_region
    _
  $region25: #{generator_forward.1} parent=0 // pred_fallthru
    _
  // Predicated region
  $region26: #{generator_forward.1} parent=0 // pred_check
    _
  $region27: #{generator_forward.1} parent=0 // pred_check_branch
    %35 = sbr.rel (0) target = $region29
  $region28: #{generator_forward.1} parent=0 // pred_region
    _
  $region29: #{generator_forward.1} parent=0 // pred_fallthru
    _
  // Predicated region
  $region30: #{generator_forward.1} parent=0 // pred_check
    _
  $region31: #{generator_forward.1} parent=0 // pred_check_branch
    %37 = sbr.rel (0) target = $region33
  $region32: #{generator_forward.1} parent=0 // pred_region
    _
  $region33: #{generator_forward.1} parent=0 // pred_fallthru
    _
  // Predicated region
  $region34: #{generator_forward.1} parent=0 // pred_check
    _
  $region35: #{generator_forward.1} parent=0 // pred_check_branch
    %39 = sbr.rel (0) target = $region37
  $region36: #{generator_forward.1} parent=0 // pred_region
    _
  $region37: #{generator_forward.1} parent=0 // pred_fallthru
    _
  // Predicated region
  $region38: #{generator_forward.1} parent=0 // pred_check
    _
  $region39: #{generator_forward.1} parent=0 // pred_check_branch
    %41 = sbr.rel (0) target = $region41
  $region40: #{generator_forward.1} parent=0 // pred_region
    _
  $region41: #{generator_forward.1} parent=0 // pred_fallthru
    _
  // Predicated region
  $region42: #{generator_forward.1} parent=0 // pred_check
    _
  $region43: #{generator_forward.1} parent=0 // pred_check_branch
    %43 = sbr.rel (0) target = $region45
  $region44: #{generator_forward.1} parent=0 // pred_region
    _
  $region45: #{generator_forward.1} parent=0 // pred_fallthru
    _
  // Predicated region
  $region46: #{generator_forward.1} parent=0 // pred_check
    _
  $region47: #{generator_forward.1} parent=0 // pred_check_branch
    %45 = sbr.rel (0) target = $region49
  $region48: #{generator_forward.1} parent=0 // pred_region
    _
  $region49: #{generator_forward.1} parent=0 // pred_fallthru
    _
  // Predicated region
  $region50: #{generator_forward.1} parent=0 // pred_check
    _
  $region51: #{generator_forward.1} parent=0 // pred_check_branch
    %47 = sbr.rel (0) target = $region53
  $region52: #{generator_forward.1} parent=0 // pred_region
    _
  $region53: #{generator_forward.1} parent=0 // pred_fallthru
    _
  // Predicated region
  $region54: #{generator_forward.1} parent=0 // pred_check
    _
  $region55: #{generator_forward.1} parent=0 // pred_check_branch
    %49 = sbr.rel (0) target = $region57
  $region56: #{generator_forward.1} parent=0 // pred_region
    _
  $region57: #{generator_forward.1} parent=0 // pred_fallthru
    _
  // Predicated region
  $region58: #{generator_forward.1} parent=0 // pred_check
    _
  $region59: #{generator_forward.1} parent=0 // pred_check_branch
    %51 = sbr.rel (0) target = $region61
  $region60: #{generator_forward.1} parent=0 // pred_region
    _
  $region61: #{generator_forward.1} parent=0 // pred_fallthru
    _
  // Predicated region
  $region62: #{generator_forward.1} parent=0 // pred_check
    _
  $region63: #{generator_forward.1} parent=0 // pred_check_branch
    %53 = sbr.rel (0) target = $region65
  $region64: #{generator_forward.1} parent=0 // pred_region
    _
  $region65: #{generator_forward.1} parent=0 // pred_fallthru
    _
  // Predicated region
  $region66: #{generator_forward.1} parent=0 // pred_check
    _
  $region67: #{generator_forward.1} parent=0 // pred_check_branch
    %55 = sbr.rel (0) target = $region69
  $region68: #{generator_forward.1} parent=0 // pred_region
    _
  $region69: #{generator_forward.1} parent=0 // pred_fallthru
    _
  %v57 = vld [vmem:[%s0] sm:$0xff]
  %v58 = vld [vmem:[%s0 + $0x8] sm:$0xff]
  %v59 = vld [vmem:[%s1] sm:$0x3]
  %v60 = vld [vmem:[%s3] sm:$0xff]
  %v61 = vld [vmem:[%s3 + $0x8] sm:$0xff]
  %v62 = vld [vmem:[%s3 + $0x10] sm:$0xff]
  %v63 = vld [vmem:[%s3 + $0x18] sm:$0xff]
  %v64 = vld [vmem:[%s3 + $0x20] sm:$0xff]
  %v65 = vld [vmem:[%s3 + $0x28] sm:$0xff]
  %v66 = vld [vmem:[%s3 + $0x30] sm:$0xff]
  %v67 = vld [vmem:[%s3 + $0x38] sm:$0xff]
  %v68 = vld [vmem:[%s3 + $0x40] sm:$0xff]
  %v69 = vld [vmem:[%s3 + $0x48] sm:$0xff]
  %v70 = vld [vmem:[%s3 + $0x50] sm:$0xff]
  %v71 = vld [vmem:[%s3 + $0x58] sm:$0xff]
  %v72 = vld [vmem:[%s3 + $0x60] sm:$0xff]
  %v73 = vld [vmem:[%s3 + $0x68] sm:$0xff]
  %v74 = vld [vmem:[%s3 + $0x70] sm:$0xff]
  %v75 = vld [vmem:[%s3 + $0x78] sm:$0xff]
  %v76 = vld [vmem:[%s3 + $0x80] sm:$0xff]
  %v77 = vld [vmem:[%s3 + $0x88] sm:$0xff]
  %v78 = vld [vmem:[%s3 + $0x90] sm:$0xff]
  %v79 = vld [vmem:[%s3 + $0x98] sm:$0xff]
  %v80 = vld [vmem:[%s3 + $0xa0] sm:$0xff]
  %v81 = vld [vmem:[%s3 + $0xa8] sm:$0xff]
  %v82 = vld [vmem:[%s3 + $0xb0] sm:$0xff]
  %v83 = vld [vmem:[%s3 + $0xb8] sm:$0xff]
  %v84 = vld [vmem:[%s3 + $0xc0] sm:$0xff]
  %v85 = vld [vmem:[%s3 + $0xc8] sm:$0xff]
  %v86 = vld [vmem:[%s3 + $0xd0] sm:$0xff]
  %v87 = vld [vmem:[%s3 + $0xd8] sm:$0xff]
  %v88 = vld [vmem:[%s3 + $0xe0] sm:$0xff]
  %v89 = vld [vmem:[%s3 + $0xe8] sm:$0xff]
  %v90 = vld [vmem:[%s3 + $0xf0] sm:$0xff]
  %v91 = vld [vmem:[%s3 + $0xf8] sm:$0xff]
  %v92 = vpack.c.bf16 %v58, %v57
  %v93 = vld [vmem:[%s2] sm:$0xff]
  %v94 = vld [vmem:[%s2 + $0x8] sm:$0xff]
  %v95 = vld [vmem:[%s2 + $0x10] sm:$0xff]
  %v96 = vld [vmem:[%s2 + $0x18] sm:$0xff]
  %v97 = vld [vmem:[%s4] sm:$0xf]
  %v99 = vperm.slane %v97, 0
  %v100 = vperm.slane %v97, 1
  %v101 = vperm.slane %v97, 2
  %v102 = vperm.slane %v97, 3
  %v111 = vunpack.c.l.b16 %v93
  %v112 = vunpack.c.h.b16 %v93
  %v113 = vunpack.c.l.b16 %v94
  %v114 = vunpack.c.h.b16 %v94
  %v115 = vunpack.c.l.b16 %v95
  %v116 = vunpack.c.h.b16 %v95
  %v117 = vunpack.c.l.b16 %v96
  %v118 = vunpack.c.h.b16 %v96
  %v119 = vpack.c.b16 %v115, %v111
  %v120 = vpack.c.b16 %v116, %v112
  %v121 = vpack.c.b16 %v117, %v113
  %v122 = vpack.c.b16 %v118, %v114
  %vm127 = vcmask 130048
  %v129 = vsel %vm127, %v92, 0
  %131 = vmatpush.bf16.msra.mxu0 0
  %132 = vmatpush.bf16.msra.mxu0 0
  %133 = vmatpush.bf16.msra.mxu0 0
  %134 = vmatpush.bf16.msra.mxu0 0
  %135 = vmatpush.bf16.msra.mxu0 0
  %136 = vmatpush.bf16.msra.mxu0 0
  %137 = vmatpush.bf16.msra.mxu0 0
  %138 = vmatpush.bf16.msra.mxu0 %v119
  %139 = vmatmul.bf16.gmra.mxu0 %v129
  %v140 = vpop.f32.mrf.mxu0
  %v141 = vadd.f32 %v99, %v140
  %v142 = vpop.f32.mrf.mxu0
  %v143 = vadd.f32 %v99, %v142
  %144 = vdwg.mxu0
  %145 = vmatpush.bf16.msra.mxu0 0
  %146 = vmatpush.bf16.msra.mxu0 0
  %147 = vmatpush.bf16.msra.mxu0 0
  %148 = vmatpush.bf16.msra.mxu0 0
  %149 = vmatpush.bf16.msra.mxu0 0
  %150 = vmatpush.bf16.msra.mxu0 0
  %151 = vmatpush.bf16.msra.mxu0 0
  %152 = vmatpush.bf16.msra.mxu0 %v120
  %153 = vmatmul.bf16.gmra.mxu0 %v129
  %v154 = vpop.f32.mrf.mxu0
  %v155 = vadd.f32 %v100, %v154
  %v156 = vpop.f32.mrf.mxu0
  %v157 = vadd.f32 %v100, %v156
  %158 = vdwg.mxu0
  %159 = vmatpush.bf16.msra.mxu0 0
  %160 = vmatpush.bf16.msra.mxu0 0
  %161 = vmatpush.bf16.msra.mxu0 0
  %162 = vmatpush.bf16.msra.mxu0 0
  %163 = vmatpush.bf16.msra.mxu0 0
  %164 = vmatpush.bf16.msra.mxu0 0
  %165 = vmatpush.bf16.msra.mxu0 0
  %166 = vmatpush.bf16.msra.mxu0 %v121
  %167 = vmatmul.bf16.gmra.mxu0 %v129
  %v168 = vpop.f32.mrf.mxu0
  %v169 = vadd.f32 %v101, %v168
  %v170 = vpop.f32.mrf.mxu0
  %v171 = vadd.f32 %v101, %v170
  %172 = vdwg.mxu0
  %173 = vmatpush.bf16.msra.mxu0 0
  %174 = vmatpush.bf16.msra.mxu0 0
  %175 = vmatpush.bf16.msra.mxu0 0
  %176 = vmatpush.bf16.msra.mxu0 0
  %177 = vmatpush.bf16.msra.mxu0 0
  %178 = vmatpush.bf16.msra.mxu0 0
  %179 = vmatpush.bf16.msra.mxu0 0
  %180 = vmatpush.bf16.msra.mxu0 %v122
  %181 = vmatmul.bf16.gmra.mxu0 %v129
  %v182 = vpop.f32.mrf.mxu0
  %v183 = vadd.f32 %v102, %v182
  %v184 = vpop.f32.mrf.mxu0
  %v185 = vadd.f32 %v102, %v184
  %186 = vdwg.mxu0
  %v219 = vunpack.c.l.b16 %v60
  %v220 = vunpack.c.h.b16 %v60
  %v221 = vunpack.c.l.b16 %v61
  %v222 = vunpack.c.h.b16 %v61
  %v223 = vunpack.c.l.b16 %v62
  %v224 = vunpack.c.h.b16 %v62
  %v225 = vunpack.c.l.b16 %v63
  %v226 = vunpack.c.h.b16 %v63
  %v227 = vunpack.c.l.b16 %v64
  %v228 = vunpack.c.h.b16 %v64
  %v229 = vunpack.c.l.b16 %v65
  %v230 = vunpack.c.h.b16 %v65
  %v231 = vunpack.c.l.b16 %v66
  %v232 = vunpack.c.h.b16 %v66
  %v233 = vunpack.c.l.b16 %v67
  %v234 = vunpack.c.h.b16 %v67
  %v235 = vunpack.c.l.b16 %v68
  %v236 = vunpack.c.h.b16 %v68
  %v237 = vunpack.c.l.b16 %v69
  %v238 = vunpack.c.h.b16 %v69
  %v239 = vunpack.c.l.b16 %v70
  %v240 = vunpack.c.h.b16 %v70
  %v241 = vunpack.c.l.b16 %v71
  %v242 = vunpack.c.h.b16 %v71
  %v243 = vunpack.c.l.b16 %v72
  %v244 = vunpack.c.h.b16 %v72
  %v245 = vunpack.c.l.b16 %v73
  %v246 = vunpack.c.h.b16 %v73
  %v247 = vunpack.c.l.b16 %v74
  %v248 = vunpack.c.h.b16 %v74
  %v249 = vunpack.c.l.b16 %v75
  %v250 = vunpack.c.h.b16 %v75
  %v251 = vunpack.c.l.b16 %v76
  %v252 = vunpack.c.h.b16 %v76
  %v253 = vunpack.c.l.b16 %v77
  %v254 = vunpack.c.h.b16 %v77
  %v255 = vunpack.c.l.b16 %v78
  %v256 = vunpack.c.h.b16 %v78
  %v257 = vunpack.c.l.b16 %v79
  %v258 = vunpack.c.h.b16 %v79
  %v259 = vunpack.c.l.b16 %v80
  %v260 = vunpack.c.h.b16 %v80
  %v261 = vunpack.c.l.b16 %v81
  %v262 = vunpack.c.h.b16 %v81
  %v263 = vunpack.c.l.b16 %v82
  %v264 = vunpack.c.h.b16 %v82
  %v265 = vunpack.c.l.b16 %v83
  %v266 = vunpack.c.h.b16 %v83
  %v267 = vunpack.c.l.b16 %v84
  %v268 = vunpack.c.h.b16 %v84
  %v269 = vunpack.c.l.b16 %v85
  %v270 = vunpack.c.h.b16 %v85
  %v271 = vunpack.c.l.b16 %v86
  %v272 = vunpack.c.h.b16 %v86
  %v273 = vunpack.c.l.b16 %v87
  %v274 = vunpack.c.h.b16 %v87
  %v275 = vunpack.c.l.b16 %v88
  %v276 = vunpack.c.h.b16 %v88
  %v277 = vunpack.c.l.b16 %v89
  %v278 = vunpack.c.h.b16 %v89
  %v279 = vunpack.c.l.b16 %v90
  %v280 = vunpack.c.h.b16 %v90
  %v281 = vunpack.c.l.b16 %v91
  %v282 = vunpack.c.h.b16 %v91
  %v283 = vpack.c.b16 %v223, %v219
  %v284 = vpack.c.b16 %v224, %v220
  %v285 = vpack.c.b16 %v225, %v221
  %v286 = vpack.c.b16 %v226, %v222
  %v287 = vpack.c.b16 %v231, %v227
  %v288 = vpack.c.b16 %v232, %v228
  %v289 = vpack.c.b16 %v233, %v229
  %v290 = vpack.c.b16 %v234, %v230
  %v291 = vpack.c.b16 %v239, %v235
  %v292 = vpack.c.b16 %v240, %v236
  %v293 = vpack.c.b16 %v241, %v237
  %v294 = vpack.c.b16 %v242, %v238
  %v295 = vpack.c.b16 %v247, %v243
  %v296 = vpack.c.b16 %v248, %v244
  %v297 = vpack.c.b16 %v249, %v245
  %v298 = vpack.c.b16 %v250, %v246
  %v299 = vpack.c.b16 %v255, %v251
  %v300 = vpack.c.b16 %v256, %v252
  %v301 = vpack.c.b16 %v257, %v253
  %v302 = vpack.c.b16 %v258, %v254
  %v303 = vpack.c.b16 %v263, %v259
  %v304 = vpack.c.b16 %v264, %v260
  %v305 = vpack.c.b16 %v265, %v261
  %v306 = vpack.c.b16 %v266, %v262
  %v307 = vpack.c.b16 %v271, %v267
  %v308 = vpack.c.b16 %v272, %v268
  %v309 = vpack.c.b16 %v273, %v269
  %v310 = vpack.c.b16 %v274, %v270
  %v311 = vpack.c.b16 %v279, %v275
  %v312 = vpack.c.b16 %v280, %v276
  %v313 = vpack.c.b16 %v281, %v277
  %v314 = vpack.c.b16 %v282, %v278
  %347 = vmatpush.bf16.msra.mxu0 %v311
  %348 = vmatpush.bf16.msra.mxu0 %v307
  %349 = vmatpush.bf16.msra.mxu0 %v303
  %350 = vmatpush.bf16.msra.mxu0 %v299
  %351 = vmatpush.bf16.msra.mxu0 %v295
  %352 = vmatpush.bf16.msra.mxu0 %v291
  %353 = vmatpush.bf16.msra.mxu0 %v287
  %354 = vmatpush.bf16.msra.mxu0 %v283
  %355 = vmatmul.bf16.gmra.mxu0 0
  %v356 = vpop.f32.mrf.mxu0
  %v357 = vadd.f32 0.0, %v356
  %v358 = vpop.f32.mrf.mxu0
  %359 = vdwg.mxu0
  %360 = vmatpush.bf16.msra.mxu0 %v312
  %361 = vmatpush.bf16.msra.mxu0 %v308
  %362 = vmatpush.bf16.msra.mxu0 %v304
  %363 = vmatpush.bf16.msra.mxu0 %v300
  %364 = vmatpush.bf16.msra.mxu0 %v296
  %365 = vmatpush.bf16.msra.mxu0 %v292
  %366 = vmatpush.bf16.msra.mxu0 %v288
  %367 = vmatpush.bf16.msra.mxu0 %v284
  %368 = vmatmul.bf16.gmra.mxu0 0
  %v369 = vpop.f32.mrf.mxu0
  %v370 = vadd.f32 0.0, %v369
  %v371 = vpop.f32.mrf.mxu0
  %372 = vdwg.mxu0
  %373 = vmatpush.bf16.msra.mxu0 %v313
  %374 = vmatpush.bf16.msra.mxu0 %v309
  %375 = vmatpush.bf16.msra.mxu0 %v305
  %376 = vmatpush.bf16.msra.mxu0 %v301
  %377 = vmatpush.bf16.msra.mxu0 %v297
  %378 = vmatpush.bf16.msra.mxu0 %v293
  %379 = vmatpush.bf16.msra.mxu0 %v289
  %380 = vmatpush.bf16.msra.mxu0 %v285
  %381 = vmatmul.bf16.gmra.mxu0 0
  %v382 = vpop.f32.mrf.mxu0
  %v383 = vadd.f32 0.0, %v382
  %v384 = vpop.f32.mrf.mxu0
  %385 = vdwg.mxu0
  %386 = vmatpush.bf16.msra.mxu0 %v314
  %387 = vmatpush.bf16.msra.mxu0 %v310
  %388 = vmatpush.bf16.msra.mxu0 %v306
  %389 = vmatpush.bf16.msra.mxu0 %v302
  %390 = vmatpush.bf16.msra.mxu0 %v298
  %391 = vmatpush.bf16.msra.mxu0 %v294
  %392 = vmatpush.bf16.msra.mxu0 %v290
  %393 = vmatpush.bf16.msra.mxu0 %v286
  %394 = vmatmul.bf16.gmra.mxu0 0
  %v395 = vpop.f32.mrf.mxu0
  %v396 = vadd.f32 0.0, %v395
  %v397 = vpop.f32.mrf.mxu0
  %398 = vdwg.mxu0
  %v399 = vadd.f32 %v141, %v357
  %v400 = vadd.f32 %v155, %v370
  %v401 = vadd.f32 %v169, %v383
  %v402 = vadd.f32 %v183, %v396
  %v403 = vxor.u32 %v399, 2147483648
  %v404 = vmul.f32 %v403, 1.442695
  %v405 = vpow.pop %v404
  %v406 = vadd.f32 %v405, 1.0
  %v407 = vrcp.pop %v406
  %v408 = vmul.f32 %v406, %v407
  %v409 = vsub.f32 1.0, %v408
  %v410 = vmul.f32 %v407, %v409
  %v411 = vadd.f32 %v407, %v410
  %vm412 = vweird.f32 %v406
  %vm413 = vweird.f32 %v407
  %vm414 = vmor %vm412, %vm413
  %v415 = vsel %vm414, %v407, %v411
  %v416 = vand.u32 2147483647, %v406
  %vm417 = vcmp.eq.f32.partialorder %v416, 8.507059e+37
  %v418 = vand.u32 %v406, 2147483648
  %v419 = vor.u32 1.1754944e-38, %v418
  %v420 = vsel %vm417, %v419, %v415
  %v421 = vmul.f32 1.0, %v420
  %v422 = vxor.u32 %v400, 2147483648
  %v423 = vmul.f32 %v422, 1.442695
  %v424 = vpow.pop %v423
  %v425 = vadd.f32 %v424, 1.0
  %v426 = vrcp.pop %v425
  %v427 = vmul.f32 %v425, %v426
  %v428 = vsub.f32 1.0, %v427
  %v429 = vmul.f32 %v426, %v428
  %v430 = vadd.f32 %v426, %v429
  %vm431 = vweird.f32 %v425
  %vm432 = vweird.f32 %v426
  %vm433 = vmor %vm431, %vm432
  %v434 = vsel %vm433, %v426, %v430
  %v435 = vand.u32 2147483647, %v425
  %vm436 = vcmp.eq.f32.partialorder %v435, 8.507059e+37
  %v437 = vand.u32 %v425, 2147483648
  %v438 = vor.u32 1.1754944e-38, %v437
  %v439 = vsel %vm436, %v438, %v434
  %v440 = vmul.f32 1.0, %v439
  %v441 = vtanh.pop %v401
  %v442 = vxor.u32 %v402, 2147483648
  %v443 = vmul.f32 %v442, 1.442695
  %v444 = vpow.pop %v443
  %v445 = vadd.f32 %v444, 1.0
  %v446 = vrcp.pop %v445
  %v447 = vmul.f32 %v445, %v446
  %v448 = vsub.f32 1.0, %v447
  %v449 = vmul.f32 %v446, %v448
  %v450 = vadd.f32 %v446, %v449
  %vm451 = vweird.f32 %v445
  %vm452 = vweird.f32 %v446
  %vm453 = vmor %vm451, %vm452
  %v454 = vsel %vm453, %v446, %v450
  %v455 = vand.u32 2147483647, %v445
  %vm456 = vcmp.eq.f32.partialorder %v455, 8.507059e+37
  %v457 = vand.u32 %v445, 2147483648
  %v458 = vor.u32 1.1754944e-38, %v457
  %v459 = vsel %vm456, %v458, %v454
  %v460 = vmul.f32 1.0, %v459
  %v461 = vmul.f32 %v440, 0.0
  %v462 = vmul.f32 %v421, %v441
  %v463 = vadd.f32 %v461, %v462
  %v464 = vtanh.pop %v463
  %v465 = vmul.f32 %v460, %v464
  %v466 = vpack.c.bf16 %v465, %v465
  %467 = vmatpush.bf16.msra.mxu0 %v311
  %468 = vmatpush.bf16.msra.mxu0 %v307
  %469 = vmatpush.bf16.msra.mxu0 %v303
  %470 = vmatpush.bf16.msra.mxu0 %v299
  %471 = vmatpush.bf16.msra.mxu0 %v295
  %472 = vmatpush.bf16.msra.mxu0 %v291
  %473 = vmatpush.bf16.msra.mxu0 %v287
  %474 = vmatpush.bf16.msra.mxu0 %v283
  %475 = vmatmul.bf16.gmra.mxu0 %v466
  %v476 = vpop.f32.mrf.mxu0
  %v477 = vadd.f32 0.0, %v476
  %v478 = vpop.f32.mrf.mxu0
  %479 = vdwg.mxu0
  %480 = vmatpush.bf16.msra.mxu0 %v312
  %481 = vmatpush.bf16.msra.mxu0 %v308
  %482 = vmatpush.bf16.msra.mxu0 %v304
  %483 = vmatpush.bf16.msra.mxu0 %v300
  %484 = vmatpush.bf16.msra.mxu0 %v296
  %485 = vmatpush.bf16.msra.mxu0 %v292
  %486 = vmatpush.bf16.msra.mxu0 %v288
  %487 = vmatpush.bf16.msra.mxu0 %v284
  %488 = vmatmul.bf16.gmra.mxu0 %v466
  %v489 = vpop.f32.mrf.mxu0
  %v490 = vadd.f32 0.0, %v489
  %v491 = vpop.f32.mrf.mxu0
  %492 = vdwg.mxu0
  %493 = vmatpush.bf16.msra.mxu0 %v313
  %494 = vmatpush.bf16.msra.mxu0 %v309
  %495 = vmatpush.bf16.msra.mxu0 %v305
  %496 = vmatpush.bf16.msra.mxu0 %v301
  %497 = vmatpush.bf16.msra.mxu0 %v297
  %498 = vmatpush.bf16.msra.mxu0 %v293
  %499 = vmatpush.bf16.msra.mxu0 %v289
  %500 = vmatpush.bf16.msra.mxu0 %v285
  %501 = vmatmul.bf16.gmra.mxu0 %v466
  %v502 = vpop.f32.mrf.mxu0
  %v503 = vadd.f32 0.0, %v502
  %v504 = vpop.f32.mrf.mxu0
  %505 = vdwg.mxu0
  %506 = vmatpush.bf16.msra.mxu0 %v314
  %507 = vmatpush.bf16.msra.mxu0 %v310
  %508 = vmatpush.bf16.msra.mxu0 %v306
  %509 = vmatpush.bf16.msra.mxu0 %v302
  %510 = vmatpush.bf16.msra.mxu0 %v298
  %511 = vmatpush.bf16.msra.mxu0 %v294
  %512 = vmatpush.bf16.msra.mxu0 %v290
  %513 = vmatpush.bf16.msra.mxu0 %v286
  %514 = vmatmul.bf16.gmra.mxu0 %v466
  %v515 = vpop.f32.mrf.mxu0
  %v516 = vadd.f32 0.0, %v515
  %v517 = vpop.f32.mrf.mxu0
  %518 = vdwg.mxu0
  %v523 = vrot.slane %v477, 6
  %v524 = vrot.slane %v490, 6
  %v525 = vrot.slane %v503, 6
  %v526 = vrot.slane %v516, 6
  %v531 = vadd.f32 %v141, %v523
  %v532 = vadd.f32 %v155, %v524
  %v533 = vadd.f32 %v169, %v525
  %v534 = vadd.f32 %v183, %v526
  %v535 = vxor.u32 %v531, 2147483648
  %v536 = vmul.f32 %v535, 1.442695
  %v537 = vpow.pop %v536
  %v538 = vadd.f32 %v537, 1.0
  %v539 = vrcp.pop %v538
  %v540 = vmul.f32 %v538, %v539
  %v541 = vsub.f32 1.0, %v540
  %v542 = vmul.f32 %v539, %v541
  %v543 = vadd.f32 %v539, %v542
  %vm544 = vweird.f32 %v538
  %vm545 = vweird.f32 %v539
  %vm546 = vmor %vm544, %vm545
  %v547 = vsel %vm546, %v539, %v543
  %v548 = vand.u32 2147483647, %v538
  %vm549 = vcmp.eq.f32.partialorder %v548, 8.507059e+37
  %v550 = vand.u32 %v538, 2147483648
  %v551 = vor.u32 1.1754944e-38, %v550
  %v552 = vsel %vm549, %v551, %v547
  %v553 = vmul.f32 1.0, %v552
  %v554 = vxor.u32 %v532, 2147483648
  %v555 = vmul.f32 %v554, 1.442695
  %v556 = vpow.pop %v555
  %v557 = vadd.f32 %v556, 1.0
  %v558 = vrcp.pop %v557
  %v559 = vmul.f32 %v557, %v558
  %v560 = vsub.f32 1.0, %v559
  %v561 = vmul.f32 %v558, %v560
  %v562 = vadd.f32 %v558, %v561
  %vm563 = vweird.f32 %v557
  %vm564 = vweird.f32 %v558
  %vm565 = vmor %vm563, %vm564
  %v566 = vsel %vm565, %v558, %v562
  %v567 = vand.u32 2147483647, %v557
  %vm568 = vcmp.eq.f32.partialorder %v567, 8.507059e+37
  %v569 = vand.u32 %v557, 2147483648
  %v570 = vor.u32 1.1754944e-38, %v569
  %v571 = vsel %vm568, %v570, %v566
  %v572 = vmul.f32 1.0, %v571
  %v573 = vtanh.pop %v533
  %v574 = vxor.u32 %v534, 2147483648
  %v575 = vmul.f32 %v574, 1.442695
  %v576 = vpow.pop %v575
  %v577 = vadd.f32 %v576, 1.0
  %v578 = vrcp.pop %v577
  %v579 = vmul.f32 %v577, %v578
  %v580 = vsub.f32 1.0, %v579
  %v581 = vmul.f32 %v578, %v580
  %v582 = vadd.f32 %v578, %v581
  %vm583 = vweird.f32 %v577
  %vm584 = vweird.f32 %v578
  %vm585 = vmor %vm583, %vm584
  %v586 = vsel %vm585, %v578, %v582
  %v587 = vand.u32 2147483647, %v577
  %vm588 = vcmp.eq.f32.partialorder %v587, 8.507059e+37
  %v589 = vand.u32 %v577, 2147483648
  %v590 = vor.u32 1.1754944e-38, %v589
  %v591 = vsel %vm588, %v590, %v586
  %v592 = vmul.f32 1.0, %v591
  %v594 = vrot.slane %v463, 6
  %v596 = vmul.f32 %v572, %v594
  %v597 = vmul.f32 %v553, %v573
  %v598 = vadd.f32 %v596, %v597
  %v599 = vtanh.pop %v598
  %v600 = vmul.f32 %v592, %v599
  %v601 = vpack.c.bf16 %v600, %v600
  %v603 = vrot.slane %v601, 1
  %605 = vmatpush.bf16.msra.mxu0 %v311
  %606 = vmatpush.bf16.msra.mxu0 %v307
  %607 = vmatpush.bf16.msra.mxu0 %v303
  %608 = vmatpush.bf16.msra.mxu0 %v299
  %609 = vmatpush.bf16.msra.mxu0 %v295
  %610 = vmatpush.bf16.msra.mxu0 %v291
  %611 = vmatpush.bf16.msra.mxu0 %v287
  %612 = vmatpush.bf16.msra.mxu0 %v283
  %613 = vmatmul.bf16.gmra.mxu0 %v603
  %v614 = vpop.f32.mrf.mxu0
  %v615 = vadd.f32 0.0, %v614
  %v616 = vpop.f32.mrf.mxu0
  %617 = vdwg.mxu0
  %618 = vmatpush.bf16.msra.mxu0 %v312
  %619 = vmatpush.bf16.msra.mxu0 %v308
  %620 = vmatpush.bf16.msra.mxu0 %v304
  %621 = vmatpush.bf16.msra.mxu0 %v300
  %622 = vmatpush.bf16.msra.mxu0 %v296
  %623 = vmatpush.bf16.msra.mxu0 %v292
  %624 = vmatpush.bf16.msra.mxu0 %v288
  %625 = vmatpush.bf16.msra.mxu0 %v284
  %626 = vmatmul.bf16.gmra.mxu0 %v603
  %v627 = vpop.f32.mrf.mxu0
  %v628 = vadd.f32 0.0, %v627
  %v629 = vpop.f32.mrf.mxu0
  %630 = vdwg.mxu0
  %631 = vmatpush.bf16.msra.mxu0 %v313
  %632 = vmatpush.bf16.msra.mxu0 %v309
  %633 = vmatpush.bf16.msra.mxu0 %v305
  %634 = vmatpush.bf16.msra.mxu0 %v301
  %635 = vmatpush.bf16.msra.mxu0 %v297
  %636 = vmatpush.bf16.msra.mxu0 %v293
  %637 = vmatpush.bf16.msra.mxu0 %v289
  %638 = vmatpush.bf16.msra.mxu0 %v285
  %639 = vmatmul.bf16.gmra.mxu0 %v603
  %v640 = vpop.f32.mrf.mxu0
  %v641 = vadd.f32 0.0, %v640
  %v642 = vpop.f32.mrf.mxu0
  %643 = vdwg.mxu0
  %644 = vmatpush.bf16.msra.mxu0 %v314
  %645 = vmatpush.bf16.msra.mxu0 %v310
  %646 = vmatpush.bf16.msra.mxu0 %v306
  %647 = vmatpush.bf16.msra.mxu0 %v302
  %648 = vmatpush.bf16.msra.mxu0 %v298
  %649 = vmatpush.bf16.msra.mxu0 %v294
  %650 = vmatpush.bf16.msra.mxu0 %v290
  %651 = vmatpush.bf16.msra.mxu0 %v286
  %652 = vmatmul.bf16.gmra.mxu0 %v603
  %v653 = vpop.f32.mrf.mxu0
  %v654 = vadd.f32 0.0, %v653
  %v655 = vpop.f32.mrf.mxu0
  %656 = vdwg.mxu0
  %v661 = vrot.slane %v615, 4
  %v662 = vrot.slane %v628, 4
  %v663 = vrot.slane %v641, 4
  %v664 = vrot.slane %v654, 4
  %v669 = vadd.f32 %v141, %v661
  %v670 = vadd.f32 %v155, %v662
  %v671 = vadd.f32 %v169, %v663
  %v672 = vadd.f32 %v183, %v664
  %v673 = vxor.u32 %v669, 2147483648
  %v674 = vmul.f32 %v673, 1.442695
  %v675 = vpow.pop %v674
  %v676 = vadd.f32 %v675, 1.0
  %v677 = vrcp.pop %v676
  %v678 = vmul.f32 %v676, %v677
  %v679 = vsub.f32 1.0, %v678
  %v680 = vmul.f32 %v677, %v679
  %v681 = vadd.f32 %v677, %v680
  %vm682 = vweird.f32 %v676
  %vm683 = vweird.f32 %v677
  %vm684 = vmor %vm682, %vm683
  %v685 = vsel %vm684, %v677, %v681
  %v686 = vand.u32 2147483647, %v676
  %vm687 = vcmp.eq.f32.partialorder %v686, 8.507059e+37
  %v688 = vand.u32 %v676, 2147483648
  %v689 = vor.u32 1.1754944e-38, %v688
  %v690 = vsel %vm687, %v689, %v685
  %v691 = vmul.f32 1.0, %v690
  %v692 = vxor.u32 %v670, 2147483648
  %v693 = vmul.f32 %v692, 1.442695
  %v694 = vpow.pop %v693
  %v695 = vadd.f32 %v694, 1.0
  %v696 = vrcp.pop %v695
  %v697 = vmul.f32 %v695, %v696
  %v698 = vsub.f32 1.0, %v697
  %v699 = vmul.f32 %v696, %v698
  %v700 = vadd.f32 %v696, %v699
  %vm701 = vweird.f32 %v695
  %vm702 = vweird.f32 %v696
  %vm703 = vmor %vm701, %vm702
  %v704 = vsel %vm703, %v696, %v700
  %v705 = vand.u32 2147483647, %v695
  %vm706 = vcmp.eq.f32.partialorder %v705, 8.507059e+37
  %v707 = vand.u32 %v695, 2147483648
  %v708 = vor.u32 1.1754944e-38, %v707
  %v709 = vsel %vm706, %v708, %v704
  %v710 = vmul.f32 1.0, %v709
  %v711 = vtanh.pop %v671
  %v712 = vxor.u32 %v672, 2147483648
  %v713 = vmul.f32 %v712, 1.442695
  %v714 = vpow.pop %v713
  %v715 = vadd.f32 %v714, 1.0
  %v716 = vrcp.pop %v715
  %v717 = vmul.f32 %v715, %v716
  %v718 = vsub.f32 1.0, %v717
  %v719 = vmul.f32 %v716, %v718
  %v720 = vadd.f32 %v716, %v719
  %vm721 = vweird.f32 %v715
  %vm722 = vweird.f32 %v716
  %vm723 = vmor %vm721, %vm722
  %v724 = vsel %vm723, %v716, %v720
  %v725 = vand.u32 2147483647, %v715
  %vm726 = vcmp.eq.f32.partialorder %v725, 8.507059e+37
  %v727 = vand.u32 %v715, 2147483648
  %v728 = vor.u32 1.1754944e-38, %v727
  %v729 = vsel %vm726, %v728, %v724
  %v730 = vmul.f32 1.0, %v729
  %v732 = vrot.slane %v598, 6
  %v734 = vmul.f32 %v710, %v732
  %v735 = vmul.f32 %v691, %v711
  %v736 = vadd.f32 %v734, %v735
  %v737 = vtanh.pop %v736
  %v738 = vmul.f32 %v730, %v737
  %v739 = vpack.c.bf16 %v738, %v738
  %v741 = vrot.slane %v739, 2
  %743 = vmatpush.bf16.msra.mxu0 %v311
  %744 = vmatpush.bf16.msra.mxu0 %v307
  %745 = vmatpush.bf16.msra.mxu0 %v303
  %746 = vmatpush.bf16.msra.mxu0 %v299
  %747 = vmatpush.bf16.msra.mxu0 %v295
  %748 = vmatpush.bf16.msra.mxu0 %v291
  %749 = vmatpush.bf16.msra.mxu0 %v287
  %750 = vmatpush.bf16.msra.mxu0 %v283
  %751 = vmatmul.bf16.gmra.mxu0 %v741
  %v752 = vpop.f32.mrf.mxu0
  %v753 = vadd.f32 0.0, %v752
  %v754 = vpop.f32.mrf.mxu0
  %755 = vdwg.mxu0
  %756 = vmatpush.bf16.msra.mxu0 %v312
  %757 = vmatpush.bf16.msra.mxu0 %v308
  %758 = vmatpush.bf16.msra.mxu0 %v304
  %759 = vmatpush.bf16.msra.mxu0 %v300
  %760 = vmatpush.bf16.msra.mxu0 %v296
  %761 = vmatpush.bf16.msra.mxu0 %v292
  %762 = vmatpush.bf16.msra.mxu0 %v288
  %763 = vmatpush.bf16.msra.mxu0 %v284
  %764 = vmatmul.bf16.gmra.mxu0 %v741
  %v765 = vpop.f32.mrf.mxu0
  %v766 = vadd.f32 0.0, %v765
  %v767 = vpop.f32.mrf.mxu0
  %768 = vdwg.mxu0
  %769 = vmatpush.bf16.msra.mxu0 %v313
  %770 = vmatpush.bf16.msra.mxu0 %v309
  %771 = vmatpush.bf16.msra.mxu0 %v305
  %772 = vmatpush.bf16.msra.mxu0 %v301
  %773 = vmatpush.bf16.msra.mxu0 %v297
  %774 = vmatpush.bf16.msra.mxu0 %v293
  %775 = vmatpush.bf16.msra.mxu0 %v289
  %776 = vmatpush.bf16.msra.mxu0 %v285
  %777 = vmatmul.bf16.gmra.mxu0 %v741
  %v778 = vpop.f32.mrf.mxu0
  %v779 = vadd.f32 0.0, %v778
  %v780 = vpop.f32.mrf.mxu0
  %781 = vdwg.mxu0
  %782 = vmatpush.bf16.msra.mxu0 %v314
  %783 = vmatpush.bf16.msra.mxu0 %v310
  %784 = vmatpush.bf16.msra.mxu0 %v306
  %785 = vmatpush.bf16.msra.mxu0 %v302
  %786 = vmatpush.bf16.msra.mxu0 %v298
  %787 = vmatpush.bf16.msra.mxu0 %v294
  %788 = vmatpush.bf16.msra.mxu0 %v290
  %789 = vmatpush.bf16.msra.mxu0 %v286
  %790 = vmatmul.bf16.gmra.mxu0 %v741
  %v791 = vpop.f32.mrf.mxu0
  %v792 = vadd.f32 0.0, %v791
  %v793 = vpop.f32.mrf.mxu0
  %794 = vdwg.mxu0
  %v799 = vrot.slane %v753, 2
  %v800 = vrot.slane %v766, 2
  %v801 = vrot.slane %v779, 2
  %v802 = vrot.slane %v792, 2
  %v807 = vadd.f32 %v141, %v799
  %v808 = vadd.f32 %v155, %v800
  %v809 = vadd.f32 %v169, %v801
  %v810 = vadd.f32 %v183, %v802
  %v811 = vxor.u32 %v807, 2147483648
  %v812 = vmul.f32 %v811, 1.442695
  %v813 = vpow.pop %v812
  %v814 = vadd.f32 %v813, 1.0
  %v815 = vrcp.pop %v814
  %v816 = vmul.f32 %v814, %v815
  %v817 = vsub.f32 1.0, %v816
  %v818 = vmul.f32 %v815, %v817
  %v819 = vadd.f32 %v815, %v818
  %vm820 = vweird.f32 %v814
  %vm821 = vweird.f32 %v815
  %vm822 = vmor %vm820, %vm821
  %v823 = vsel %vm822, %v815, %v819
  %v824 = vand.u32 2147483647, %v814
  %vm825 = vcmp.eq.f32.partialorder %v824, 8.507059e+37
  %v826 = vand.u32 %v814, 2147483648
  %v827 = vor.u32 1.1754944e-38, %v826
  %v828 = vsel %vm825, %v827, %v823
  %v829 = vmul.f32 1.0, %v828
  %v830 = vxor.u32 %v808, 2147483648
  %v831 = vmul.f32 %v830, 1.442695
  %v832 = vpow.pop %v831
  %v833 = vadd.f32 %v832, 1.0
  %v834 = vrcp.pop %v833
  %v835 = vmul.f32 %v833, %v834
  %v836 = vsub.f32 1.0, %v835
  %v837 = vmul.f32 %v834, %v836
  %v838 = vadd.f32 %v834, %v837
  %vm839 = vweird.f32 %v833
  %vm840 = vweird.f32 %v834
  %vm841 = vmor %vm839, %vm840
  %v842 = vsel %vm841, %v834, %v838
  %v843 = vand.u32 2147483647, %v833
  %vm844 = vcmp.eq.f32.partialorder %v843, 8.507059e+37
  %v845 = vand.u32 %v833, 2147483648
  %v846 = vor.u32 1.1754944e-38, %v845
  %v847 = vsel %vm844, %v846, %v842
  %v848 = vmul.f32 1.0, %v847
  %v849 = vtanh.pop %v809
  %v850 = vxor.u32 %v810, 2147483648
  %v851 = vmul.f32 %v850, 1.442695
  %v852 = vpow.pop %v851
  %v853 = vadd.f32 %v852, 1.0
  %v854 = vrcp.pop %v853
  %v855 = vmul.f32 %v853, %v854
  %v856 = vsub.f32 1.0, %v855
  %v857 = vmul.f32 %v854, %v856
  %v858 = vadd.f32 %v854, %v857
  %vm859 = vweird.f32 %v853
  %vm860 = vweird.f32 %v854
  %vm861 = vmor %vm859, %vm860
  %v862 = vsel %vm861, %v854, %v858
  %v863 = vand.u32 2147483647, %v853
  %vm864 = vcmp.eq.f32.partialorder %v863, 8.507059e+37
  %v865 = vand.u32 %v853, 2147483648
  %v866 = vor.u32 1.1754944e-38, %v865
  %v867 = vsel %vm864, %v866, %v862
  %v868 = vmul.f32 1.0, %v867
  %v870 = vrot.slane %v736, 6
  %v872 = vmul.f32 %v848, %v870
  %v873 = vmul.f32 %v829, %v849
  %v874 = vadd.f32 %v872, %v873
  %v875 = vtanh.pop %v874
  %v876 = vmul.f32 %v868, %v875
  %v877 = vpack.c.bf16 %v876, %v876
  %v879 = vrot.slane %v877, 3
  %881 = vmatpush.bf16.msra.mxu0 %v311
  %882 = vmatpush.bf16.msra.mxu0 %v307
  %883 = vmatpush.bf16.msra.mxu0 %v303
  %884 = vmatpush.bf16.msra.mxu0 %v299
  %885 = vmatpush.bf16.msra.mxu0 %v295
  %886 = vmatpush.bf16.msra.mxu0 %v291
  %887 = vmatpush.bf16.msra.mxu0 %v287
  %888 = vmatpush.bf16.msra.mxu0 %v283
  %889 = vmatmul.bf16.gmra.mxu0 %v879
  %v890 = vpop.f32.mrf.mxu0
  %v891 = vadd.f32 0.0, %v890
  %v892 = vpop.f32.mrf.mxu0
  %893 = vdwg.mxu0
  %894 = vmatpush.bf16.msra.mxu0 %v312
  %895 = vmatpush.bf16.msra.mxu0 %v308
  %896 = vmatpush.bf16.msra.mxu0 %v304
  %897 = vmatpush.bf16.msra.mxu0 %v300
  %898 = vmatpush.bf16.msra.mxu0 %v296
  %899 = vmatpush.bf16.msra.mxu0 %v292
  %900 = vmatpush.bf16.msra.mxu0 %v288
  %901 = vmatpush.bf16.msra.mxu0 %v284
  %902 = vmatmul.bf16.gmra.mxu0 %v879
  %v903 = vpop.f32.mrf.mxu0
  %v904 = vadd.f32 0.0, %v903
  %v905 = vpop.f32.mrf.mxu0
  %906 = vdwg.mxu0
  %907 = vmatpush.bf16.msra.mxu0 %v313
  %908 = vmatpush.bf16.msra.mxu0 %v309
  %909 = vmatpush.bf16.msra.mxu0 %v305
  %910 = vmatpush.bf16.msra.mxu0 %v301
  %911 = vmatpush.bf16.msra.mxu0 %v297
  %912 = vmatpush.bf16.msra.mxu0 %v293
  %913 = vmatpush.bf16.msra.mxu0 %v289
  %914 = vmatpush.bf16.msra.mxu0 %v285
  %915 = vmatmul.bf16.gmra.mxu0 %v879
  %v916 = vpop.f32.mrf.mxu0
  %v917 = vadd.f32 0.0, %v916
  %v918 = vpop.f32.mrf.mxu0
  %919 = vdwg.mxu0
  %920 = vmatpush.bf16.msra.mxu0 %v314
  %921 = vmatpush.bf16.msra.mxu0 %v310
  %922 = vmatpush.bf16.msra.mxu0 %v306
  %923 = vmatpush.bf16.msra.mxu0 %v302
  %924 = vmatpush.bf16.msra.mxu0 %v298
  %925 = vmatpush.bf16.msra.mxu0 %v294
  %926 = vmatpush.bf16.msra.mxu0 %v290
  %927 = vmatpush.bf16.msra.mxu0 %v286
  %928 = vmatmul.bf16.gmra.mxu0 %v879
  %v929 = vpop.f32.mrf.mxu0
  %v930 = vadd.f32 0.0, %v929
  %v931 = vpop.f32.mrf.mxu0
  %932 = vdwg.mxu0
  %v933 = vadd.f32 %v143, %v891
  %v934 = vadd.f32 %v157, %v904
  %v935 = vadd.f32 %v171, %v917
  %v936 = vadd.f32 %v185, %v930
  %v937 = vxor.u32 %v933, 2147483648
  %v938 = vmul.f32 %v937, 1.442695
  %v939 = vpow.pop %v938
  %v940 = vadd.f32 %v939, 1.0
  %v941 = vrcp.pop %v940
  %v942 = vmul.f32 %v940, %v941
  %v943 = vsub.f32 1.0, %v942
  %v944 = vmul.f32 %v941, %v943
  %v945 = vadd.f32 %v941, %v944
  %vm946 = vweird.f32 %v940
  %vm947 = vweird.f32 %v941
  %vm948 = vmor %vm946, %vm947
  %v949 = vsel %vm948, %v941, %v945
  %v950 = vand.u32 2147483647, %v940
  %vm951 = vcmp.eq.f32.partialorder %v950, 8.507059e+37
  %v952 = vand.u32 %v940, 2147483648
  %v953 = vor.u32 1.1754944e-38, %v952
  %v954 = vsel %vm951, %v953, %v949
  %v955 = vmul.f32 1.0, %v954
  %v956 = vxor.u32 %v934, 2147483648
  %v957 = vmul.f32 %v956, 1.442695
  %v958 = vpow.pop %v957
  %v959 = vadd.f32 %v958, 1.0
  %v960 = vrcp.pop %v959
  %v961 = vmul.f32 %v959, %v960
  %v962 = vsub.f32 1.0, %v961
  %v963 = vmul.f32 %v960, %v962
  %v964 = vadd.f32 %v960, %v963
  %vm965 = vweird.f32 %v959
  %vm966 = vweird.f32 %v960
  %vm967 = vmor %vm965, %vm966
  %v968 = vsel %vm967, %v960, %v964
  %v969 = vand.u32 2147483647, %v959
  %vm970 = vcmp.eq.f32.partialorder %v969, 8.507059e+37
  %v971 = vand.u32 %v959, 2147483648
  %v972 = vor.u32 1.1754944e-38, %v971
  %v973 = vsel %vm970, %v972, %v968
  %v974 = vmul.f32 1.0, %v973
  %v975 = vtanh.pop %v935
  %v976 = vxor.u32 %v936, 2147483648
  %v977 = vmul.f32 %v976, 1.442695
  %v978 = vpow.pop %v977
  %v979 = vadd.f32 %v978, 1.0
  %v980 = vrcp.pop %v979
  %v981 = vmul.f32 %v979, %v980
  %v982 = vsub.f32 1.0, %v981
  %v983 = vmul.f32 %v980, %v982
  %v984 = vadd.f32 %v980, %v983
  %vm985 = vweird.f32 %v979
  %vm986 = vweird.f32 %v980
  %vm987 = vmor %vm985, %vm986
  %v988 = vsel %vm987, %v980, %v984
  %v989 = vand.u32 2147483647, %v979
  %vm990 = vcmp.eq.f32.partialorder %v989, 8.507059e+37
  %v991 = vand.u32 %v979, 2147483648
  %v992 = vor.u32 1.1754944e-38, %v991
  %v993 = vsel %vm990, %v992, %v988
  %v994 = vmul.f32 1.0, %v993
  %v996 = vrot.slane %v874, 6
  %v998 = vmul.f32 %v974, %v996
  %v999 = vmul.f32 %v955, %v975
  %v1000 = vadd.f32 %v998, %v999
  %v1001 = vtanh.pop %v1000
  %v1002 = vmul.f32 %v994, %v1001
  %v1003 = vpack.c.bf16 %v1002, %v1002
  %1004 = vmatpush.bf16.msra.mxu0 %v311
  %1005 = vmatpush.bf16.msra.mxu0 %v307
  %1006 = vmatpush.bf16.msra.mxu0 %v303
  %1007 = vmatpush.bf16.msra.mxu0 %v299
  %1008 = vmatpush.bf16.msra.mxu0 %v295
  %1009 = vmatpush.bf16.msra.mxu0 %v291
  %1010 = vmatpush.bf16.msra.mxu0 %v287
  %1011 = vmatpush.bf16.msra.mxu0 %v283
  %1012 = vmatmul.bf16.gmra.mxu0 %v1003
  %v1013 = vpop.f32.mrf.mxu0
  %v1014 = vadd.f32 0.0, %v1013
  %v1015 = vpop.f32.mrf.mxu0
  %1016 = vdwg.mxu0
  %1017 = vmatpush.bf16.msra.mxu0 %v312
  %1018 = vmatpush.bf16.msra.mxu0 %v308
  %1019 = vmatpush.bf16.msra.mxu0 %v304
  %1020 = vmatpush.bf16.msra.mxu0 %v300
  %1021 = vmatpush.bf16.msra.mxu0 %v296
  %1022 = vmatpush.bf16.msra.mxu0 %v292
  %1023 = vmatpush.bf16.msra.mxu0 %v288
  %1024 = vmatpush.bf16.msra.mxu0 %v284
  %1025 = vmatmul.bf16.gmra.mxu0 %v1003
  %v1026 = vpop.f32.mrf.mxu0
  %v1027 = vadd.f32 0.0, %v1026
  %v1028 = vpop.f32.mrf.mxu0
  %1029 = vdwg.mxu0
  %1030 = vmatpush.bf16.msra.mxu0 %v313
  %1031 = vmatpush.bf16.msra.mxu0 %v309
  %1032 = vmatpush.bf16.msra.mxu0 %v305
  %1033 = vmatpush.bf16.msra.mxu0 %v301
  %1034 = vmatpush.bf16.msra.mxu0 %v297
  %1035 = vmatpush.bf16.msra.mxu0 %v293
  %1036 = vmatpush.bf16.msra.mxu0 %v289
  %1037 = vmatpush.bf16.msra.mxu0 %v285
  %1038 = vmatmul.bf16.gmra.mxu0 %v1003
  %v1039 = vpop.f32.mrf.mxu0
  %v1040 = vadd.f32 0.0, %v1039
  %v1041 = vpop.f32.mrf.mxu0
  %1042 = vdwg.mxu0
  %1043 = vmatpush.bf16.msra.mxu0 %v314
  %1044 = vmatpush.bf16.msra.mxu0 %v310
  %1045 = vmatpush.bf16.msra.mxu0 %v306
  %1046 = vmatpush.bf16.msra.mxu0 %v302
  %1047 = vmatpush.bf16.msra.mxu0 %v298
  %1048 = vmatpush.bf16.msra.mxu0 %v294
  %1049 = vmatpush.bf16.msra.mxu0 %v290
  %1050 = vmatpush.bf16.msra.mxu0 %v286
  %1051 = vmatmul.bf16.gmra.mxu0 %v1003
  %v1052 = vpop.f32.mrf.mxu0
  %v1053 = vadd.f32 0.0, %v1052
  %v1054 = vpop.f32.mrf.mxu0
  %1055 = vdwg.mxu0
  %v1060 = vrot.slane %v1014, 6
  %v1061 = vrot.slane %v1027, 6
  %v1062 = vrot.slane %v1040, 6
  %v1063 = vrot.slane %v1053, 6
  %v1068 = vadd.f32 %v143, %v1060
  %v1069 = vadd.f32 %v157, %v1061
  %v1070 = vadd.f32 %v171, %v1062
  %v1071 = vadd.f32 %v185, %v1063
  %v1072 = vxor.u32 %v1068, 2147483648
  %v1073 = vmul.f32 %v1072, 1.442695
  %v1074 = vpow.pop %v1073
  %v1075 = vadd.f32 %v1074, 1.0
  %v1076 = vrcp.pop %v1075
  %v1077 = vmul.f32 %v1075, %v1076
  %v1078 = vsub.f32 1.0, %v1077
  %v1079 = vmul.f32 %v1076, %v1078
  %v1080 = vadd.f32 %v1076, %v1079
  %vm1081 = vweird.f32 %v1075
  %vm1082 = vweird.f32 %v1076
  %vm1083 = vmor %vm1081, %vm1082
  %v1084 = vsel %vm1083, %v1076, %v1080
  %v1085 = vand.u32 2147483647, %v1075
  %vm1086 = vcmp.eq.f32.partialorder %v1085, 8.507059e+37
  %v1087 = vand.u32 %v1075, 2147483648
  %v1088 = vor.u32 1.1754944e-38, %v1087
  %v1089 = vsel %vm1086, %v1088, %v1084
  %v1090 = vmul.f32 1.0, %v1089
  %v1091 = vxor.u32 %v1069, 2147483648
  %v1092 = vmul.f32 %v1091, 1.442695
  %v1093 = vpow.pop %v1092
  %v1094 = vadd.f32 %v1093, 1.0
  %v1095 = vrcp.pop %v1094
  %v1096 = vmul.f32 %v1094, %v1095
  %v1097 = vsub.f32 1.0, %v1096
  %v1098 = vmul.f32 %v1095, %v1097
  %v1099 = vadd.f32 %v1095, %v1098
  %vm1100 = vweird.f32 %v1094
  %vm1101 = vweird.f32 %v1095
  %vm1102 = vmor %vm1100, %vm1101
  %v1103 = vsel %vm1102, %v1095, %v1099
  %v1104 = vand.u32 2147483647, %v1094
  %vm1105 = vcmp.eq.f32.partialorder %v1104, 8.507059e+37
  %v1106 = vand.u32 %v1094, 2147483648
  %v1107 = vor.u32 1.1754944e-38, %v1106
  %v1108 = vsel %vm1105, %v1107, %v1103
  %v1109 = vmul.f32 1.0, %v1108
  %v1110 = vtanh.pop %v1070
  %v1111 = vxor.u32 %v1071, 2147483648
  %v1112 = vmul.f32 %v1111, 1.442695
  %v1113 = vpow.pop %v1112
  %v1114 = vadd.f32 %v1113, 1.0
  %v1115 = vrcp.pop %v1114
  %v1116 = vmul.f32 %v1114, %v1115
  %v1117 = vsub.f32 1.0, %v1116
  %v1118 = vmul.f32 %v1115, %v1117
  %v1119 = vadd.f32 %v1115, %v1118
  %vm1120 = vweird.f32 %v1114
  %vm1121 = vweird.f32 %v1115
  %vm1122 = vmor %vm1120, %vm1121
  %v1123 = vsel %vm1122, %v1115, %v1119
  %v1124 = vand.u32 2147483647, %v1114
  %vm1125 = vcmp.eq.f32.partialorder %v1124, 8.507059e+37
  %v1126 = vand.u32 %v1114, 2147483648
  %v1127 = vor.u32 1.1754944e-38, %v1126
  %v1128 = vsel %vm1125, %v1127, %v1123
  %v1129 = vmul.f32 1.0, %v1128
  %v1131 = vrot.slane %v1000, 6
  %v1133 = vmul.f32 %v1109, %v1131
  %v1134 = vmul.f32 %v1090, %v1110
  %v1135 = vadd.f32 %v1133, %v1134
  %v1136 = vtanh.pop %v1135
  %v1137 = vmul.f32 %v1129, %v1136
  %v1138 = vpack.c.bf16 %v1137, %v1137
  %v1140 = vrot.slane %v1138, 1
  %1142 = vmatpush.bf16.msra.mxu0 %v311
  %1143 = vmatpush.bf16.msra.mxu0 %v307
  %1144 = vmatpush.bf16.msra.mxu0 %v303
  %1145 = vmatpush.bf16.msra.mxu0 %v299
  %1146 = vmatpush.bf16.msra.mxu0 %v295
  %1147 = vmatpush.bf16.msra.mxu0 %v291
  %1148 = vmatpush.bf16.msra.mxu0 %v287
  %1149 = vmatpush.bf16.msra.mxu0 %v283
  %1150 = vmatmul.bf16.gmra.mxu0 %v1140
  %v1151 = vpop.f32.mrf.mxu0
  %v1152 = vadd.f32 0.0, %v1151
  %v1153 = vpop.f32.mrf.mxu0
  %1154 = vdwg.mxu0
  %1155 = vmatpush.bf16.msra.mxu0 %v312
  %1156 = vmatpush.bf16.msra.mxu0 %v308
  %1157 = vmatpush.bf16.msra.mxu0 %v304
  %1158 = vmatpush.bf16.msra.mxu0 %v300
  %1159 = vmatpush.bf16.msra.mxu0 %v296
  %1160 = vmatpush.bf16.msra.mxu0 %v292
  %1161 = vmatpush.bf16.msra.mxu0 %v288
  %1162 = vmatpush.bf16.msra.mxu0 %v284
  %1163 = vmatmul.bf16.gmra.mxu0 %v1140
  %v1164 = vpop.f32.mrf.mxu0
  %v1165 = vadd.f32 0.0, %v1164
  %v1166 = vpop.f32.mrf.mxu0
  %1167 = vdwg.mxu0
  %1168 = vmatpush.bf16.msra.mxu0 %v313
  %1169 = vmatpush.bf16.msra.mxu0 %v309
  %1170 = vmatpush.bf16.msra.mxu0 %v305
  %1171 = vmatpush.bf16.msra.mxu0 %v301
  %1172 = vmatpush.bf16.msra.mxu0 %v297
  %1173 = vmatpush.bf16.msra.mxu0 %v293
  %1174 = vmatpush.bf16.msra.mxu0 %v289
  %1175 = vmatpush.bf16.msra.mxu0 %v285
  %1176 = vmatmul.bf16.gmra.mxu0 %v1140
  %v1177 = vpop.f32.mrf.mxu0
  %v1178 = vadd.f32 0.0, %v1177
  %v1179 = vpop.f32.mrf.mxu0
  %1180 = vdwg.mxu0
  %1181 = vmatpush.bf16.msra.mxu0 %v314
  %1182 = vmatpush.bf16.msra.mxu0 %v310
  %1183 = vmatpush.bf16.msra.mxu0 %v306
  %1184 = vmatpush.bf16.msra.mxu0 %v302
  %1185 = vmatpush.bf16.msra.mxu0 %v298
  %1186 = vmatpush.bf16.msra.mxu0 %v294
  %1187 = vmatpush.bf16.msra.mxu0 %v290
  %1188 = vmatpush.bf16.msra.mxu0 %v286
  %1189 = vmatmul.bf16.gmra.mxu0 %v1140
  %v1190 = vpop.f32.mrf.mxu0
  %v1191 = vadd.f32 0.0, %v1190
  %v1192 = vpop.f32.mrf.mxu0
  %1193 = vdwg.mxu0
  %v1198 = vrot.slane %v1152, 4
  %v1199 = vrot.slane %v1165, 4
  %v1200 = vrot.slane %v1178, 4
  %v1201 = vrot.slane %v1191, 4
  %v1206 = vadd.f32 %v143, %v1198
  %v1207 = vadd.f32 %v157, %v1199
  %v1208 = vadd.f32 %v171, %v1200
  %v1209 = vadd.f32 %v185, %v1201
  %v1210 = vxor.u32 %v1206, 2147483648
  %v1211 = vmul.f32 %v1210, 1.442695
  %v1212 = vpow.pop %v1211
  %v1213 = vadd.f32 %v1212, 1.0
  %v1214 = vrcp.pop %v1213
  %v1215 = vmul.f32 %v1213, %v1214
  %v1216 = vsub.f32 1.0, %v1215
  %v1217 = vmul.f32 %v1214, %v1216
  %v1218 = vadd.f32 %v1214, %v1217
  %vm1219 = vweird.f32 %v1213
  %vm1220 = vweird.f32 %v1214
  %vm1221 = vmor %vm1219, %vm1220
  %v1222 = vsel %vm1221, %v1214, %v1218
  %v1223 = vand.u32 2147483647, %v1213
  %vm1224 = vcmp.eq.f32.partialorder %v1223, 8.507059e+37
  %v1225 = vand.u32 %v1213, 2147483648
  %v1226 = vor.u32 1.1754944e-38, %v1225
  %v1227 = vsel %vm1224, %v1226, %v1222
  %v1228 = vmul.f32 1.0, %v1227
  %v1229 = vxor.u32 %v1207, 2147483648
  %v1230 = vmul.f32 %v1229, 1.442695
  %v1231 = vpow.pop %v1230
  %v1232 = vadd.f32 %v1231, 1.0
  %v1233 = vrcp.pop %v1232
  %v1234 = vmul.f32 %v1232, %v1233
  %v1235 = vsub.f32 1.0, %v1234
  %v1236 = vmul.f32 %v1233, %v1235
  %v1237 = vadd.f32 %v1233, %v1236
  %vm1238 = vweird.f32 %v1232
  %vm1239 = vweird.f32 %v1233
  %vm1240 = vmor %vm1238, %vm1239
  %v1241 = vsel %vm1240, %v1233, %v1237
  %v1242 = vand.u32 2147483647, %v1232
  %vm1243 = vcmp.eq.f32.partialorder %v1242, 8.507059e+37
  %v1244 = vand.u32 %v1232, 2147483648
  %v1245 = vor.u32 1.1754944e-38, %v1244
  %v1246 = vsel %vm1243, %v1245, %v1241
  %v1247 = vmul.f32 1.0, %v1246
  %v1248 = vtanh.pop %v1208
  %v1249 = vxor.u32 %v1209, 2147483648
  %v1250 = vmul.f32 %v1249, 1.442695
  %v1251 = vpow.pop %v1250
  %v1252 = vadd.f32 %v1251, 1.0
  %v1253 = vrcp.pop %v1252
  %v1254 = vmul.f32 %v1252, %v1253
  %v1255 = vsub.f32 1.0, %v1254
  %v1256 = vmul.f32 %v1253, %v1255
  %v1257 = vadd.f32 %v1253, %v1256
  %vm1258 = vweird.f32 %v1252
  %vm1259 = vweird.f32 %v1253
  %vm1260 = vmor %vm1258, %vm1259
  %v1261 = vsel %vm1260, %v1253, %v1257
  %v1262 = vand.u32 2147483647, %v1252
  %vm1263 = vcmp.eq.f32.partialorder %v1262, 8.507059e+37
  %v1264 = vand.u32 %v1252, 2147483648
  %v1265 = vor.u32 1.1754944e-38, %v1264
  %v1266 = vsel %vm1263, %v1265, %v1261
  %v1267 = vmul.f32 1.0, %v1266
  %v1269 = vrot.slane %v1135, 6
  %v1271 = vmul.f32 %v1247, %v1269
  %v1272 = vmul.f32 %v1228, %v1248
  %v1273 = vadd.f32 %v1271, %v1272
  %v1274 = vtanh.pop %v1273
  %v1275 = vmul.f32 %v1267, %v1274
  %v1276 = vpack.c.bf16 %v1275, %v1275
  %v1278 = vrot.slane %v1276, 2
  %1280 = vmatpush.bf16.msra.mxu0 %v311
  %1281 = vmatpush.bf16.msra.mxu0 %v307
  %1282 = vmatpush.bf16.msra.mxu0 %v303
  %1283 = vmatpush.bf16.msra.mxu0 %v299
  %1284 = vmatpush.bf16.msra.mxu0 %v295
  %1285 = vmatpush.bf16.msra.mxu0 %v291
  %1286 = vmatpush.bf16.msra.mxu0 %v287
  %1287 = vmatpush.bf16.msra.mxu0 %v283
  %1288 = vmatmul.bf16.gmra.mxu0 %v1278
  %v1289 = vpop.f32.mrf.mxu0
  %v1290 = vadd.f32 0.0, %v1289
  %v1291 = vpop.f32.mrf.mxu0
  %1292 = vdwg.mxu0
  %1293 = vmatpush.bf16.msra.mxu0 %v312
  %1294 = vmatpush.bf16.msra.mxu0 %v308
  %1295 = vmatpush.bf16.msra.mxu0 %v304
  %1296 = vmatpush.bf16.msra.mxu0 %v300
  %1297 = vmatpush.bf16.msra.mxu0 %v296
  %1298 = vmatpush.bf16.msra.mxu0 %v292
  %1299 = vmatpush.bf16.msra.mxu0 %v288
  %1300 = vmatpush.bf16.msra.mxu0 %v284
  %1301 = vmatmul.bf16.gmra.mxu0 %v1278
  %v1302 = vpop.f32.mrf.mxu0
  %v1303 = vadd.f32 0.0, %v1302
  %v1304 = vpop.f32.mrf.mxu0
  %1305 = vdwg.mxu0
  %1306 = vmatpush.bf16.msra.mxu0 %v313
  %1307 = vmatpush.bf16.msra.mxu0 %v309
  %1308 = vmatpush.bf16.msra.mxu0 %v305
  %1309 = vmatpush.bf16.msra.mxu0 %v301
  %1310 = vmatpush.bf16.msra.mxu0 %v297
  %1311 = vmatpush.bf16.msra.mxu0 %v293
  %1312 = vmatpush.bf16.msra.mxu0 %v289
  %1313 = vmatpush.bf16.msra.mxu0 %v285
  %1314 = vmatmul.bf16.gmra.mxu0 %v1278
  %v1315 = vpop.f32.mrf.mxu0
  %v1316 = vadd.f32 0.0, %v1315
  %v1317 = vpop.f32.mrf.mxu0
  %1318 = vdwg.mxu0
  %1319 = vmatpush.bf16.msra.mxu0 %v314
  %1320 = vmatpush.bf16.msra.mxu0 %v310
  %1321 = vmatpush.bf16.msra.mxu0 %v306
  %1322 = vmatpush.bf16.msra.mxu0 %v302
  %1323 = vmatpush.bf16.msra.mxu0 %v298
  %1324 = vmatpush.bf16.msra.mxu0 %v294
  %1325 = vmatpush.bf16.msra.mxu0 %v290
  %1326 = vmatpush.bf16.msra.mxu0 %v286
  %1327 = vmatmul.bf16.gmra.mxu0 %v1278
  %v1328 = vpop.f32.mrf.mxu0
  %v1329 = vadd.f32 0.0, %v1328
  %v1330 = vpop.f32.mrf.mxu0
  %1331 = vdwg.mxu0
  %v1336 = vrot.slane %v1290, 2
  %v1337 = vrot.slane %v1303, 2
  %v1338 = vrot.slane %v1316, 2
  %v1339 = vrot.slane %v1329, 2
  %v1344 = vadd.f32 %v143, %v1336
  %v1345 = vadd.f32 %v157, %v1337
  %v1346 = vadd.f32 %v171, %v1338
  %v1347 = vadd.f32 %v185, %v1339
  %v1348 = vxor.u32 %v1344, 2147483648
  %v1349 = vmul.f32 %v1348, 1.442695
  %v1350 = vpow.pop %v1349
  %v1351 = vadd.f32 %v1350, 1.0
  %v1352 = vrcp.pop %v1351
  %v1353 = vmul.f32 %v1351, %v1352
  %v1354 = vsub.f32 1.0, %v1353
  %v1355 = vmul.f32 %v1352, %v1354
  %v1356 = vadd.f32 %v1352, %v1355
  %vm1357 = vweird.f32 %v1351
  %vm1358 = vweird.f32 %v1352
  %vm1359 = vmor %vm1357, %vm1358
  %v1360 = vsel %vm1359, %v1352, %v1356
  %v1361 = vand.u32 2147483647, %v1351
  %vm1362 = vcmp.eq.f32.partialorder %v1361, 8.507059e+37
  %v1363 = vand.u32 %v1351, 2147483648
  %v1364 = vor.u32 1.1754944e-38, %v1363
  %v1365 = vsel %vm1362, %v1364, %v1360
  %v1366 = vmul.f32 1.0, %v1365
  %v1367 = vxor.u32 %v1345, 2147483648
  %v1368 = vmul.f32 %v1367, 1.442695
  %v1369 = vpow.pop %v1368
  %v1370 = vadd.f32 %v1369, 1.0
  %v1371 = vrcp.pop %v1370
  %v1372 = vmul.f32 %v1370, %v1371
  %v1373 = vsub.f32 1.0, %v1372
  %v1374 = vmul.f32 %v1371, %v1373
  %v1375 = vadd.f32 %v1371, %v1374
  %vm1376 = vweird.f32 %v1370
  %vm1377 = vweird.f32 %v1371
  %vm1378 = vmor %vm1376, %vm1377
  %v1379 = vsel %vm1378, %v1371, %v1375
  %v1380 = vand.u32 2147483647, %v1370
  %vm1381 = vcmp.eq.f32.partialorder %v1380, 8.507059e+37
  %v1382 = vand.u32 %v1370, 2147483648
  %v1383 = vor.u32 1.1754944e-38, %v1382
  %v1384 = vsel %vm1381, %v1383, %v1379
  %v1385 = vmul.f32 1.0, %v1384
  %v1386 = vtanh.pop %v1346
  %v1387 = vxor.u32 %v1347, 2147483648
  %v1388 = vmul.f32 %v1387, 1.442695
  %v1389 = vpow.pop %v1388
  %v1390 = vadd.f32 %v1389, 1.0
  %v1391 = vrcp.pop %v1390
  %v1392 = vmul.f32 %v1390, %v1391
  %v1393 = vsub.f32 1.0, %v1392
  %v1394 = vmul.f32 %v1391, %v1393
  %v1395 = vadd.f32 %v1391, %v1394
  %vm1396 = vweird.f32 %v1390
  %vm1397 = vweird.f32 %v1391
  %vm1398 = vmor %vm1396, %vm1397
  %v1399 = vsel %vm1398, %v1391, %v1395
  %v1400 = vand.u32 2147483647, %v1390
  %vm1401 = vcmp.eq.f32.partialorder %v1400, 8.507059e+37
  %v1402 = vand.u32 %v1390, 2147483648
  %v1403 = vor.u32 1.1754944e-38, %v1402
  %v1404 = vsel %vm1401, %v1403, %v1399
  %v1405 = vmul.f32 1.0, %v1404
  %v1407 = vrot.slane %v1273, 6
  %v1409 = vmul.f32 %v1385, %v1407
  %v1410 = vmul.f32 %v1366, %v1386
  %v1411 = vadd.f32 %v1409, %v1410
  %v1412 = vtanh.pop %v1411
  %v1413 = vmul.f32 %v1405, %v1412
  %v1414 = vpack.c.bf16 %v1413, %v1413
  %v1415 = vld [vmem:[%s5] sm:$0xf]
  %v1416 = vld [vmem:[%s5 + $0x4] sm:$0xf]
  %v1417 = vld [vmem:[%s5 + $0x8] sm:$0xf]
  %v1418 = vld [vmem:[%s5 + $0xc] sm:$0xf]
  %v1419 = vld [vmem:[%s5 + $0x10] sm:$0xf]
  %v1420 = vld [vmem:[%s5 + $0x14] sm:$0xf]
  %v1421 = vld [vmem:[%s5 + $0x18] sm:$0xf]
  %v1422 = vld [vmem:[%s5 + $0x1c] sm:$0xf]
  %v1423 = vld [vmem:[%s5 + $0x20] sm:$0xf]
  %v1424 = vld [vmem:[%s5 + $0x24] sm:$0xf]
  %v1425 = vld [vmem:[%s5 + $0x28] sm:$0xf]
  %v1426 = vld [vmem:[%s5 + $0x2c] sm:$0xf]
  %v1427 = vld [vmem:[%s5 + $0x30] sm:$0xf]
  %v1428 = vld [vmem:[%s5 + $0x34] sm:$0xf]
  %v1429 = vld [vmem:[%s5 + $0x38] sm:$0xf]
  %v1430 = vld [vmem:[%s5 + $0x3c] sm:$0xf]
  %v1431 = vld [vmem:[%s6] sm:$0x1]
  %v1433 = vperm.slane %v1431, 0
  %v1436 = vrot.slane %v1414, 3
  %v1454 = vunpack.c.l.b16 %v1415
  %v1455 = vunpack.c.l.b16 %v1416
  %v1456 = vunpack.c.l.b16 %v1417
  %v1457 = vunpack.c.l.b16 %v1418
  %v1458 = vunpack.c.l.b16 %v1419
  %v1459 = vunpack.c.l.b16 %v1420
  %v1460 = vunpack.c.l.b16 %v1421
  %v1461 = vunpack.c.l.b16 %v1422
  %v1462 = vunpack.c.l.b16 %v1423
  %v1463 = vunpack.c.l.b16 %v1424
  %v1464 = vunpack.c.l.b16 %v1425
  %v1465 = vunpack.c.l.b16 %v1426
  %v1466 = vunpack.c.l.b16 %v1427
  %v1467 = vunpack.c.l.b16 %v1428
  %v1468 = vunpack.c.l.b16 %v1429
  %v1469 = vunpack.c.l.b16 %v1430
  %v1470 = vpack.c.b16 %v1455, %v1454
  %v1471 = vpack.c.b16 %v1457, %v1456
  %v1472 = vpack.c.b16 %v1459, %v1458
  %v1473 = vpack.c.b16 %v1461, %v1460
  %v1474 = vpack.c.b16 %v1463, %v1462
  %v1475 = vpack.c.b16 %v1465, %v1464
  %v1476 = vpack.c.b16 %v1467, %v1466
  %v1477 = vpack.c.b16 %v1469, %v1468
  %1486 = vmatpush.bf16.msra.mxu0 %v1477
  %1487 = vmatpush.bf16.msra.mxu0 %v1476
  %1488 = vmatpush.bf16.msra.mxu0 %v1475
  %1489 = vmatpush.bf16.msra.mxu0 %v1474
  %1490 = vmatpush.bf16.msra.mxu0 %v1473
  %1491 = vmatpush.bf16.msra.mxu0 %v1472
  %1492 = vmatpush.bf16.msra.mxu0 %v1471
  %1493 = vmatpush.bf16.msra.mxu0 %v1470
  %1494 = vmatmul.bf16.gmra.mxu0 %v1436
  %v1495 = vpop.f32.mrf.mxu0
  %v1496 = vadd.f32 %v1433, %v1495
  %v1497 = vpop.f32.mrf.mxu0
  %1498 = vdwg.mxu0
  %v1499 = vmax.f32 %v1496, 0.0
  %v1500 = vpack.c.bf16 %v1499, %v1499
  %s1501 = scalar_lea.vmem %s5, 64
  %v1502 = vld [vmem:[%s1501] sm:$0xf]
  %v1503 = vld [vmem:[%s1501 + $0x4] sm:$0xf]
  %v1504 = vld [vmem:[%s1501 + $0x8] sm:$0xf]
  %v1505 = vld [vmem:[%s1501 + $0xc] sm:$0xf]
  %v1506 = vld [vmem:[%s1501 + $0x10] sm:$0xf]
  %v1507 = vld [vmem:[%s1501 + $0x14] sm:$0xf]
  %v1508 = vld [vmem:[%s1501 + $0x18] sm:$0xf]
  %v1509 = vld [vmem:[%s1501 + $0x1c] sm:$0xf]
  %v1510 = vld [vmem:[%s1501 + $0x20] sm:$0xf]
  %v1511 = vld [vmem:[%s1501 + $0x24] sm:$0xf]
  %v1512 = vld [vmem:[%s1501 + $0x28] sm:$0xf]
  %v1513 = vld [vmem:[%s1501 + $0x2c] sm:$0xf]
  %v1514 = vld [vmem:[%s1501 + $0x30] sm:$0xf]
  %v1515 = vld [vmem:[%s1501 + $0x34] sm:$0xf]
  %v1516 = vld [vmem:[%s1501 + $0x38] sm:$0xf]
  %v1517 = vld [vmem:[%s1501 + $0x3c] sm:$0xf]
  %s1518 = scalar_lea.vmem %s6, 1
  %v1519 = vld [vmem:[%s1518] sm:$0x1]
  %v1521 = vperm.slane %v1519, 0
  %v1539 = vunpack.c.l.b16 %v1502
  %v1540 = vunpack.c.l.b16 %v1503
  %v1541 = vunpack.c.l.b16 %v1504
  %v1542 = vunpack.c.l.b16 %v1505
  %v1543 = vunpack.c.l.b16 %v1506
  %v1544 = vunpack.c.l.b16 %v1507
  %v1545 = vunpack.c.l.b16 %v1508
  %v1546 = vunpack.c.l.b16 %v1509
  %v1547 = vunpack.c.l.b16 %v1510
  %v1548 = vunpack.c.l.b16 %v1511
  %v1549 = vunpack.c.l.b16 %v1512
  %v1550 = vunpack.c.l.b16 %v1513
  %v1551 = vunpack.c.l.b16 %v1514
  %v1552 = vunpack.c.l.b16 %v1515
  %v1553 = vunpack.c.l.b16 %v1516
  %v1554 = vunpack.c.l.b16 %v1517
  %v1555 = vpack.c.b16 %v1540, %v1539
  %v1556 = vpack.c.b16 %v1542, %v1541
  %v1557 = vpack.c.b16 %v1544, %v1543
  %v1558 = vpack.c.b16 %v1546, %v1545
  %v1559 = vpack.c.b16 %v1548, %v1547
  %v1560 = vpack.c.b16 %v1550, %v1549
  %v1561 = vpack.c.b16 %v1552, %v1551
  %v1562 = vpack.c.b16 %v1554, %v1553
  %1571 = vmatpush.bf16.msra.mxu0 %v1562
  %1572 = vmatpush.bf16.msra.mxu0 %v1561
  %1573 = vmatpush.bf16.msra.mxu0 %v1560
  %1574 = vmatpush.bf16.msra.mxu0 %v1559
  %1575 = vmatpush.bf16.msra.mxu0 %v1558
  %1576 = vmatpush.bf16.msra.mxu0 %v1557
  %1577 = vmatpush.bf16.msra.mxu0 %v1556
  %1578 = vmatpush.bf16.msra.mxu0 %v1555
  %1579 = vmatmul.bf16.gmra.mxu0 %v1500
  %v1580 = vpop.f32.mrf.mxu0
  %v1581 = vadd.f32 %v1521, %v1580
  %v1582 = vpop.f32.mrf.mxu0
  %1583 = vdwg.mxu0
  %v1584 = vmax.f32 %v1581, 0.0
  %v1585 = vpack.c.bf16 %v1584, %v1584
  %s1586 = scalar_lea.vmem %s5, 128
  %v1587 = vld [vmem:[%s1586] sm:$0xf]
  %v1588 = vld [vmem:[%s1586 + $0x4] sm:$0xf]
  %v1589 = vld [vmem:[%s1586 + $0x8] sm:$0xf]
  %v1590 = vld [vmem:[%s1586 + $0xc] sm:$0xf]
  %v1591 = vld [vmem:[%s1586 + $0x10] sm:$0xf]
  %v1592 = vld [vmem:[%s1586 + $0x14] sm:$0xf]
  %v1593 = vld [vmem:[%s1586 + $0x18] sm:$0xf]
  %v1594 = vld [vmem:[%s1586 + $0x1c] sm:$0xf]
  %v1595 = vld [vmem:[%s1586 + $0x20] sm:$0xf]
  %v1596 = vld [vmem:[%s1586 + $0x24] sm:$0xf]
  %v1597 = vld [vmem:[%s1586 + $0x28] sm:$0xf]
  %v1598 = vld [vmem:[%s1586 + $0x2c] sm:$0xf]
  %v1599 = vld [vmem:[%s1586 + $0x30] sm:$0xf]
  %v1600 = vld [vmem:[%s1586 + $0x34] sm:$0xf]
  %v1601 = vld [vmem:[%s1586 + $0x38] sm:$0xf]
  %v1602 = vld [vmem:[%s1586 + $0x3c] sm:$0xf]
  %s1603 = scalar_lea.vmem %s6, 2
  %v1604 = vld [vmem:[%s1603] sm:$0x1]
  %v1606 = vperm.slane %v1604, 0
  %v1624 = vunpack.c.l.b16 %v1587
  %v1625 = vunpack.c.l.b16 %v1588
  %v1626 = vunpack.c.l.b16 %v1589
  %v1627 = vunpack.c.l.b16 %v1590
  %v1628 = vunpack.c.l.b16 %v1591
  %v1629 = vunpack.c.l.b16 %v1592
  %v1630 = vunpack.c.l.b16 %v1593
  %v1631 = vunpack.c.l.b16 %v1594
  %v1632 = vunpack.c.l.b16 %v1595
  %v1633 = vunpack.c.l.b16 %v1596
  %v1634 = vunpack.c.l.b16 %v1597
  %v1635 = vunpack.c.l.b16 %v1598
  %v1636 = vunpack.c.l.b16 %v1599
  %v1637 = vunpack.c.l.b16 %v1600
  %v1638 = vunpack.c.l.b16 %v1601
  %v1639 = vunpack.c.l.b16 %v1602
  %v1640 = vpack.c.b16 %v1625, %v1624
  %v1641 = vpack.c.b16 %v1627, %v1626
  %v1642 = vpack.c.b16 %v1629, %v1628
  %v1643 = vpack.c.b16 %v1631, %v1630
  %v1644 = vpack.c.b16 %v1633, %v1632
  %v1645 = vpack.c.b16 %v1635, %v1634
  %v1646 = vpack.c.b16 %v1637, %v1636
  %v1647 = vpack.c.b16 %v1639, %v1638
  %1656 = vmatpush.bf16.msra.mxu0 %v1647
  %1657 = vmatpush.bf16.msra.mxu0 %v1646
  %1658 = vmatpush.bf16.msra.mxu0 %v1645
  %1659 = vmatpush.bf16.msra.mxu0 %v1644
  %1660 = vmatpush.bf16.msra.mxu0 %v1643
  %1661 = vmatpush.bf16.msra.mxu0 %v1642
  %1662 = vmatpush.bf16.msra.mxu0 %v1641
  %1663 = vmatpush.bf16.msra.mxu0 %v1640
  %1664 = vmatmul.bf16.gmra.mxu0 %v1585
  %v1665 = vpop.f32.mrf.mxu0
  %v1666 = vadd.f32 %v1606, %v1665
  %v1667 = vpop.f32.mrf.mxu0
  %1668 = vdwg.mxu0
  %v1669 = vmax.f32 %v1666, 0.0
  %v1670 = vpack.c.bf16 %v59, %v59
  %1671 = vmatpush.bf16.msra.mxu0 %v1477
  %1672 = vmatpush.bf16.msra.mxu0 %v1476
  %1673 = vmatpush.bf16.msra.mxu0 %v1475
  %1674 = vmatpush.bf16.msra.mxu0 %v1474
  %1675 = vmatpush.bf16.msra.mxu0 %v1473
  %1676 = vmatpush.bf16.msra.mxu0 %v1472
  %1677 = vmatpush.bf16.msra.mxu0 %v1471
  %1678 = vmatpush.bf16.msra.mxu0 %v1470
  %1679 = vmatmul.bf16.gmra.mxu0 %v1670
  %v1680 = vpop.f32.mrf.mxu0
  %v1681 = vadd.f32 %v1433, %v1680
  %v1682 = vpop.f32.mrf.mxu0
  %1683 = vdwg.mxu0
  %v1684 = vmax.f32 %v1681, 0.0
  %v1685 = vpack.c.bf16 %v1684, %v1684
  %1686 = vmatpush.bf16.msra.mxu0 %v1562
  %1687 = vmatpush.bf16.msra.mxu0 %v1561
  %1688 = vmatpush.bf16.msra.mxu0 %v1560
  %1689 = vmatpush.bf16.msra.mxu0 %v1559
  %1690 = vmatpush.bf16.msra.mxu0 %v1558
  %1691 = vmatpush.bf16.msra.mxu0 %v1557
  %1692 = vmatpush.bf16.msra.mxu0 %v1556
  %1693 = vmatpush.bf16.msra.mxu0 %v1555
  %1694 = vmatmul.bf16.gmra.mxu0 %v1685
  %v1695 = vpop.f32.mrf.mxu0
  %v1696 = vadd.f32 %v1521, %v1695
  %v1697 = vpop.f32.mrf.mxu0
  %1698 = vdwg.mxu0
  %v1699 = vmax.f32 %v1696, 0.0
  %v1700 = vpack.c.bf16 %v1699, %v1699
  %1701 = vmatpush.bf16.msra.mxu0 %v1647
  %1702 = vmatpush.bf16.msra.mxu0 %v1646
  %1703 = vmatpush.bf16.msra.mxu0 %v1645
  %1704 = vmatpush.bf16.msra.mxu0 %v1644
  %1705 = vmatpush.bf16.msra.mxu0 %v1643
  %1706 = vmatpush.bf16.msra.mxu0 %v1642
  %1707 = vmatpush.bf16.msra.mxu0 %v1641
  %1708 = vmatpush.bf16.msra.mxu0 %v1640
  %1709 = vmatmul.bf16.gmra.mxu0 %v1700
  %v1710 = vpop.f32.mrf.mxu0
  %v1711 = vadd.f32 %v1606, %v1710
  %v1712 = vpop.f32.mrf.mxu0
  %1713 = vdwg.mxu0
  %v1714 = vmax.f32 %v1711, 0.0
  %v1715 = vpack.c.bf16 %v1669, %v1669
  %v1716 = vld [vmem:[%s7] sm:$0xff]
  %v1717 = vld [vmem:[%s7 + $0x8] sm:$0xff]
  %v1718 = vld [vmem:[%s7 + $0x10] sm:$0xff]
  %v1719 = vld [vmem:[%s7 + $0x18] sm:$0xff]
  %v1720 = vld [vmem:[%s7 + $0x20] sm:$0xff]
  %v1721 = vld [vmem:[%s7 + $0x28] sm:$0xff]
  %v1722 = vld [vmem:[%s7 + $0x30] sm:$0xff]
  %v1723 = vld [vmem:[%s7 + $0x38] sm:$0xff]
  %v1724 = vld [vmem:[%s7 + $0x40] sm:$0xff]
  %v1725 = vld [vmem:[%s7 + $0x48] sm:$0xff]
  %v1726 = vld [vmem:[%s7 + $0x50] sm:$0xff]
  %v1727 = vld [vmem:[%s7 + $0x58] sm:$0xff]
  %v1728 = vld [vmem:[%s7 + $0x60] sm:$0xff]
  %v1729 = vld [vmem:[%s7 + $0x68] sm:$0xff]
  %v1730 = vld [vmem:[%s7 + $0x70] sm:$0xff]
  %v1731 = vld [vmem:[%s7 + $0x78] sm:$0xff]
  %v1732 = vpack.c.bf16 %v1714, %v1714
  %v1733 = vld [vmem:[%s8] sm:$0xff]
  %v1734 = vld [vmem:[%s8 + $0x8] sm:$0xff]
  %v1735 = vld [vmem:[%s8 + $0x10] sm:$0xff]
  %v1736 = vld [vmem:[%s8 + $0x18] sm:$0xff]
  %v1737 = vld [vmem:[%s8 + $0x20] sm:$0xff]
  %v1738 = vld [vmem:[%s8 + $0x28] sm:$0xff]
  %v1739 = vld [vmem:[%s8 + $0x30] sm:$0xff]
  %v1740 = vld [vmem:[%s8 + $0x38] sm:$0xff]
  %v1741 = vld [vmem:[%s8 + $0x40] sm:$0xff]
  %v1742 = vld [vmem:[%s8 + $0x48] sm:$0xff]
  %v1743 = vld [vmem:[%s8 + $0x50] sm:$0xff]
  %v1744 = vld [vmem:[%s8 + $0x58] sm:$0xff]
  %v1745 = vld [vmem:[%s8 + $0x60] sm:$0xff]
  %v1746 = vld [vmem:[%s8 + $0x68] sm:$0xff]
  %v1747 = vld [vmem:[%s8 + $0x70] sm:$0xff]
  %v1748 = vld [vmem:[%s8 + $0x78] sm:$0xff]
  %v1765 = vunpack.c.l.b16 %v1733
  %v1766 = vunpack.c.h.b16 %v1733
  %v1767 = vunpack.c.l.b16 %v1734
  %v1768 = vunpack.c.h.b16 %v1734
  %v1769 = vunpack.c.l.b16 %v1735
  %v1770 = vunpack.c.h.b16 %v1735
  %v1771 = vunpack.c.l.b16 %v1736
  %v1772 = vunpack.c.h.b16 %v1736
  %v1773 = vunpack.c.l.b16 %v1737
  %v1774 = vunpack.c.h.b16 %v1737
  %v1775 = vunpack.c.l.b16 %v1738
  %v1776 = vunpack.c.h.b16 %v1738
  %v1777 = vunpack.c.l.b16 %v1739
  %v1778 = vunpack.c.h.b16 %v1739
  %v1779 = vunpack.c.l.b16 %v1740
  %v1780 = vunpack.c.h.b16 %v1740
  %v1781 = vunpack.c.l.b16 %v1741
  %v1782 = vunpack.c.h.b16 %v1741
  %v1783 = vunpack.c.l.b16 %v1742
  %v1784 = vunpack.c.h.b16 %v1742
  %v1785 = vunpack.c.l.b16 %v1743
  %v1786 = vunpack.c.h.b16 %v1743
  %v1787 = vunpack.c.l.b16 %v1744
  %v1788 = vunpack.c.h.b16 %v1744
  %v1789 = vunpack.c.l.b16 %v1745
  %v1790 = vunpack.c.h.b16 %v1745
  %v1791 = vunpack.c.l.b16 %v1746
  %v1792 = vunpack.c.h.b16 %v1746
  %v1793 = vunpack.c.l.b16 %v1747
  %v1794 = vunpack.c.h.b16 %v1747
  %v1795 = vunpack.c.l.b16 %v1748
  %v1796 = vunpack.c.h.b16 %v1748
  %v1797 = vpack.c.b16 %v1767, %v1765
  %v1798 = vpack.c.b16 %v1768, %v1766
  %v1799 = vpack.c.b16 %v1771, %v1769
  %v1800 = vpack.c.b16 %v1772, %v1770
  %v1801 = vpack.c.b16 %v1775, %v1773
  %v1802 = vpack.c.b16 %v1776, %v1774
  %v1803 = vpack.c.b16 %v1779, %v1777
  %v1804 = vpack.c.b16 %v1780, %v1778
  %v1805 = vpack.c.b16 %v1783, %v1781
  %v1806 = vpack.c.b16 %v1784, %v1782
  %v1807 = vpack.c.b16 %v1787, %v1785
  %v1808 = vpack.c.b16 %v1788, %v1786
  %v1809 = vpack.c.b16 %v1791, %v1789
  %v1810 = vpack.c.b16 %v1792, %v1790
  %v1811 = vpack.c.b16 %v1795, %v1793
  %v1812 = vpack.c.b16 %v1796, %v1794
  %1829 = vmatpush.bf16.msra.mxu0 %v1811
  %1830 = vmatpush.bf16.msra.mxu0 %v1809
  %1831 = vmatpush.bf16.msra.mxu0 %v1807
  %1832 = vmatpush.bf16.msra.mxu0 %v1805
  %1833 = vmatpush.bf16.msra.mxu0 %v1803
  %1834 = vmatpush.bf16.msra.mxu0 %v1801
  %1835 = vmatpush.bf16.msra.mxu0 %v1799
  %1836 = vmatpush.bf16.msra.mxu0 %v1797
  %1837 = vmatmul.bf16.gmra.mxu0 %v1732
  %v1838 = vpop.f32.mrf.mxu0
  %v1839 = vadd.f32 0.0, %v1838
  %v1840 = vpop.f32.mrf.mxu0
  %1841 = vdwg.mxu0
  %1842 = vmatpush.bf16.msra.mxu0 %v1812
  %1843 = vmatpush.bf16.msra.mxu0 %v1810
  %1844 = vmatpush.bf16.msra.mxu0 %v1808
  %1845 = vmatpush.bf16.msra.mxu0 %v1806
  %1846 = vmatpush.bf16.msra.mxu0 %v1804
  %1847 = vmatpush.bf16.msra.mxu0 %v1802
  %1848 = vmatpush.bf16.msra.mxu0 %v1800
  %1849 = vmatpush.bf16.msra.mxu0 %v1798
  %1850 = vmatmul.bf16.gmra.mxu0 %v1732
  %v1851 = vpop.f32.mrf.mxu0
  %v1852 = vadd.f32 0.0, %v1851
  %v1853 = vpop.f32.mrf.mxu0
  %1854 = vdwg.mxu0
  %v1871 = vunpack.c.l.b16 %v1716
  %v1872 = vunpack.c.h.b16 %v1716
  %v1873 = vunpack.c.l.b16 %v1717
  %v1874 = vunpack.c.h.b16 %v1717
  %v1875 = vunpack.c.l.b16 %v1718
  %v1876 = vunpack.c.h.b16 %v1718
  %v1877 = vunpack.c.l.b16 %v1719
  %v1878 = vunpack.c.h.b16 %v1719
  %v1879 = vunpack.c.l.b16 %v1720
  %v1880 = vunpack.c.h.b16 %v1720
  %v1881 = vunpack.c.l.b16 %v1721
  %v1882 = vunpack.c.h.b16 %v1721
  %v1883 = vunpack.c.l.b16 %v1722
  %v1884 = vunpack.c.h.b16 %v1722
  %v1885 = vunpack.c.l.b16 %v1723
  %v1886 = vunpack.c.h.b16 %v1723
  %v1887 = vunpack.c.l.b16 %v1724
  %v1888 = vunpack.c.h.b16 %v1724
  %v1889 = vunpack.c.l.b16 %v1725
  %v1890 = vunpack.c.h.b16 %v1725
  %v1891 = vunpack.c.l.b16 %v1726
  %v1892 = vunpack.c.h.b16 %v1726
  %v1893 = vunpack.c.l.b16 %v1727
  %v1894 = vunpack.c.h.b16 %v1727
  %v1895 = vunpack.c.l.b16 %v1728
  %v1896 = vunpack.c.h.b16 %v1728
  %v1897 = vunpack.c.l.b16 %v1729
  %v1898 = vunpack.c.h.b16 %v1729
  %v1899 = vunpack.c.l.b16 %v1730
  %v1900 = vunpack.c.h.b16 %v1730
  %v1901 = vunpack.c.l.b16 %v1731
  %v1902 = vunpack.c.h.b16 %v1731
  %v1903 = vpack.c.b16 %v1873, %v1871
  %v1904 = vpack.c.b16 %v1874, %v1872
  %v1905 = vpack.c.b16 %v1877, %v1875
  %v1906 = vpack.c.b16 %v1878, %v1876
  %v1907 = vpack.c.b16 %v1881, %v1879
  %v1908 = vpack.c.b16 %v1882, %v1880
  %v1909 = vpack.c.b16 %v1885, %v1883
  %v1910 = vpack.c.b16 %v1886, %v1884
  %v1911 = vpack.c.b16 %v1889, %v1887
  %v1912 = vpack.c.b16 %v1890, %v1888
  %v1913 = vpack.c.b16 %v1893, %v1891
  %v1914 = vpack.c.b16 %v1894, %v1892
  %v1915 = vpack.c.b16 %v1897, %v1895
  %v1916 = vpack.c.b16 %v1898, %v1896
  %v1917 = vpack.c.b16 %v1901, %v1899
  %v1918 = vpack.c.b16 %v1902, %v1900
  %1935 = vmatpush.bf16.msra.mxu0 %v1917
  %1936 = vmatpush.bf16.msra.mxu0 %v1915
  %1937 = vmatpush.bf16.msra.mxu0 %v1913
  %1938 = vmatpush.bf16.msra.mxu0 %v1911
  %1939 = vmatpush.bf16.msra.mxu0 %v1909
  %1940 = vmatpush.bf16.msra.mxu0 %v1907
  %1941 = vmatpush.bf16.msra.mxu0 %v1905
  %1942 = vmatpush.bf16.msra.mxu0 %v1903
  %1943 = vmatmul.bf16.gmra.mxu0 %v1715
  %v1944 = vpop.f32.mrf.mxu0
  %v1945 = vadd.f32 %v1839, %v1944
  %v1946 = vpop.f32.mrf.mxu0
  %1947 = vdwg.mxu0
  %1948 = vmatpush.bf16.msra.mxu0 %v1918
  %1949 = vmatpush.bf16.msra.mxu0 %v1916
  %1950 = vmatpush.bf16.msra.mxu0 %v1914
  %1951 = vmatpush.bf16.msra.mxu0 %v1912
  %1952 = vmatpush.bf16.msra.mxu0 %v1910
  %1953 = vmatpush.bf16.msra.mxu0 %v1908
  %1954 = vmatpush.bf16.msra.mxu0 %v1906
  %1955 = vmatpush.bf16.msra.mxu0 %v1904
  %1956 = vmatmul.bf16.gmra.mxu0 %v1715
  %v1957 = vpop.f32.mrf.mxu0
  %v1958 = vadd.f32 %v1852, %v1957
  %v1959 = vpop.f32.mrf.mxu0
  %1960 = vdwg.mxu0
  %v1961 = vld [vmem:[%s9] sm:$0x3]
  %v1963 = vperm.slane %v1961, 0
  %v1964 = vperm.slane %v1961, 1
  %v1967 = vadd.f32 %v1945, %v1963
  %v1968 = vadd.f32 %v1958, %v1964
  %v1969 = vmax.f32 %v1967, 0.0
  %v1970 = vmax.f32 %v1968, 0.0
  %v1971 = vpack.c.bf16 %v1969, %v1969
  %v1972 = vpack.c.bf16 %v1970, %v1970
  %v1973 = vld [vmem:[%s10] sm:$0xff]
  %v1974 = vld [vmem:[%s10 + $0x8] sm:$0xff]
  %v1975 = vld [vmem:[%s10 + $0x10] sm:$0xff]
  %v1976 = vld [vmem:[%s10 + $0x18] sm:$0xff]
  %v1977 = vld [vmem:[%s10 + $0x20] sm:$0xff]
  %v1978 = vld [vmem:[%s10 + $0x28] sm:$0xff]
  %v1979 = vld [vmem:[%s10 + $0x30] sm:$0xff]
  %v1980 = vld [vmem:[%s10 + $0x38] sm:$0xff]
  %v1981 = vld [vmem:[%s10 + $0x40] sm:$0xff]
  %v1982 = vld [vmem:[%s10 + $0x48] sm:$0xff]
  %v1983 = vld [vmem:[%s10 + $0x50] sm:$0xff]
  %v1984 = vld [vmem:[%s10 + $0x58] sm:$0xff]
  %v1985 = vld [vmem:[%s10 + $0x60] sm:$0xff]
  %v1986 = vld [vmem:[%s10 + $0x68] sm:$0xff]
  %v1987 = vld [vmem:[%s10 + $0x70] sm:$0xff]
  %v1988 = vld [vmem:[%s10 + $0x78] sm:$0xff]
  %v1989 = vld [vmem:[%s10 + $0x80] sm:$0xff]
  %v1990 = vld [vmem:[%s10 + $0x88] sm:$0xff]
  %v1991 = vld [vmem:[%s10 + $0x90] sm:$0xff]
  %v1992 = vld [vmem:[%s10 + $0x98] sm:$0xff]
  %v1993 = vld [vmem:[%s10 + $0xa0] sm:$0xff]
  %v1994 = vld [vmem:[%s10 + $0xa8] sm:$0xff]
  %v1995 = vld [vmem:[%s10 + $0xb0] sm:$0xff]
  %v1996 = vld [vmem:[%s10 + $0xb8] sm:$0xff]
  %v1997 = vld [vmem:[%s10 + $0xc0] sm:$0xff]
  %v1998 = vld [vmem:[%s10 + $0xc8] sm:$0xff]
  %v1999 = vld [vmem:[%s10 + $0xd0] sm:$0xff]
  %v2000 = vld [vmem:[%s10 + $0xd8] sm:$0xff]
  %v2001 = vld [vmem:[%s10 + $0xe0] sm:$0xff]
  %v2002 = vld [vmem:[%s10 + $0xe8] sm:$0xff]
  %v2003 = vld [vmem:[%s10 + $0xf0] sm:$0xff]
  %v2004 = vld [vmem:[%s10 + $0xf8] sm:$0xff]
  %v2005 = vld [vmem:[%s11] sm:$0x3]
  %v2007 = vperm.slane %v2005, 0
  %v2008 = vperm.slane %v2005, 1
  %v2043 = vunpack.c.l.b16 %v1973
  %v2044 = vunpack.c.h.b16 %v1973
  %v2045 = vunpack.c.l.b16 %v1974
  %v2046 = vunpack.c.h.b16 %v1974
  %v2047 = vunpack.c.l.b16 %v1975
  %v2048 = vunpack.c.h.b16 %v1975
  %v2049 = vunpack.c.l.b16 %v1976
  %v2050 = vunpack.c.h.b16 %v1976
  %v2051 = vunpack.c.l.b16 %v1977
  %v2052 = vunpack.c.h.b16 %v1977
  %v2053 = vunpack.c.l.b16 %v1978
  %v2054 = vunpack.c.h.b16 %v1978
  %v2055 = vunpack.c.l.b16 %v1979
  %v2056 = vunpack.c.h.b16 %v1979
  %v2057 = vunpack.c.l.b16 %v1980
  %v2058 = vunpack.c.h.b16 %v1980
  %v2059 = vunpack.c.l.b16 %v1981
  %v2060 = vunpack.c.h.b16 %v1981
  %v2061 = vunpack.c.l.b16 %v1982
  %v2062 = vunpack.c.h.b16 %v1982
  %v2063 = vunpack.c.l.b16 %v1983
  %v2064 = vunpack.c.h.b16 %v1983
  %v2065 = vunpack.c.l.b16 %v1984
  %v2066 = vunpack.c.h.b16 %v1984
  %v2067 = vunpack.c.l.b16 %v1985
  %v2068 = vunpack.c.h.b16 %v1985
  %v2069 = vunpack.c.l.b16 %v1986
  %v2070 = vunpack.c.h.b16 %v1986
  %v2071 = vunpack.c.l.b16 %v1987
  %v2072 = vunpack.c.h.b16 %v1987
  %v2073 = vunpack.c.l.b16 %v1988
  %v2074 = vunpack.c.h.b16 %v1988
  %v2075 = vunpack.c.l.b16 %v1989
  %v2076 = vunpack.c.h.b16 %v1989
  %v2077 = vunpack.c.l.b16 %v1990
  %v2078 = vunpack.c.h.b16 %v1990
  %v2079 = vunpack.c.l.b16 %v1991
  %v2080 = vunpack.c.h.b16 %v1991
  %v2081 = vunpack.c.l.b16 %v1992
  %v2082 = vunpack.c.h.b16 %v1992
  %v2083 = vunpack.c.l.b16 %v1993
  %v2084 = vunpack.c.h.b16 %v1993
  %v2085 = vunpack.c.l.b16 %v1994
  %v2086 = vunpack.c.h.b16 %v1994
  %v2087 = vunpack.c.l.b16 %v1995
  %v2088 = vunpack.c.h.b16 %v1995
  %v2089 = vunpack.c.l.b16 %v1996
  %v2090 = vunpack.c.h.b16 %v1996
  %v2091 = vunpack.c.l.b16 %v1997
  %v2092 = vunpack.c.h.b16 %v1997
  %v2093 = vunpack.c.l.b16 %v1998
  %v2094 = vunpack.c.h.b16 %v1998
  %v2095 = vunpack.c.l.b16 %v1999
  %v2096 = vunpack.c.h.b16 %v1999
  %v2097 = vunpack.c.l.b16 %v2000
  %v2098 = vunpack.c.h.b16 %v2000
  %v2099 = vunpack.c.l.b16 %v2001
  %v2100 = vunpack.c.h.b16 %v2001
  %v2101 = vunpack.c.l.b16 %v2002
  %v2102 = vunpack.c.h.b16 %v2002
  %v2103 = vunpack.c.l.b16 %v2003
  %v2104 = vunpack.c.h.b16 %v2003
  %v2105 = vunpack.c.l.b16 %v2004
  %v2106 = vunpack.c.h.b16 %v2004
  %v2107 = vpack.c.b16 %v2045, %v2043
  %v2108 = vpack.c.b16 %v2046, %v2044
  %v2109 = vpack.c.b16 %v2049, %v2047
  %v2110 = vpack.c.b16 %v2050, %v2048
  %v2111 = vpack.c.b16 %v2053, %v2051
  %v2112 = vpack.c.b16 %v2054, %v2052
  %v2113 = vpack.c.b16 %v2057, %v2055
  %v2114 = vpack.c.b16 %v2058, %v2056
  %v2115 = vpack.c.b16 %v2061, %v2059
  %v2116 = vpack.c.b16 %v2062, %v2060
  %v2117 = vpack.c.b16 %v2065, %v2063
  %v2118 = vpack.c.b16 %v2066, %v2064
  %v2119 = vpack.c.b16 %v2069, %v2067
  %v2120 = vpack.c.b16 %v2070, %v2068
  %v2121 = vpack.c.b16 %v2073, %v2071
  %v2122 = vpack.c.b16 %v2074, %v2072
  %v2123 = vpack.c.b16 %v2077, %v2075
  %v2124 = vpack.c.b16 %v2078, %v2076
  %v2125 = vpack.c.b16 %v2081, %v2079
  %v2126 = vpack.c.b16 %v2082, %v2080
  %v2127 = vpack.c.b16 %v2085, %v2083
  %v2128 = vpack.c.b16 %v2086, %v2084
  %v2129 = vpack.c.b16 %v2089, %v2087
  %v2130 = vpack.c.b16 %v2090, %v2088
  %v2131 = vpack.c.b16 %v2093, %v2091
  %v2132 = vpack.c.b16 %v2094, %v2092
  %v2133 = vpack.c.b16 %v2097, %v2095
  %v2134 = vpack.c.b16 %v2098, %v2096
  %v2135 = vpack.c.b16 %v2101, %v2099
  %v2136 = vpack.c.b16 %v2102, %v2100
  %v2137 = vpack.c.b16 %v2105, %v2103
  %v2138 = vpack.c.b16 %v2106, %v2104
  %2171 = vmatpush.bf16.msra.mxu0 %v2121
  %2172 = vmatpush.bf16.msra.mxu0 %v2119
  %2173 = vmatpush.bf16.msra.mxu0 %v2117
  %2174 = vmatpush.bf16.msra.mxu0 %v2115
  %2175 = vmatpush.bf16.msra.mxu0 %v2113
  %2176 = vmatpush.bf16.msra.mxu0 %v2111
  %2177 = vmatpush.bf16.msra.mxu0 %v2109
  %2178 = vmatpush.bf16.msra.mxu0 %v2107
  %2179 = vmatmul.bf16.gmra.mxu0 %v1971
  %v2180 = vpop.f32.mrf.mxu0
  %v2181 = vadd.f32 %v2007, %v2180
  %v2182 = vpop.f32.mrf.mxu0
  %2183 = vdwg.mxu0
  %2184 = vmatpush.bf16.msra.mxu0 %v2137
  %2185 = vmatpush.bf16.msra.mxu0 %v2135
  %2186 = vmatpush.bf16.msra.mxu0 %v2133
  %2187 = vmatpush.bf16.msra.mxu0 %v2131
  %2188 = vmatpush.bf16.msra.mxu0 %v2129
  %2189 = vmatpush.bf16.msra.mxu0 %v2127
  %2190 = vmatpush.bf16.msra.mxu0 %v2125
  %2191 = vmatpush.bf16.msra.mxu0 %v2123
  %2192 = vmatmul.bf16.gmra.mxu0 %v1972
  %v2193 = vpop.f32.mrf.mxu0
  %v2194 = vadd.f32 %v2181, %v2193
  %v2195 = vpop.f32.mrf.mxu0
  %2196 = vdwg.mxu0
  %2197 = vmatpush.bf16.msra.mxu0 %v2122
  %2198 = vmatpush.bf16.msra.mxu0 %v2120
  %2199 = vmatpush.bf16.msra.mxu0 %v2118
  %2200 = vmatpush.bf16.msra.mxu0 %v2116
  %2201 = vmatpush.bf16.msra.mxu0 %v2114
  %2202 = vmatpush.bf16.msra.mxu0 %v2112
  %2203 = vmatpush.bf16.msra.mxu0 %v2110
  %2204 = vmatpush.bf16.msra.mxu0 %v2108
  %2205 = vmatmul.bf16.gmra.mxu0 %v1971
  %v2206 = vpop.f32.mrf.mxu0
  %v2207 = vadd.f32 %v2008, %v2206
  %v2208 = vpop.f32.mrf.mxu0
  %2209 = vdwg.mxu0
  %2210 = vmatpush.bf16.msra.mxu0 %v2138
  %2211 = vmatpush.bf16.msra.mxu0 %v2136
  %2212 = vmatpush.bf16.msra.mxu0 %v2134
  %2213 = vmatpush.bf16.msra.mxu0 %v2132
  %2214 = vmatpush.bf16.msra.mxu0 %v2130
  %2215 = vmatpush.bf16.msra.mxu0 %v2128
  %2216 = vmatpush.bf16.msra.mxu0 %v2126
  %2217 = vmatpush.bf16.msra.mxu0 %v2124
  %2218 = vmatmul.bf16.gmra.mxu0 %v1972
  %v2219 = vpop.f32.mrf.mxu0
  %v2220 = vadd.f32 %v2207, %v2219
  %v2221 = vpop.f32.mrf.mxu0
  %2222 = vdwg.mxu0
  %v2223 = vmax.f32 %v2194, 0.0
  %v2224 = vmax.f32 %v2220, 0.0
  %v2225 = vpack.c.bf16 %v2223, %v2223
  %v2226 = vpack.c.bf16 %v2224, %v2224
  %s2227 = scalar_lea.vmem %s10, 256
  %v2228 = vld [vmem:[%s2227] sm:$0xff]
  %v2229 = vld [vmem:[%s2227 + $0x8] sm:$0xff]
  %v2230 = vld [vmem:[%s2227 + $0x10] sm:$0xff]
  %v2231 = vld [vmem:[%s2227 + $0x18] sm:$0xff]
  %v2232 = vld [vmem:[%s2227 + $0x20] sm:$0xff]
  %v2233 = vld [vmem:[%s2227 + $0x28] sm:$0xff]
  %v2234 = vld [vmem:[%s2227 + $0x30] sm:$0xff]
  %v2235 = vld [vmem:[%s2227 + $0x38] sm:$0xff]
  %v2236 = vld [vmem:[%s2227 + $0x40] sm:$0xff]
  %v2237 = vld [vmem:[%s2227 + $0x48] sm:$0xff]
  %v2238 = vld [vmem:[%s2227 + $0x50] sm:$0xff]
  %v2239 = vld [vmem:[%s2227 + $0x58] sm:$0xff]
  %v2240 = vld [vmem:[%s2227 + $0x60] sm:$0xff]
  %v2241 = vld [vmem:[%s2227 + $0x68] sm:$0xff]
  %v2242 = vld [vmem:[%s2227 + $0x70] sm:$0xff]
  %v2243 = vld [vmem:[%s2227 + $0x78] sm:$0xff]
  %v2244 = vld [vmem:[%s2227 + $0x80] sm:$0xff]
  %v2245 = vld [vmem:[%s2227 + $0x88] sm:$0xff]
  %v2246 = vld [vmem:[%s2227 + $0x90] sm:$0xff]
  %v2247 = vld [vmem:[%s2227 + $0x98] sm:$0xff]
  %v2248 = vld [vmem:[%s2227 + $0xa0] sm:$0xff]
  %v2249 = vld [vmem:[%s2227 + $0xa8] sm:$0xff]
  %v2250 = vld [vmem:[%s2227 + $0xb0] sm:$0xff]
  %v2251 = vld [vmem:[%s2227 + $0xb8] sm:$0xff]
  %v2252 = vld [vmem:[%s2227 + $0xc0] sm:$0xff]
  %v2253 = vld [vmem:[%s2227 + $0xc8] sm:$0xff]
  %v2254 = vld [vmem:[%s2227 + $0xd0] sm:$0xff]
  %v2255 = vld [vmem:[%s2227 + $0xd8] sm:$0xff]
  %v2256 = vld [vmem:[%s2227 + $0xe0] sm:$0xff]
  %v2257 = vld [vmem:[%s2227 + $0xe8] sm:$0xff]
  %v2258 = vld [vmem:[%s2227 + $0xf0] sm:$0xff]
  %v2259 = vld [vmem:[%s2227 + $0xf8] sm:$0xff]
  %s2260 = scalar_lea.vmem %s11, 2
  %v2261 = vld [vmem:[%s2260] sm:$0x3]
  %v2263 = vperm.slane %v2261, 0
  %v2264 = vperm.slane %v2261, 1
  %v2299 = vunpack.c.l.b16 %v2228
  %v2300 = vunpack.c.h.b16 %v2228
  %v2301 = vunpack.c.l.b16 %v2229
  %v2302 = vunpack.c.h.b16 %v2229
  %v2303 = vunpack.c.l.b16 %v2230
  %v2304 = vunpack.c.h.b16 %v2230
  %v2305 = vunpack.c.l.b16 %v2231
  %v2306 = vunpack.c.h.b16 %v2231
  %v2307 = vunpack.c.l.b16 %v2232
  %v2308 = vunpack.c.h.b16 %v2232
  %v2309 = vunpack.c.l.b16 %v2233
  %v2310 = vunpack.c.h.b16 %v2233
  %v2311 = vunpack.c.l.b16 %v2234
  %v2312 = vunpack.c.h.b16 %v2234
  %v2313 = vunpack.c.l.b16 %v2235
  %v2314 = vunpack.c.h.b16 %v2235
  %v2315 = vunpack.c.l.b16 %v2236
  %v2316 = vunpack.c.h.b16 %v2236
  %v2317 = vunpack.c.l.b16 %v2237
  %v2318 = vunpack.c.h.b16 %v2237
  %v2319 = vunpack.c.l.b16 %v2238
  %v2320 = vunpack.c.h.b16 %v2238
  %v2321 = vunpack.c.l.b16 %v2239
  %v2322 = vunpack.c.h.b16 %v2239
  %v2323 = vunpack.c.l.b16 %v2240
  %v2324 = vunpack.c.h.b16 %v2240
  %v2325 = vunpack.c.l.b16 %v2241
  %v2326 = vunpack.c.h.b16 %v2241
  %v2327 = vunpack.c.l.b16 %v2242
  %v2328 = vunpack.c.h.b16 %v2242
  %v2329 = vunpack.c.l.b16 %v2243
  %v2330 = vunpack.c.h.b16 %v2243
  %v2331 = vunpack.c.l.b16 %v2244
  %v2332 = vunpack.c.h.b16 %v2244
  %v2333 = vunpack.c.l.b16 %v2245
  %v2334 = vunpack.c.h.b16 %v2245
  %v2335 = vunpack.c.l.b16 %v2246
  %v2336 = vunpack.c.h.b16 %v2246
  %v2337 = vunpack.c.l.b16 %v2247
  %v2338 = vunpack.c.h.b16 %v2247
  %v2339 = vunpack.c.l.b16 %v2248
  %v2340 = vunpack.c.h.b16 %v2248
  %v2341 = vunpack.c.l.b16 %v2249
  %v2342 = vunpack.c.h.b16 %v2249
  %v2343 = vunpack.c.l.b16 %v2250
  %v2344 = vunpack.c.h.b16 %v2250
  %v2345 = vunpack.c.l.b16 %v2251
  %v2346 = vunpack.c.h.b16 %v2251
  %v2347 = vunpack.c.l.b16 %v2252
  %v2348 = vunpack.c.h.b16 %v2252
  %v2349 = vunpack.c.l.b16 %v2253
  %v2350 = vunpack.c.h.b16 %v2253
  %v2351 = vunpack.c.l.b16 %v2254
  %v2352 = vunpack.c.h.b16 %v2254
  %v2353 = vunpack.c.l.b16 %v2255
  %v2354 = vunpack.c.h.b16 %v2255
  %v2355 = vunpack.c.l.b16 %v2256
  %v2356 = vunpack.c.h.b16 %v2256
  %v2357 = vunpack.c.l.b16 %v2257
  %v2358 = vunpack.c.h.b16 %v2257
  %v2359 = vunpack.c.l.b16 %v2258
  %v2360 = vunpack.c.h.b16 %v2258
  %v2361 = vunpack.c.l.b16 %v2259
  %v2362 = vunpack.c.h.b16 %v2259
  %v2363 = vpack.c.b16 %v2301, %v2299
  %v2364 = vpack.c.b16 %v2302, %v2300
  %v2365 = vpack.c.b16 %v2305, %v2303
  %v2366 = vpack.c.b16 %v2306, %v2304
  %v2367 = vpack.c.b16 %v2309, %v2307
  %v2368 = vpack.c.b16 %v2310, %v2308
  %v2369 = vpack.c.b16 %v2313, %v2311
  %v2370 = vpack.c.b16 %v2314, %v2312
  %v2371 = vpack.c.b16 %v2317, %v2315
  %v2372 = vpack.c.b16 %v2318, %v2316
  %v2373 = vpack.c.b16 %v2321, %v2319
  %v2374 = vpack.c.b16 %v2322, %v2320
  %v2375 = vpack.c.b16 %v2325, %v2323
  %v2376 = vpack.c.b16 %v2326, %v2324
  %v2377 = vpack.c.b16 %v2329, %v2327
  %v2378 = vpack.c.b16 %v2330, %v2328
  %v2379 = vpack.c.b16 %v2333, %v2331
  %v2380 = vpack.c.b16 %v2334, %v2332
  %v2381 = vpack.c.b16 %v2337, %v2335
  %v2382 = vpack.c.b16 %v2338, %v2336
  %v2383 = vpack.c.b16 %v2341, %v2339
  %v2384 = vpack.c.b16 %v2342, %v2340
  %v2385 = vpack.c.b16 %v2345, %v2343
  %v2386 = vpack.c.b16 %v2346, %v2344
  %v2387 = vpack.c.b16 %v2349, %v2347
  %v2388 = vpack.c.b16 %v2350, %v2348
  %v2389 = vpack.c.b16 %v2353, %v2351
  %v2390 = vpack.c.b16 %v2354, %v2352
  %v2391 = vpack.c.b16 %v2357, %v2355
  %v2392 = vpack.c.b16 %v2358, %v2356
  %v2393 = vpack.c.b16 %v2361, %v2359
  %v2394 = vpack.c.b16 %v2362, %v2360
  %2427 = vmatpush.bf16.msra.mxu0 %v2377
  %2428 = vmatpush.bf16.msra.mxu0 %v2375
  %2429 = vmatpush.bf16.msra.mxu0 %v2373
  %2430 = vmatpush.bf16.msra.mxu0 %v2371
  %2431 = vmatpush.bf16.msra.mxu0 %v2369
  %2432 = vmatpush.bf16.msra.mxu0 %v2367
  %2433 = vmatpush.bf16.msra.mxu0 %v2365
  %2434 = vmatpush.bf16.msra.mxu0 %v2363
  %2435 = vmatmul.bf16.gmra.mxu0 %v2225
  %v2436 = vpop.f32.mrf.mxu0
  %v2437 = vadd.f32 %v2263, %v2436
  %v2438 = vpop.f32.mrf.mxu0
  %2439 = vdwg.mxu0
  %2440 = vmatpush.bf16.msra.mxu0 %v2393
  %2441 = vmatpush.bf16.msra.mxu0 %v2391
  %2442 = vmatpush.bf16.msra.mxu0 %v2389
  %2443 = vmatpush.bf16.msra.mxu0 %v2387
  %2444 = vmatpush.bf16.msra.mxu0 %v2385
  %2445 = vmatpush.bf16.msra.mxu0 %v2383
  %2446 = vmatpush.bf16.msra.mxu0 %v2381
  %2447 = vmatpush.bf16.msra.mxu0 %v2379
  %2448 = vmatmul.bf16.gmra.mxu0 %v2226
  %v2449 = vpop.f32.mrf.mxu0
  %v2450 = vadd.f32 %v2437, %v2449
  %v2451 = vpop.f32.mrf.mxu0
  %2452 = vdwg.mxu0
  %2453 = vmatpush.bf16.msra.mxu0 %v2378
  %2454 = vmatpush.bf16.msra.mxu0 %v2376
  %2455 = vmatpush.bf16.msra.mxu0 %v2374
  %2456 = vmatpush.bf16.msra.mxu0 %v2372
  %2457 = vmatpush.bf16.msra.mxu0 %v2370
  %2458 = vmatpush.bf16.msra.mxu0 %v2368
  %2459 = vmatpush.bf16.msra.mxu0 %v2366
  %2460 = vmatpush.bf16.msra.mxu0 %v2364
  %2461 = vmatmul.bf16.gmra.mxu0 %v2225
  %v2462 = vpop.f32.mrf.mxu0
  %v2463 = vadd.f32 %v2264, %v2462
  %v2464 = vpop.f32.mrf.mxu0
  %2465 = vdwg.mxu0
  %2466 = vmatpush.bf16.msra.mxu0 %v2394
  %2467 = vmatpush.bf16.msra.mxu0 %v2392
  %2468 = vmatpush.bf16.msra.mxu0 %v2390
  %2469 = vmatpush.bf16.msra.mxu0 %v2388
  %2470 = vmatpush.bf16.msra.mxu0 %v2386
  %2471 = vmatpush.bf16.msra.mxu0 %v2384
  %2472 = vmatpush.bf16.msra.mxu0 %v2382
  %2473 = vmatpush.bf16.msra.mxu0 %v2380
  %2474 = vmatmul.bf16.gmra.mxu0 %v2226
  %v2475 = vpop.f32.mrf.mxu0
  %v2476 = vadd.f32 %v2463, %v2475
  %v2477 = vpop.f32.mrf.mxu0
  %2478 = vdwg.mxu0
  %v2479 = vmax.f32 %v2450, 0.0
  %v2480 = vmax.f32 %v2476, 0.0
  %v2481 = vld [vmem:[%s13] sm:$0xf]
  %v2482 = vld [vmem:[%s13 + $0x4] sm:$0xf]
  %v2483 = vld [vmem:[%s13 + $0x8] sm:$0xf]
  %v2484 = vld [vmem:[%s13 + $0xc] sm:$0xf]
  %v2485 = vpack.c.bf16 %v2479, %v2479
  %v2486 = vpack.c.bf16 %v2480, %v2480
  %v2487 = vld [vmem:[%s12] sm:$0xf]
  %v2488 = vld [vmem:[%s12 + $0x4] sm:$0xf]
  %v2489 = vld [vmem:[%s12 + $0x8] sm:$0xf]
  %v2490 = vld [vmem:[%s12 + $0xc] sm:$0xf]
  %v2491 = vld [vmem:[%s12 + $0x10] sm:$0xf]
  %v2492 = vld [vmem:[%s12 + $0x14] sm:$0xf]
  %v2493 = vld [vmem:[%s12 + $0x18] sm:$0xf]
  %v2494 = vld [vmem:[%s12 + $0x1c] sm:$0xf]
  %v2495 = vld [vmem:[%s12 + $0x20] sm:$0xf]
  %v2496 = vld [vmem:[%s12 + $0x24] sm:$0xf]
  %v2497 = vld [vmem:[%s12 + $0x28] sm:$0xf]
  %v2498 = vld [vmem:[%s12 + $0x2c] sm:$0xf]
  %v2499 = vld [vmem:[%s12 + $0x30] sm:$0xf]
  %v2500 = vld [vmem:[%s12 + $0x34] sm:$0xf]
  %v2501 = vld [vmem:[%s12 + $0x38] sm:$0xf]
  %v2502 = vld [vmem:[%s12 + $0x3c] sm:$0xf]
  %v2503 = vld [vmem:[%s12 + $0x40] sm:$0xf]
  %v2504 = vld [vmem:[%s12 + $0x44] sm:$0xf]
  %v2505 = vld [vmem:[%s12 + $0x48] sm:$0xf]
  %v2506 = vld [vmem:[%s12 + $0x4c] sm:$0xf]
  %v2507 = vld [vmem:[%s12 + $0x50] sm:$0xf]
  %v2508 = vld [vmem:[%s12 + $0x54] sm:$0xf]
  %v2509 = vld [vmem:[%s12 + $0x58] sm:$0xf]
  %v2510 = vld [vmem:[%s12 + $0x5c] sm:$0xf]
  %v2511 = vld [vmem:[%s12 + $0x60] sm:$0xf]
  %v2512 = vld [vmem:[%s12 + $0x64] sm:$0xf]
  %v2513 = vld [vmem:[%s12 + $0x68] sm:$0xf]
  %v2514 = vld [vmem:[%s12 + $0x6c] sm:$0xf]
  %v2515 = vld [vmem:[%s12 + $0x70] sm:$0xf]
  %v2516 = vld [vmem:[%s12 + $0x74] sm:$0xf]
  %v2517 = vld [vmem:[%s12 + $0x78] sm:$0xf]
  %v2518 = vld [vmem:[%s12 + $0x7c] sm:$0xf]
  %v2519 = vld [vmem:[%s14] sm:$0x1]
  %v2521 = vperm.slane %v2519, 0
  %v2555 = vunpack.c.l.b16 %v2487
  %v2556 = vunpack.c.l.b16 %v2488
  %v2557 = vunpack.c.l.b16 %v2489
  %v2558 = vunpack.c.l.b16 %v2490
  %v2559 = vunpack.c.l.b16 %v2491
  %v2560 = vunpack.c.l.b16 %v2492
  %v2561 = vunpack.c.l.b16 %v2493
  %v2562 = vunpack.c.l.b16 %v2494
  %v2563 = vunpack.c.l.b16 %v2495
  %v2564 = vunpack.c.l.b16 %v2496
  %v2565 = vunpack.c.l.b16 %v2497
  %v2566 = vunpack.c.l.b16 %v2498
  %v2567 = vunpack.c.l.b16 %v2499
  %v2568 = vunpack.c.l.b16 %v2500
  %v2569 = vunpack.c.l.b16 %v2501
  %v2570 = vunpack.c.l.b16 %v2502
  %v2571 = vunpack.c.l.b16 %v2503
  %v2572 = vunpack.c.l.b16 %v2504
  %v2573 = vunpack.c.l.b16 %v2505
  %v2574 = vunpack.c.l.b16 %v2506
  %v2575 = vunpack.c.l.b16 %v2507
  %v2576 = vunpack.c.l.b16 %v2508
  %v2577 = vunpack.c.l.b16 %v2509
  %v2578 = vunpack.c.l.b16 %v2510
  %v2579 = vunpack.c.l.b16 %v2511
  %v2580 = vunpack.c.l.b16 %v2512
  %v2581 = vunpack.c.l.b16 %v2513
  %v2582 = vunpack.c.l.b16 %v2514
  %v2583 = vunpack.c.l.b16 %v2515
  %v2584 = vunpack.c.l.b16 %v2516
  %v2585 = vunpack.c.l.b16 %v2517
  %v2586 = vunpack.c.l.b16 %v2518
  %v2587 = vpack.c.b16 %v2556, %v2555
  %v2588 = vpack.c.b16 %v2558, %v2557
  %v2589 = vpack.c.b16 %v2560, %v2559
  %v2590 = vpack.c.b16 %v2562, %v2561
  %v2591 = vpack.c.b16 %v2564, %v2563
  %v2592 = vpack.c.b16 %v2566, %v2565
  %v2593 = vpack.c.b16 %v2568, %v2567
  %v2594 = vpack.c.b16 %v2570, %v2569
  %v2595 = vpack.c.b16 %v2572, %v2571
  %v2596 = vpack.c.b16 %v2574, %v2573
  %v2597 = vpack.c.b16 %v2576, %v2575
  %v2598 = vpack.c.b16 %v2578, %v2577
  %v2599 = vpack.c.b16 %v2580, %v2579
  %v2600 = vpack.c.b16 %v2582, %v2581
  %v2601 = vpack.c.b16 %v2584, %v2583
  %v2602 = vpack.c.b16 %v2586, %v2585
  %2619 = vmatpush.bf16.msra.mxu0 %v2594
  %2620 = vmatpush.bf16.msra.mxu0 %v2593
  %2621 = vmatpush.bf16.msra.mxu0 %v2592
  %2622 = vmatpush.bf16.msra.mxu0 %v2591
  %2623 = vmatpush.bf16.msra.mxu0 %v2590
  %2624 = vmatpush.bf16.msra.mxu0 %v2589
  %2625 = vmatpush.bf16.msra.mxu0 %v2588
  %2626 = vmatpush.bf16.msra.mxu0 %v2587
  %2627 = vmatmul.bf16.gmra.mxu0 %v2485
  %v2628 = vpop.f32.mrf.mxu0
  %v2629 = vadd.f32 %v2521, %v2628
  %v2630 = vpop.f32.mrf.mxu0
  %2631 = vdwg.mxu0
  %2632 = vmatpush.bf16.msra.mxu0 %v2602
  %2633 = vmatpush.bf16.msra.mxu0 %v2601
  %2634 = vmatpush.bf16.msra.mxu0 %v2600
  %2635 = vmatpush.bf16.msra.mxu0 %v2599
  %2636 = vmatpush.bf16.msra.mxu0 %v2598
  %2637 = vmatpush.bf16.msra.mxu0 %v2597
  %2638 = vmatpush.bf16.msra.mxu0 %v2596
  %2639 = vmatpush.bf16.msra.mxu0 %v2595
  %2640 = vmatmul.bf16.gmra.mxu0 %v2486
  %v2641 = vpop.f32.mrf.mxu0
  %v2642 = vadd.f32 %v2629, %v2641
  %v2643 = vpop.f32.mrf.mxu0
  %2644 = vdwg.mxu0
  %v2645 = vld [vmem:[%s15] sm:$0xff]
  %v2646 = vld [vmem:[%s15 + $0x8] sm:$0xff]
  %v2647 = vld [vmem:[%s15 + $0x10] sm:$0xff]
  %v2648 = vld [vmem:[%s15 + $0x18] sm:$0xff]
  %v2649 = vld [vmem:[%s16] sm:$0x1]
  %v2654 = vunpack.c.l.b16 %v2481
  %v2655 = vunpack.c.l.b16 %v2482
  %v2656 = vunpack.c.l.b16 %v2483
  %v2657 = vunpack.c.l.b16 %v2484
  %v2658 = vpack.c.b16 %v2655, %v2654
  %v2659 = vpack.c.b16 %v2657, %v2656
  %vm2662 = vcmask 261120
  %v2664 = vsel %vm2662, 0, 0
  %2666 = vmatpush.bf16.msra.mxu0 0
  %2667 = vmatpush.bf16.msra.mxu0 0
  %2668 = vmatpush.bf16.msra.mxu0 0
  %2669 = vmatpush.bf16.msra.mxu0 0
  %2670 = vmatpush.bf16.msra.mxu0 0
  %2671 = vmatpush.bf16.msra.mxu0 0
  %2672 = vmatpush.bf16.msra.mxu0 %v2659
  %2673 = vmatpush.bf16.msra.mxu0 %v2658
  %2674 = vmatmul.bf16.gmra.mxu0 %v2664
  %v2675 = vpop.f32.mrf.mxu0
  %v2676 = vadd.f32 0.0, %v2675
  %v2677 = vpop.f32.mrf.mxu0
  %2678 = vdwg.mxu0
  %v2679 = vadd.f32 %v2642, %v2676
  %v2680 = vxor.u32 %v2679, 2147483648
  %v2681 = vmul.f32 %v2680, 1.442695
  %v2682 = vpow.pop %v2681
  %v2683 = vadd.f32 %v2682, 1.0
  %v2684 = vrcp.pop %v2683
  %v2685 = vmul.f32 %v2683, %v2684
  %v2686 = vsub.f32 1.0, %v2685
  %v2687 = vmul.f32 %v2684, %v2686
  %v2688 = vadd.f32 %v2684, %v2687
  %vm2689 = vweird.f32 %v2683
  %vm2690 = vweird.f32 %v2684
  %vm2691 = vmor %vm2689, %vm2690
  %v2692 = vsel %vm2691, %v2684, %v2688
  %v2693 = vand.u32 2147483647, %v2683
  %vm2694 = vcmp.eq.f32.partialorder %v2693, 8.507059e+37
  %v2695 = vand.u32 %v2683, 2147483648
  %v2696 = vor.u32 1.1754944e-38, %v2695
  %v2697 = vsel %vm2694, %v2696, %v2692
  %v2698 = vmul.f32 1.0, %v2697
  %v2699 = vtanh.pop %v2679
  %v2700 = vmul.f32 %v2698, 0.0
  %2702 = vrot.lane.b32.xlu0 %v2699, 64
  %v2703 = vpop.permute.xlu0 %2702
  %v2705 = vmul.f32 %v2698, %v2703
  %2707 = vrot.lane.b32.xlu0 %v2705, 32
  %v2708 = vpop.permute.xlu0 %2707
  %v2710 = vadd.f32 %v2700, %v2708
  %v2711 = vtanh.pop %v2710
  %2713 = vrot.lane.b32.xlu0 %v2711, 64
  %v2714 = vpop.permute.xlu0 %2713
  %v2716 = vmul.f32 %v2698, %v2714
  %v2718 = vperm.slane %v2649, 0
  %2721 = vrot.lane.b32.xlu0 %v2716, 32
  %v2722 = vpop.permute.xlu0 %2721
  %v2723 = vsel %vm2662, %v2722, 0
  %2725 = vmatpush.msra.mxu0 0.0
  %2726 = vmatpush.msra.mxu0 0.0
  %2727 = vmatpush.msra.mxu0 0.0
  %2728 = vmatpush.msra.mxu0 0.0
  %2729 = vmatpush.msra.mxu0 0.0
  %2730 = vmatpush.msra.mxu0 0.0
  %2731 = vmatpush.msra.mxu0 0.0
  %2732 = vmatpush.msra.mxu0 0.0
  %2733 = vmatpush.msra.mxu0 0.0
  %2734 = vmatpush.msra.mxu0 0.0
  %2735 = vmatpush.msra.mxu0 0.0
  %2736 = vmatpush.msra.mxu0 0.0
  %2737 = vmatpush.msra.mxu0 %v2648
  %2738 = vmatpush.msra.mxu0 %v2647
  %2739 = vmatpush.msra.mxu0 %v2646
  %2740 = vmatpush.msra.mxu0 %v2645
  %2741 = vmatmul.f32.gmra.mxu0 %v2723
  %v2742 = vpop.f32.mrf.mxu0
  %v2743 = vadd.f32 %v2718, %v2742
  %2744 = vdwg.mxu0
  %v2745 = vxor.u32 %v2743, 2147483648
  %v2746 = vmul.f32 %v2745, 1.442695
  %v2747 = vpow.pop %v2746
  %v2748 = vadd.f32 %v2747, 1.0
  %v2749 = vrcp.pop %v2748
  %v2750 = vmul.f32 %v2748, %v2749
  %v2751 = vsub.f32 1.0, %v2750
  %v2752 = vmul.f32 %v2749, %v2751
  %v2753 = vadd.f32 %v2749, %v2752
  %vm2754 = vweird.f32 %v2748
  %vm2755 = vweird.f32 %v2749
  %vm2756 = vmor %vm2754, %vm2755
  %v2757 = vsel %vm2756, %v2749, %v2753
  %v2758 = vand.u32 2147483647, %v2748
  %vm2759 = vcmp.eq.f32.partialorder %v2758, 8.507059e+37
  %v2760 = vand.u32 %v2748, 2147483648
  %v2761 = vor.u32 1.1754944e-38, %v2760
  %v2762 = vsel %vm2759, %v2761, %v2757
  %v2763 = vmul.f32 1.0, %v2762
  %vm2764 = vcmask 9216
  %2765 = vst.msk [vmem:[%s17] sm:$0x3] %vm2764, %v2763
  %v2766 = vpack.c.bf16 %v2716, %v2716
  %2768 = vrot.lane.b32.xlu0 %v2766, 32
  %v2769 = vpop.permute.xlu0 %2768
  %v2771 = vsel %vm2662, %v2769, 0
  %2773 = vmatpush.bf16.msra.mxu0 0
  %2774 = vmatpush.bf16.msra.mxu0 0
  %2775 = vmatpush.bf16.msra.mxu0 0
  %2776 = vmatpush.bf16.msra.mxu0 0
  %2777 = vmatpush.bf16.msra.mxu0 0
  %2778 = vmatpush.bf16.msra.mxu0 0
  %2779 = vmatpush.bf16.msra.mxu0 %v2659
  %2780 = vmatpush.bf16.msra.mxu0 %v2658
  %2781 = vmatmul.bf16.gmra.mxu0 %v2771
  %v2782 = vpop.f32.mrf.mxu0
  %v2783 = vadd.f32 0.0, %v2782
  %v2784 = vpop.f32.mrf.mxu0
  %2785 = vdwg.mxu0
  %v2786 = vadd.f32 %v2642, %v2783
  %v2787 = vxor.u32 %v2786, 2147483648
  %v2788 = vmul.f32 %v2787, 1.442695
  %v2789 = vpow.pop %v2788
  %v2790 = vadd.f32 %v2789, 1.0
  %v2791 = vrcp.pop %v2790
  %v2792 = vmul.f32 %v2790, %v2791
  %v2793 = vsub.f32 1.0, %v2792
  %v2794 = vmul.f32 %v2791, %v2793
  %v2795 = vadd.f32 %v2791, %v2794
  %vm2796 = vweird.f32 %v2790
  %vm2797 = vweird.f32 %v2791
  %vm2798 = vmor %vm2796, %vm2797
  %v2799 = vsel %vm2798, %v2791, %v2795
  %v2800 = vand.u32 2147483647, %v2790
  %vm2801 = vcmp.eq.f32.partialorder %v2800, 8.507059e+37
  %v2802 = vand.u32 %v2790, 2147483648
  %v2803 = vor.u32 1.1754944e-38, %v2802
  %v2804 = vsel %vm2801, %v2803, %v2799
  %v2805 = vmul.f32 1.0, %v2804
  %v2806 = vtanh.pop %v2786
  %v2807 = vmul.f32 %v2805, %v2710
  %2809 = vrot.lane.b32.xlu0 %v2806, 64
  %v2810 = vpop.permute.xlu0 %2809
  %v2812 = vmul.f32 %v2805, %v2810
  %2814 = vrot.lane.b32.xlu0 %v2812, 32
  %v2815 = vpop.permute.xlu0 %2814
  %v2817 = vadd.f32 %v2807, %v2815
  %v2818 = vtanh.pop %v2817
  %2820 = vrot.lane.b32.xlu0 %v2818, 64
  %v2821 = vpop.permute.xlu0 %2820
  %v2823 = vmul.f32 %v2805, %v2821
  %2825 = vrot.lane.b32.xlu0 %v2823, 32
  %v2826 = vpop.permute.xlu0 %2825
  %v2827 = vsel %vm2662, %v2826, 0
  %2829 = vmatpush.msra.mxu0 0.0
  %2830 = vmatpush.msra.mxu0 0.0
  %2831 = vmatpush.msra.mxu0 0.0
  %2832 = vmatpush.msra.mxu0 0.0
  %2833 = vmatpush.msra.mxu0 0.0
  %2834 = vmatpush.msra.mxu0 0.0
  %2835 = vmatpush.msra.mxu0 0.0
  %2836 = vmatpush.msra.mxu0 0.0
  %2837 = vmatpush.msra.mxu0 0.0
  %2838 = vmatpush.msra.mxu0 0.0
  %2839 = vmatpush.msra.mxu0 0.0
  %2840 = vmatpush.msra.mxu0 0.0
  %2841 = vmatpush.msra.mxu0 %v2648
  %2842 = vmatpush.msra.mxu0 %v2647
  %2843 = vmatpush.msra.mxu0 %v2646
  %2844 = vmatpush.msra.mxu0 %v2645
  %2845 = vmatmul.f32.gmra.mxu0 %v2827
  %v2846 = vpop.f32.mrf.mxu0
  %v2847 = vadd.f32 %v2718, %v2846
  %2848 = vdwg.mxu0
  %v2849 = vxor.u32 %v2847, 2147483648
  %v2850 = vmul.f32 %v2849, 1.442695
  %v2851 = vpow.pop %v2850
  %v2852 = vadd.f32 %v2851, 1.0
  %v2853 = vrcp.pop %v2852
  %v2854 = vmul.f32 %v2852, %v2853
  %v2855 = vsub.f32 1.0, %v2854
  %v2856 = vmul.f32 %v2853, %v2855
  %v2857 = vadd.f32 %v2853, %v2856
  %vm2858 = vweird.f32 %v2852
  %vm2859 = vweird.f32 %v2853
  %vm2860 = vmor %vm2858, %vm2859
  %v2861 = vsel %vm2860, %v2853, %v2857
  %v2862 = vand.u32 2147483647, %v2852
  %vm2863 = vcmp.eq.f32.partialorder %v2862, 8.507059e+37
  %v2864 = vand.u32 %v2852, 2147483648
  %v2865 = vor.u32 1.1754944e-38, %v2864
  %v2866 = vsel %vm2863, %v2865, %v2861
  %v2867 = vmul.f32 1.0, %v2866
  %s2868 = scalar_lea.vmem %s17, 2
  %2869 = vst.msk [vmem:[%s2868] sm:$0x3] %vm2764, %v2867
  %v2870 = vpack.c.bf16 %v2823, %v2823
  %2872 = vrot.lane.b32.xlu0 %v2870, 32
  %v2873 = vpop.permute.xlu0 %2872
  %v2875 = vsel %vm2662, %v2873, 0
  %2877 = vmatpush.bf16.msra.mxu0 0
  %2878 = vmatpush.bf16.msra.mxu0 0
  %2879 = vmatpush.bf16.msra.mxu0 0
  %2880 = vmatpush.bf16.msra.mxu0 0
  %2881 = vmatpush.bf16.msra.mxu0 0
  %2882 = vmatpush.bf16.msra.mxu0 0
  %2883 = vmatpush.bf16.msra.mxu0 %v2659
  %2884 = vmatpush.bf16.msra.mxu0 %v2658
  %2885 = vmatmul.bf16.gmra.mxu0 %v2875
  %v2886 = vpop.f32.mrf.mxu0
  %v2887 = vadd.f32 0.0, %v2886
  %v2888 = vpop.f32.mrf.mxu0
  %2889 = vdwg.mxu0
  %v2890 = vadd.f32 %v2642, %v2887
  %v2891 = vxor.u32 %v2890, 2147483648
  %v2892 = vmul.f32 %v2891, 1.442695
  %v2893 = vpow.pop %v2892
  %v2894 = vadd.f32 %v2893, 1.0
  %v2895 = vrcp.pop %v2894
  %v2896 = vmul.f32 %v2894, %v2895
  %v2897 = vsub.f32 1.0, %v2896
  %v2898 = vmul.f32 %v2895, %v2897
  %v2899 = vadd.f32 %v2895, %v2898
  %vm2900 = vweird.f32 %v2894
  %vm2901 = vweird.f32 %v2895
  %vm2902 = vmor %vm2900, %vm2901
  %v2903 = vsel %vm2902, %v2895, %v2899
  %v2904 = vand.u32 2147483647, %v2894
  %vm2905 = vcmp.eq.f32.partialorder %v2904, 8.507059e+37
  %v2906 = vand.u32 %v2894, 2147483648
  %v2907 = vor.u32 1.1754944e-38, %v2906
  %v2908 = vsel %vm2905, %v2907, %v2903
  %v2909 = vmul.f32 1.0, %v2908
  %v2910 = vtanh.pop %v2890
  %v2911 = vmul.f32 %v2909, %v2817
  %2913 = vrot.lane.b32.xlu0 %v2910, 64
  %v2914 = vpop.permute.xlu0 %2913
  %v2916 = vmul.f32 %v2909, %v2914
  %2918 = vrot.lane.b32.xlu0 %v2916, 32
  %v2919 = vpop.permute.xlu0 %2918
  %v2921 = vadd.f32 %v2911, %v2919
  %v2922 = vtanh.pop %v2921
  %2924 = vrot.lane.b32.xlu0 %v2922, 64
  %v2925 = vpop.permute.xlu0 %2924
  %v2927 = vmul.f32 %v2909, %v2925
  %2929 = vrot.lane.b32.xlu0 %v2927, 32
  %v2930 = vpop.permute.xlu0 %2929
  %v2931 = vsel %vm2662, %v2930, 0
  %2933 = vmatpush.msra.mxu0 0.0
  %2934 = vmatpush.msra.mxu0 0.0
  %2935 = vmatpush.msra.mxu0 0.0
  %2936 = vmatpush.msra.mxu0 0.0
  %2937 = vmatpush.msra.mxu0 0.0
  %2938 = vmatpush.msra.mxu0 0.0
  %2939 = vmatpush.msra.mxu0 0.0
  %2940 = vmatpush.msra.mxu0 0.0
  %2941 = vmatpush.msra.mxu0 0.0
  %2942 = vmatpush.msra.mxu0 0.0
  %2943 = vmatpush.msra.mxu0 0.0
  %2944 = vmatpush.msra.mxu0 0.0
  %2945 = vmatpush.msra.mxu0 %v2648
  %2946 = vmatpush.msra.mxu0 %v2647
  %2947 = vmatpush.msra.mxu0 %v2646
  %2948 = vmatpush.msra.mxu0 %v2645
  %2949 = vmatmul.f32.gmra.mxu0 %v2931
  %v2950 = vpop.f32.mrf.mxu0
  %v2951 = vadd.f32 %v2718, %v2950
  %2952 = vdwg.mxu0
  %v2953 = vxor.u32 %v2951, 2147483648
  %v2954 = vmul.f32 %v2953, 1.442695
  %v2955 = vpow.pop %v2954
  %v2956 = vadd.f32 %v2955, 1.0
  %v2957 = vrcp.pop %v2956
  %v2958 = vmul.f32 %v2956, %v2957
  %v2959 = vsub.f32 1.0, %v2958
  %v2960 = vmul.f32 %v2957, %v2959
  %v2961 = vadd.f32 %v2957, %v2960
  %vm2962 = vweird.f32 %v2956
  %vm2963 = vweird.f32 %v2957
  %vm2964 = vmor %vm2962, %vm2963
  %v2965 = vsel %vm2964, %v2957, %v2961
  %v2966 = vand.u32 2147483647, %v2956
  %vm2967 = vcmp.eq.f32.partialorder %v2966, 8.507059e+37
  %v2968 = vand.u32 %v2956, 2147483648
  %v2969 = vor.u32 1.1754944e-38, %v2968
  %v2970 = vsel %vm2967, %v2969, %v2965
  %v2971 = vmul.f32 1.0, %v2970
  %s2972 = scalar_lea.vmem %s17, 4
  %2973 = vst.msk [vmem:[%s2972] sm:$0x3] %vm2764, %v2971
  %v2974 = vpack.c.bf16 %v2927, %v2927
  %2976 = vrot.lane.b32.xlu0 %v2974, 32
  %v2977 = vpop.permute.xlu0 %2976
  %v2979 = vsel %vm2662, %v2977, 0
  %2981 = vmatpush.bf16.msra.mxu0 0
  %2982 = vmatpush.bf16.msra.mxu0 0
  %2983 = vmatpush.bf16.msra.mxu0 0
  %2984 = vmatpush.bf16.msra.mxu0 0
  %2985 = vmatpush.bf16.msra.mxu0 0
  %2986 = vmatpush.bf16.msra.mxu0 0
  %2987 = vmatpush.bf16.msra.mxu0 %v2659
  %2988 = vmatpush.bf16.msra.mxu0 %v2658
  %2989 = vmatmul.bf16.gmra.mxu0 %v2979
  %v2990 = vpop.f32.mrf.mxu0
  %v2991 = vadd.f32 0.0, %v2990
  %v2992 = vpop.f32.mrf.mxu0
  %2993 = vdwg.mxu0
  %v2994 = vadd.f32 %v2642, %v2991
  %v2995 = vxor.u32 %v2994, 2147483648
  %v2996 = vmul.f32 %v2995, 1.442695
  %v2997 = vpow.pop %v2996
  %v2998 = vadd.f32 %v2997, 1.0
  %v2999 = vrcp.pop %v2998
  %v3000 = vmul.f32 %v2998, %v2999
  %v3001 = vsub.f32 1.0, %v3000
  %v3002 = vmul.f32 %v2999, %v3001
  %v3003 = vadd.f32 %v2999, %v3002
  %vm3004 = vweird.f32 %v2998
  %vm3005 = vweird.f32 %v2999
  %vm3006 = vmor %vm3004, %vm3005
  %v3007 = vsel %vm3006, %v2999, %v3003
  %v3008 = vand.u32 2147483647, %v2998
  %vm3009 = vcmp.eq.f32.partialorder %v3008, 8.507059e+37
  %v3010 = vand.u32 %v2998, 2147483648
  %v3011 = vor.u32 1.1754944e-38, %v3010
  %v3012 = vsel %vm3009, %v3011, %v3007
  %v3013 = vmul.f32 1.0, %v3012
  %v3014 = vtanh.pop %v2994
  %v3015 = vmul.f32 %v3013, %v2921
  %3017 = vrot.lane.b32.xlu0 %v3014, 64
  %v3018 = vpop.permute.xlu0 %3017
  %v3020 = vmul.f32 %v3013, %v3018
  %3022 = vrot.lane.b32.xlu0 %v3020, 32
  %v3023 = vpop.permute.xlu0 %3022
  %v3025 = vadd.f32 %v3015, %v3023
  %v3026 = vtanh.pop %v3025
  %3028 = vrot.lane.b32.xlu0 %v3026, 64
  %v3029 = vpop.permute.xlu0 %3028
  %v3031 = vmul.f32 %v3013, %v3029
  %3033 = vrot.lane.b32.xlu0 %v3031, 32
  %v3034 = vpop.permute.xlu0 %3033
  %v3035 = vsel %vm2662, %v3034, 0
  %3037 = vmatpush.msra.mxu0 0.0
  %3038 = vmatpush.msra.mxu0 0.0
  %3039 = vmatpush.msra.mxu0 0.0
  %3040 = vmatpush.msra.mxu0 0.0
  %3041 = vmatpush.msra.mxu0 0.0
  %3042 = vmatpush.msra.mxu0 0.0
  %3043 = vmatpush.msra.mxu0 0.0
  %3044 = vmatpush.msra.mxu0 0.0
  %3045 = vmatpush.msra.mxu0 0.0
  %3046 = vmatpush.msra.mxu0 0.0
  %3047 = vmatpush.msra.mxu0 0.0
  %3048 = vmatpush.msra.mxu0 0.0
  %3049 = vmatpush.msra.mxu0 %v2648
  %3050 = vmatpush.msra.mxu0 %v2647
  %3051 = vmatpush.msra.mxu0 %v2646
  %3052 = vmatpush.msra.mxu0 %v2645
  %3053 = vmatmul.f32.gmra.mxu0 %v3035
  %v3054 = vpop.f32.mrf.mxu0
  %v3055 = vadd.f32 %v2718, %v3054
  %3056 = vdwg.mxu0
  %v3057 = vxor.u32 %v3055, 2147483648
  %v3058 = vmul.f32 %v3057, 1.442695
  %v3059 = vpow.pop %v3058
  %v3060 = vadd.f32 %v3059, 1.0
  %v3061 = vrcp.pop %v3060
  %v3062 = vmul.f32 %v3060, %v3061
  %v3063 = vsub.f32 1.0, %v3062
  %v3064 = vmul.f32 %v3061, %v3063
  %v3065 = vadd.f32 %v3061, %v3064
  %vm3066 = vweird.f32 %v3060
  %vm3067 = vweird.f32 %v3061
  %vm3068 = vmor %vm3066, %vm3067
  %v3069 = vsel %vm3068, %v3061, %v3065
  %v3070 = vand.u32 2147483647, %v3060
  %vm3071 = vcmp.eq.f32.partialorder %v3070, 8.507059e+37
  %v3072 = vand.u32 %v3060, 2147483648
  %v3073 = vor.u32 1.1754944e-38, %v3072
  %v3074 = vsel %vm3071, %v3073, %v3069
  %v3075 = vmul.f32 1.0, %v3074
  %s3076 = scalar_lea.vmem %s17, 6
  %3077 = vst.msk [vmem:[%s3076] sm:$0x3] %vm2764, %v3075
  // Predicated region
  $region70: #{generator_forward.1} parent=0 // pred_check
    _
  $region71: #{generator_forward.1} parent=0 // pred_check_branch
    %3079 = sbr.rel (0) target = $region73
  $region72: #{generator_forward.1} parent=0 // pred_region
    _
  $region73: #{generator_forward.1} parent=0 // pred_fallthru
    _
  // Predicated region
  $region74: #{generator_forward.1} parent=0 // pred_check
    _
  $region75: #{generator_forward.1} parent=0 // pred_check_branch
    %3081 = sbr.rel (0) target = $region77
  $region76: #{generator_forward.1} parent=0 // pred_region
    _
  $region77: #{generator_forward.1} parent=0 // pred_fallthru
    _

</llo_original>
